<compile_context>
chip_gen: v5e
topology: v5e:2x2
jax: 0.10.0
libtpu: 0.0.40
codegen_flags: <defaults>
</compile_context>

<pallas_src>
import functools
import math

import jax
import jax.numpy as jnp
from jax.experimental import pallas as pl
from jax.experimental.pallas import tpu as pltpu

# ----------------------------- model config (small, synthetic) ---------------
BATCH = 2
SEQ = 8                       # new tokens this step
PAST = 8                      # cached tokens
TOTAL = PAST + SEQ            # T
N_HEADS = 2
HEAD_DIM = 128                # lane-aligned head dim (per review: keep dims %128==0)
HIDDEN = N_HEADS * HEAD_DIM   # 256
INTER = 512
VOCAB = 512
N_LAYERS = 2
EPS = 1e-6
TOPK = 4                      # args.topk  (args.add_topk_warper > 0)
ROPE_BASE = 10000.0

VMEM_LIMIT = 32 * 1024 * 1024  # fits scoped VMEM on v5e/v6e/v7x with headroom


# ----------------------------- in-kernel helpers ------------------------------
def _rmsnorm(x, w_plus_one, eps):
    # Gemma-style RMSNorm; (1 + weight) is precomputed in glue.
    var = jnp.mean(x * x, axis=-1, keepdims=True)
    return x * jax.lax.rsqrt(var + eps) * w_plus_one


def _rope_flat(x, cos_t, sin_signed_t, head_dim):
    """Rotate-half RoPE on the flat [rows, n_heads*head_dim] layout.

    partner(x)[.., i] = x[.., i + D/2] if (i mod D) < D/2 else x[.., i - D/2]
    out = x * cos + partner(x) * sign_folded_sin   (sign pattern folded in glue)
    Avoids per-head reshuffles: only two full-width lane rotations + one select.
    """
    h_total = x.shape[-1]
    half = head_dim // 2
    x_plus = jnp.concatenate([x[:, half:], x[:, :half]], axis=-1)    # x[(i+half)%H]
    x_minus = jnp.concatenate([x[:, -half:], x[:, :-half]], axis=-1)  # x[(i-half)%H]
    lane = jax.lax.broadcasted_iota(jnp.int32, (1, h_total), 1)
    first_half = (lane % head_dim) < half
    partner = jnp.where(first_half, x_plus, x_minus)
    return x * cos_t + partner * sin_signed_t


# ----------------------------- fused full-forward kernel ----------------------
def _gemma_forward_kernel(
        h_in_ref, cos_ref, sin_ref, pos_ref, am_ref,
        in_norm_ref, wqkv_ref, wo_ref, post_norm_ref, wgu_ref, wd_ref,
        kc_ref, vc_ref, fnorm_ref, wlm_ref,
        logits_ref, kv_out_ref,
        h_scratch,
        *, eps, n_heads, head_dim, batch, seq):
    layer = pl.program_id(0)
    D = head_dim
    H = n_heads * D
    S = seq
    B = batch
    T = am_ref.shape[-1]
    inter = wgu_ref.shape[-1] // 2

    # Residual stream lives in VMEM scratch across the layer grid axis.
    @pl.when(layer == 0)
    def _init():
        h_scratch[...] = h_in_ref[...]

    h = h_scratch[...]                                   # [B*S, H] f32

    # ---- input RMSNorm + fused QKV projection (bf16 weights, f32 acc) --------
    x = _rmsnorm(h, in_norm_ref[0], eps)
    qkv = jnp.dot(x.astype(jnp.bfloat16), wqkv_ref[0],
                  preferred_element_type=jnp.float32)    # [B*S, 3H]

    cos_t = cos_ref[...]                                 # [B*S, H] head-tiled
    sin_t = sin_ref[...]                                 # [B*S, H] sign-folded
    # 1/sqrt(head_dim) attention scale is folded into the q weights in glue.
    q = _rope_flat(qkv[:, :H], cos_t, sin_t, D)          # [B*S, H]
    k = _rope_flat(qkv[:, H:2 * H], cos_t, sin_t, D)
    v = qkv[:, 2 * H:]

    # Key-position iota for the causal mask (int compares, no HBM mask tensor).
    key_idx = jax.lax.broadcasted_iota(jnp.int32, (S, T), 1)
    pos_all = pos_ref[...]                               # [B*S, 1] int32
    am_all = am_ref[...]                                 # [B, T]   int32
    kc_all = kc_ref[0]                                   # [B*nH, PAST, D] f32
    vc_all = vc_ref[0]

    attn_rows = []
    for b in range(B):                                   # B=2, unrolled at trace time
        r0, r1 = b * S, (b + 1) * S
        # Head-batched views from lane-aligned 128-wide slices (free views).
        q_hb = jnp.stack([q[r0:r1, hh * D:(hh + 1) * D] for hh in range(n_heads)], 0)
        k_hb = jnp.stack([k[r0:r1, hh * D:(hh + 1) * D] for hh in range(n_heads)], 0)
        v_hb = jnp.stack([v[r0:r1, hh * D:(hh + 1) * D] for hh in range(n_heads)], 0)

        k_full = jnp.concatenate(
            [kc_all[b * n_heads:(b + 1) * n_heads], k_hb], axis=1)   # [nH, T, D]
        v_full = jnp.concatenate(
            [vc_all[b * n_heads:(b + 1) * n_heads], v_hb], axis=1)

        # Batched contractions (no explicit k.T), bf16 MXU inputs, f32 accumulate.
        s = jnp.einsum('hsd,htd->hst',
                       q_hb.astype(jnp.bfloat16), k_full.astype(jnp.bfloat16),
                       preferred_element_type=jnp.float32)           # [nH, S, T]

        mask = jnp.logical_and(key_idx <= pos_all[r0:r1, :],         # causal
                               am_all[b:b + 1, :] > 0)               # validity
        s = jnp.where(mask[None, :, :], s, -1e30)
        s = s - jnp.max(s, axis=-1, keepdims=True)
        p = jnp.exp(s)
        p = p * pl.reciprocal(jnp.sum(p, axis=-1, keepdims=True))    # exact recip

        o_hb = jnp.einsum('hst,htd->hsd',
                          p.astype(jnp.bfloat16), v_full.astype(jnp.bfloat16),
                          preferred_element_type=jnp.float32)        # [nH, S, D]
        attn_rows.append(
            jnp.concatenate([o_hb[hh] for hh in range(n_heads)], axis=-1))  # [S, H]

        # Lane-dense fused KV writeback: [T, 2H] = [k_h0|k_h1|v_h0|v_h1], 512 lanes.
        kv_out_ref[0, b] = jnp.concatenate(
            [k_full[hh] for hh in range(n_heads)]
            + [v_full[hh] for hh in range(n_heads)], axis=-1)

    attn = jnp.concatenate(attn_rows, axis=0)            # [B*S, H]
    h1 = h + jnp.dot(attn.astype(jnp.bfloat16), wo_ref[0],
                     preferred_element_type=jnp.float32)

    # ---- post RMSNorm + gated MLP (fused wg|wu, lane-dense 2I) ----------------
    x2 = _rmsnorm(h1, post_norm_ref[0], eps)
    gu = jnp.dot(x2.astype(jnp.bfloat16), wgu_ref[0],
                 preferred_element_type=jnp.float32)     # [B*S, 2I]
    act = jax.nn.gelu(gu[:, :inter], approximate=True) * gu[:, inter:]
    h2 = h1 + jnp.dot(act.astype(jnp.bfloat16), wd_ref[0],
                      preferred_element_type=jnp.float32)
    h_scratch[...] = h2

    # ---- final norm + lm_head fused on the last layer step --------------------
    @pl.when(layer == pl.num_programs(0) - 1)
    def _final():
        xf = _rmsnorm(h2, fnorm_ref[...], eps)
        logits_ref[...] = jnp.dot(xf.astype(jnp.bfloat16), wlm_ref[...],
                                  preferred_element_type=jnp.float32)


# ----------------------------- forward pass ------------------------------------
@jax.jit
def llm_forward(params, input_ids, attention_mask, position_ids, past_key_values):
    """Mirrors LLMForCausalLMWrapper.forward:
       returns (logits, k0, v0, k1, v1, ..., topk_values, topk_indices)."""
    B, S = input_ids.shape
    H, D, nH, L, V = HIDDEN, HEAD_DIM, N_HEADS, N_LAYERS, VOCAB
    T = attention_mask.shape[-1]
    half = D // 2

    # Embedding gather + Gemma sqrt(H) scale (glue; gather stays in XLA).
    h = jnp.take(params["embed"], input_ids, axis=0) * jnp.sqrt(jnp.float32(H))
    h2 = h.reshape(B * S, H).astype(jnp.float32)

    # RoPE tables hoisted out of the layer loop, head-tiled, rotate-half sign folded.
    inv_freq = 1.0 / (ROPE_BASE ** (jnp.arange(0, D, 2, dtype=jnp.float32) / D))
    freqs = position_ids.astype(jnp.float32)[:, :, None] * inv_freq[None, None, :]
    emb = jnp.concatenate([freqs, freqs], axis=-1)                   # [B, S, D]
    cos = jnp.cos(emb).reshape(B * S, D)
    sin = jnp.sin(emb).reshape(B * S, D)
    sign = jnp.concatenate([-jnp.ones((half,), jnp.float32),
                            jnp.ones((half,), jnp.float32)])
    cos_t = jnp.tile(cos, (1, nH))                                   # [B*S, H]
    sin_t = jnp.tile(sin * sign, (1, nH))                            # [B*S, H]

    pos_col = position_ids.reshape(B * S, 1).astype(jnp.int32)       # [B*S, 1]
    am = attention_mask.astype(jnp.int32)                            # [B, T]

    # Stacked KV caches (HF [B,nH,PAST,D] -> [L, B*nH, PAST, D], leading-dim merge).
    kc = jnp.stack([kv[0] for kv in past_key_values], axis=0).reshape(L, B * nH, PAST, D)
    vc = jnp.stack([kv[1] for kv in past_key_values], axis=0).reshape(L, B * nH, PAST, D)

    logits_flat, kv_out = pl.pallas_call(
        functools.partial(_gemma_forward_kernel, eps=EPS, n_heads=nH,
                          head_dim=D, batch=B, seq=S),
        out_shape=(
            jax.ShapeDtypeStruct((B * S, V), jnp.float32),
            jax.ShapeDtypeStruct((L, B, T, 2 * H), jnp.float32),
        ),
        grid=(L,),
        in_specs=[
            pl.BlockSpec((B * S, H), lambda l: (0, 0)),              # hidden in
            pl.BlockSpec((B * S, H), lambda l: (0, 0)),              # cos (head-tiled)
            pl.BlockSpec((B * S, H), lambda l: (0, 0)),              # sin (sign-folded)
            pl.BlockSpec((B * S, 1), lambda l: (0, 0)),              # position ids
            pl.BlockSpec((B, T), lambda l: (0, 0)),                  # attention mask
            pl.BlockSpec((1, 1, H), lambda l: (l, 0, 0)),            # (1+input_norm)
            pl.BlockSpec((1, H, 3 * H), lambda l: (l, 0, 0)),        # wqkv  (bf16)
            pl.BlockSpec((1, H, H), lambda l: (l, 0, 0)),            # wo    (bf16)
            pl.BlockSpec((1, 1, H), lambda l: (l, 0, 0)),            # (1+post_norm)
            pl.BlockSpec((1, H, 2 * INTER), lambda l: (l, 0, 0)),    # wgu   (bf16)
            pl.BlockSpec((1, INTER, H), lambda l: (l, 0, 0)),        # wd    (bf16)
            pl.BlockSpec((1, B * nH, PAST, D), lambda l: (l, 0, 0, 0)),  # k cache
            pl.BlockSpec((1, B * nH, PAST, D), lambda l: (l, 0, 0, 0)),  # v cache
            pl.BlockSpec((1, H), lambda l: (0, 0)),                  # (1+final_norm)
            pl.BlockSpec((H, V), lambda l: (0, 0)),                  # lm_head (bf16)
        ],
        out_specs=(
            pl.BlockSpec((B * S, V), lambda l: (0, 0)),              # logits (last step)
            pl.BlockSpec((1, B, T, 2 * H), lambda l: (l, 0, 0, 0)),  # fused K|V per layer
        ),
        scratch_shapes=[pltpu.VMEM((B * S, H), jnp.float32)],        # residual stream
        compiler_params=pltpu.CompilerParams(
            dimension_semantics=("arbitrary",),   # layer axis carries the residual
            vmem_limit_bytes=VMEM_LIMIT),
    )(h2, cos_t, sin_t, pos_col, am,
      params["in_norm_p"], params["wqkv"], params["wo"],
      params["post_norm_p"], params["wgu"], params["wd"],
      kc, vc, params["final_norm_p"], params["lm_head"])

    logits = logits_flat.reshape(B, S, V)

    # Split the lane-dense fused K|V back to the HF [B, nH, T, D] convention (glue).
    k_hf = kv_out[..., :H].reshape(L, B, T, nH, D).transpose(0, 1, 3, 2, 4)
    v_hf = kv_out[..., H:].reshape(L, B, T, nH, D).transpose(0, 1, 3, 2, 4)
    kv_flat = []
    for layer in range(L):
        kv_flat.extend([k_hf[layer], v_hf[layer]])

    # args.add_topk_warper > 0: torch.topk(logits, k, dim=-1) -> (values, indices)
    # TODO(synk): top-k has no clean Pallas equivalent at this size; jax.lax.top_k glue.
    topk_vals, topk_idx = jax.lax.top_k(logits, TOPK)

    return (logits, *kv_flat, topk_vals, topk_idx)


# ----------------------------- deterministic params / inputs ------------------
def init_params(key):
    H, D, nH, I, V, L = HIDDEN, HEAD_DIM, N_HEADS, INTER, VOCAB, N_LAYERS

    def nrm(k, shape, scale=0.02):
        return scale * jax.random.normal(k, shape, dtype=jnp.float32)

    ks = jax.random.split(key, 6)
    # Fold the 1/sqrt(head_dim) attention scale into the q-projection columns
    # (RoPE is linear, so scaling commutes with it).
    wqkv = nrm(ks[0], (L, H, 3 * H))
    wqkv = wqkv.at[:, :, :H].multiply(1.0 / math.sqrt(D))

    return {
        "embed": nrm(ks[1], (V, H)),                                 # f32 (gather in XLA)
        "lm_head": nrm(ks[2], (H, V)).astype(jnp.bfloat16),
        # Norm weights stored as precomputed (1 + w); synthetic w = 0.
        "final_norm_p": jnp.ones((1, H), jnp.float32),
        "in_norm_p": jnp.ones((L, 1, H), jnp.float32),
        "post_norm_p": jnp.ones((L, 1, H), jnp.float32),
        # Weights stored in HBM as bf16 (halves weight DMA, no in-kernel casts).
        "wqkv": wqkv.astype(jnp.bfloat16),
        "wo": nrm(ks[3], (L, H, H)).astype(jnp.bfloat16),
        "wgu": nrm(ks[4], (L, H, 2 * I)).astype(jnp.bfloat16),       # [wg | wu]
        "wd": nrm(ks[5], (L, I, H)).astype(jnp.bfloat16),
    }


if __name__ == "__main__":
    root = jax.random.PRNGKey(0)
    kp, kid, kkv = jax.random.split(root, 3)

    params = init_params(kp)

    input_ids = jax.random.randint(kid, (BATCH, SEQ), 0, VOCAB, dtype=jnp.int32)
    attention_mask = jnp.ones((BATCH, TOTAL), dtype=jnp.int32)
    position_ids = jnp.broadcast_to(
        PAST + jnp.arange(SEQ, dtype=jnp.int32)[None, :], (BATCH, SEQ))

    kv_keys = jax.random.split(kkv, 2 * N_LAYERS)
    past_key_values = []
    for layer in range(N_LAYERS):
        kc = 0.02 * jax.random.normal(kv_keys[2 * layer],
                                      (BATCH, N_HEADS, PAST, HEAD_DIM),
                                      dtype=jnp.float32)
        vc = 0.02 * jax.random.normal(kv_keys[2 * layer + 1],
                                      (BATCH, N_HEADS, PAST, HEAD_DIM),
                                      dtype=jnp.float32)
        past_key_values.append((kc, vc))

    outputs = llm_forward(params, input_ids, attention_mask, position_ids,
                          past_key_values)
    outputs = jax.block_until_ready(outputs)

    logits = outputs[0]
    assert logits.shape == (BATCH, SEQ, VOCAB)
    assert len(outputs) == 1 + 2 * N_LAYERS + 2
    for layer in range(N_LAYERS):
        assert outputs[1 + 2 * layer].shape == (BATCH, N_HEADS, TOTAL, HEAD_DIM)
        assert outputs[2 + 2 * layer].shape == (BATCH, N_HEADS, TOTAL, HEAD_DIM)
    assert outputs[-2].shape == (BATCH, SEQ, TOPK)
    assert outputs[-1].shape == (BATCH, SEQ, TOPK)
    assert bool(jnp.all(jnp.isfinite(logits)))

    print("KERNEL_OK")
</pallas_src>

<mosaic_0001>
module attributes {stable_mosaic.version = 11 : i64} {
  func.func @_gemma_forward_kernel(%arg0: i32, %arg1: memref<16x256xf32, #tpu.memory_space<vmem>>, %arg2: memref<16x256xf32, #tpu.memory_space<vmem>>, %arg3: memref<16x256xf32, #tpu.memory_space<vmem>>, %arg4: memref<16x1xi32, #tpu.memory_space<vmem>>, %arg5: memref<2x16xi32, #tpu.memory_space<vmem>>, %arg6: memref<1x1x256xf32, #tpu.memory_space<vmem>>, %arg7: memref<1x256x768xbf16, #tpu.memory_space<vmem>>, %arg8: memref<1x256x256xbf16, #tpu.memory_space<vmem>>, %arg9: memref<1x1x256xf32, #tpu.memory_space<vmem>>, %arg10: memref<1x256x1024xbf16, #tpu.memory_space<vmem>>, %arg11: memref<1x512x256xbf16, #tpu.memory_space<vmem>>, %arg12: memref<1x4x8x128xf32, #tpu.memory_space<vmem>>, %arg13: memref<1x4x8x128xf32, #tpu.memory_space<vmem>>, %arg14: memref<1x256xf32, #tpu.memory_space<vmem>>, %arg15: memref<256x512xbf16, #tpu.memory_space<vmem>>, %arg16: memref<16x512xf32, #tpu.memory_space<vmem>>, %arg17: memref<1x2x16x512xf32, #tpu.memory_space<vmem>>, %arg18: memref<16x256xf32, #tpu.memory_space<vmem>>) attributes {dimension_semantics = [#tpu.dimension_semantics<arbitrary>], iteration_bounds = array<i64: 2>, scalar_prefetch = 0 : i64, scratch_operands = 1 : i64, tpu.core_type = #tpu.core_type<tc>, window_params = [{pipeline_mode = #tpu.pipeline_mode<synchronous>, transform_indices = @transform_0, window_bounds = array<i64: 16, 256>}, {pipeline_mode = #tpu.pipeline_mode<synchronous>, transform_indices = @transform_1, window_bounds = array<i64: 16, 256>}, {pipeline_mode = #tpu.pipeline_mode<synchronous>, transform_indices = @transform_2, window_bounds = array<i64: 16, 256>}, {pipeline_mode = #tpu.pipeline_mode<synchronous>, transform_indices = @transform_3, window_bounds = array<i64: 16, 1>}, {pipeline_mode = #tpu.pipeline_mode<synchronous>, transform_indices = @transform_4, window_bounds = array<i64: 2, 16>}, {transform_indices = @transform_5, window_bounds = array<i64: 1, 1, 256>}, {transform_indices = @transform_6, window_bounds = array<i64: 1, 256, 768>}, {transform_indices = @transform_7, window_bounds = array<i64: 1, 256, 256>}, {transform_indices = @transform_8, window_bounds = array<i64: 1, 1, 256>}, {transform_indices = @transform_9, window_bounds = array<i64: 1, 256, 1024>}, {transform_indices = @transform_10, window_bounds = array<i64: 1, 512, 256>}, {transform_indices = @transform_11, window_bounds = array<i64: 1, 4, 8, 128>}, {transform_indices = @transform_12, window_bounds = array<i64: 1, 4, 8, 128>}, {pipeline_mode = #tpu.pipeline_mode<synchronous>, transform_indices = @transform_13, window_bounds = array<i64: 1, 256>}, {pipeline_mode = #tpu.pipeline_mode<synchronous>, transform_indices = @transform_14, window_bounds = array<i64: 256, 512>}, {pipeline_mode = #tpu.pipeline_mode<synchronous>, transform_indices = @transform_15, window_bounds = array<i64: 16, 512>}, {transform_indices = @transform_16, window_bounds = array<i64: 1, 2, 16, 512>}]} {
    %c0_i32 = arith.constant 0 : i32
    %0 = arith.cmpi eq, %arg0, %c0_i32 : i32
    %1 = arith.extui %0 : i1 to i32
    %c0_i32_0 = arith.constant 0 : i32
    %2 = arith.cmpi ne, %1, %c0_i32_0 : i32
    scf.if %2 {
      %c0_83 = arith.constant 0 : index
      %c0_84 = arith.constant 0 : index
      %275 = vector.load %arg1[%c0_83, %c0_84] : memref<16x256xf32, #tpu.memory_space<vmem>>, vector<16x256xf32>
      %c0_85 = arith.constant 0 : index
      %c0_86 = arith.constant 0 : index
      %276 = vector.load %arg18[%c0_85, %c0_86] : memref<16x256xf32, #tpu.memory_space<vmem>>, vector<16x256xf32>
      tpu.vector_store %arg18[%c0_85, %c0_86], %275 {strides = array<i32>} : memref<16x256xf32, #tpu.memory_space<vmem>>, vector<16x256xf32>,
    } else {
    }
    %c0 = arith.constant 0 : index
    %c0_1 = arith.constant 0 : index
    %3 = vector.load %arg18[%c0, %c0_1] : memref<16x256xf32, #tpu.memory_space<vmem>>, vector<16x256xf32>
    %c0_2 = arith.constant 0 : index
    %c0_3 = arith.constant 0 : index
    %c0_4 = arith.constant 0 : index
    %4 = vector.load %arg6[%c0_2, %c0_3, %c0_4] : memref<1x1x256xf32, #tpu.memory_space<vmem>>, vector<1x1x256xf32>
    %5 = vector.shape_cast %4 : vector<1x1x256xf32> to vector<1x256xf32>
    %6 = arith.mulf %3, %3 : vector<16x256xf32>
    %cst = arith.constant dense<0.000000e+00> : vector<16xf32>
    %7 = vector.multi_reduction <add>, %6, %cst [1] : vector<16x256xf32> to vector<16xf32>
    %8 = vector.shape_cast %7 : vector<16xf32> to vector<16x1xf32>
    %cst_5 = arith.constant 2.560000e+02 : f32
    %9 = vector.broadcast %cst_5 : f32 to vector<16x1xf32>
    %10 = arith.divf %8, %9 : vector<16x1xf32>
    %cst_6 = arith.constant 9.99999997E-7 : f32
    %11 = vector.broadcast %cst_6 : f32 to vector<16x1xf32>
    %12 = arith.addf %10, %11 : vector<16x1xf32>
    %13 = math.rsqrt %12 : vector<16x1xf32>
    %14 = vector.broadcast %13 : vector<16x1xf32> to vector<16x256xf32>
    %15 = arith.mulf %3, %14 : vector<16x256xf32>
    %16 = vector.broadcast %5 : vector<1x256xf32> to vector<16x256xf32>
    %17 = arith.mulf %15, %16 : vector<16x256xf32>
    %18 = arith.truncf %17 : vector<16x256xf32> to vector<16x256xbf16>
    %c0_7 = arith.constant 0 : index
    %c0_8 = arith.constant 0 : index
    %c0_9 = arith.constant 0 : index
    %19 = vector.load %arg7[%c0_7, %c0_8, %c0_9] : memref<1x256x768xbf16, #tpu.memory_space<vmem>>, vector<1x256x768xbf16>
    %20 = vector.shape_cast %19 : vector<1x256x768xbf16> to vector<256x768xbf16>
    %cst_10 = arith.constant dense<0.000000e+00> : vector<16x768xf32>
    %21 = tpu.matmul %18, %20, %cst_10 {dimension_numbers = #tpu.dot_dimension_numbers<[1], [0], [0], [1], [0, 0, 1, 1], [], []>} : vector<16x256xbf16>, vector<256x768xbf16>, vector<16x768xf32> -> vector<16x768xf32>
    %c0_11 = arith.constant 0 : index
    %c0_12 = arith.constant 0 : index
    %22 = vector.load %arg2[%c0_11, %c0_12] : memref<16x256xf32, #tpu.memory_space<vmem>>, vector<16x256xf32>
    %c0_13 = arith.constant 0 : index
    %c0_14 = arith.constant 0 : index
    %23 = vector.load %arg3[%c0_13, %c0_14] : memref<16x256xf32, #tpu.memory_space<vmem>>, vector<16x256xf32>
    %24 = vector.extract_strided_slice %21 {offsets = [0, 0], sizes = [16, 256], strides = [1, 1]} : vector<16x768xf32> to vector<16x256xf32>
    %25 = vector.extract_strided_slice %24 {offsets = [0, 64], sizes = [16, 192], strides = [1, 1]} : vector<16x256xf32> to vector<16x192xf32>
    %26 = vector.extract_strided_slice %24 {offsets = [0, 0], sizes = [16, 64], strides = [1, 1]} : vector<16x256xf32> to vector<16x64xf32>
    %27 = tpu.concatenate %25, %26 in 1 : vector<16x192xf32>, vector<16x64xf32> -> vector<16x256xf32>
    %28 = vector.extract_strided_slice %24 {offsets = [0, 192], sizes = [16, 64], strides = [1, 1]} : vector<16x256xf32> to vector<16x64xf32>
    %29 = vector.extract_strided_slice %24 {offsets = [0, 0], sizes = [16, 192], strides = [1, 1]} : vector<16x256xf32> to vector<16x192xf32>
    %30 = tpu.concatenate %28, %29 in 1 : vector<16x64xf32>, vector<16x192xf32> -> vector<16x256xf32>
    %31 = tpu.iota {dimensions = array<i32: 1>} : vector<1x256xi32>
    %c128_i32 = arith.constant 128 : i32
    %c0_i32_15 = arith.constant 0 : i32
    %32 = arith.cmpi eq, %c128_i32, %c0_i32_15 : i32
    %c1_i32 = arith.constant 1 : i32
    %33 = arith.select %32, %c1_i32, %c128_i32 : i32
    %34 = vector.broadcast %33 : i32 to vector<1x256xi32>
    %35 = arith.remsi %31, %34 : vector<1x256xi32>
    %c0_i32_16 = arith.constant 0 : i32
    %36 = vector.broadcast %c0_i32_16 : i32 to vector<1x256xi32>
    %37 = arith.cmpi ne, %35, %36 : vector<1x256xi32>
    %c0_i32_17 = arith.constant 0 : i32
    %38 = vector.broadcast %c0_i32_17 : i32 to vector<1x256xi32>
    %39 = arith.cmpi slt, %35, %38 : vector<1x256xi32>
    %c0_i32_18 = arith.constant 0 : i32
    %40 = arith.cmpi slt, %33, %c0_i32_18 : i32
    %41 = vector.broadcast %40 : i1 to vector<1x256xi1>
    %42 = vector.broadcast %41 : vector<1x256xi1> to vector<1x256xi1>
    %43 = arith.xori %39, %42 : vector<1x256xi1>
    %44 = arith.andi %43, %37 : vector<1x256xi1>
    %45 = vector.broadcast %33 : i32 to vector<1x256xi32>
    %46 = arith.addi %35, %45 : vector<1x256xi32>
    %47 = arith.select %44, %46, %35 : vector<1x256xi1>, vector<1x256xi32>
    %c64_i32 = arith.constant 64 : i32
    %48 = vector.broadcast %c64_i32 : i32 to vector<1x256xi32>
    %49 = arith.cmpi slt, %47, %48 : vector<1x256xi32>
    %50 = vector.shape_cast %49 : vector<1x256xi1> to vector<1x256xi1>
    %51 = vector.broadcast %50 : vector<1x256xi1> to vector<16x256xi1>
    %52 = arith.select %51, %27, %30 : vector<16x256xi1>, vector<16x256xf32>
    %53 = arith.mulf %24, %22 : vector<16x256xf32>
    %54 = arith.mulf %52, %23 : vector<16x256xf32>
    %55 = arith.addf %53, %54 : vector<16x256xf32>
    %56 = vector.extract_strided_slice %21 {offsets = [0, 256], sizes = [16, 256], strides = [1, 1]} : vector<16x768xf32> to vector<16x256xf32>
    %57 = vector.extract_strided_slice %56 {offsets = [0, 64], sizes = [16, 192], strides = [1, 1]} : vector<16x256xf32> to vector<16x192xf32>
    %58 = vector.extract_strided_slice %56 {offsets = [0, 0], sizes = [16, 64], strides = [1, 1]} : vector<16x256xf32> to vector<16x64xf32>
    %59 = tpu.concatenate %57, %58 in 1 : vector<16x192xf32>, vector<16x64xf32> -> vector<16x256xf32>
    %60 = vector.extract_strided_slice %56 {offsets = [0, 192], sizes = [16, 64], strides = [1, 1]} : vector<16x256xf32> to vector<16x64xf32>
    %61 = vector.extract_strided_slice %56 {offsets = [0, 0], sizes = [16, 192], strides = [1, 1]} : vector<16x256xf32> to vector<16x192xf32>
    %62 = tpu.concatenate %60, %61 in 1 : vector<16x64xf32>, vector<16x192xf32> -> vector<16x256xf32>
    %63 = tpu.iota {dimensions = array<i32: 1>} : vector<1x256xi32>
    %c128_i32_19 = arith.constant 128 : i32
    %c0_i32_20 = arith.constant 0 : i32
    %64 = arith.cmpi eq, %c128_i32_19, %c0_i32_20 : i32
    %c1_i32_21 = arith.constant 1 : i32
    %65 = arith.select %64, %c1_i32_21, %c128_i32_19 : i32
    %66 = vector.broadcast %65 : i32 to vector<1x256xi32>
    %67 = arith.remsi %63, %66 : vector<1x256xi32>
    %c0_i32_22 = arith.constant 0 : i32
    %68 = vector.broadcast %c0_i32_22 : i32 to vector<1x256xi32>
    %69 = arith.cmpi ne, %67, %68 : vector<1x256xi32>
    %c0_i32_23 = arith.constant 0 : i32
    %70 = vector.broadcast %c0_i32_23 : i32 to vector<1x256xi32>
    %71 = arith.cmpi slt, %67, %70 : vector<1x256xi32>
    %c0_i32_24 = arith.constant 0 : i32
    %72 = arith.cmpi slt, %65, %c0_i32_24 : i32
    %73 = vector.broadcast %72 : i1 to vector<1x256xi1>
    %74 = vector.broadcast %73 : vector<1x256xi1> to vector<1x256xi1>
    %75 = arith.xori %71, %74 : vector<1x256xi1>
    %76 = arith.andi %75, %69 : vector<1x256xi1>
    %77 = vector.broadcast %65 : i32 to vector<1x256xi32>
    %78 = arith.addi %67, %77 : vector<1x256xi32>
    %79 = arith.select %76, %78, %67 : vector<1x256xi1>, vector<1x256xi32>
    %c64_i32_25 = arith.constant 64 : i32
    %80 = vector.broadcast %c64_i32_25 : i32 to vector<1x256xi32>
    %81 = arith.cmpi slt, %79, %80 : vector<1x256xi32>
    %82 = vector.shape_cast %81 : vector<1x256xi1> to vector<1x256xi1>
    %83 = vector.broadcast %82 : vector<1x256xi1> to vector<16x256xi1>
    %84 = arith.select %83, %59, %62 : vector<16x256xi1>, vector<16x256xf32>
    %85 = arith.mulf %56, %22 : vector<16x256xf32>
    %86 = arith.mulf %84, %23 : vector<16x256xf32>
    %87 = arith.addf %85, %86 : vector<16x256xf32>
    %88 = vector.extract_strided_slice %21 {offsets = [0, 512], sizes = [16, 256], strides = [1, 1]} : vector<16x768xf32> to vector<16x256xf32>
    %89 = tpu.iota {dimensions = array<i32: 1>} : vector<8x16xi32>
    %c0_26 = arith.constant 0 : index
    %c0_27 = arith.constant 0 : index
    %90 = vector.load %arg4[%c0_26, %c0_27] : memref<16x1xi32, #tpu.memory_space<vmem>>, vector<16x1xi32>
    %c0_28 = arith.constant 0 : index
    %c0_29 = arith.constant 0 : index
    %91 = vector.load %arg5[%c0_28, %c0_29] : memref<2x16xi32, #tpu.memory_space<vmem>>, vector<2x16xi32>
    %c0_30 = arith.constant 0 : index
    %c0_31 = arith.constant 0 : index
    %c0_32 = arith.constant 0 : index
    %c0_33 = arith.constant 0 : index
    %92 = vector.load %arg12[%c0_30, %c0_31, %c0_32, %c0_33] : memref<1x4x8x128xf32, #tpu.memory_space<vmem>>, vector<1x4x8x128xf32>
    %93 = vector.shape_cast %92 : vector<1x4x8x128xf32> to vector<4x8x128xf32>
    %c0_34 = arith.constant 0 : index
    %c0_35 = arith.constant 0 : index
    %c0_36 = arith.constant 0 : index
    %c0_37 = arith.constant 0 : index
    %94 = vector.load %arg13[%c0_34, %c0_35, %c0_36, %c0_37] : memref<1x4x8x128xf32, #tpu.memory_space<vmem>>, vector<1x4x8x128xf32>
    %95 = vector.shape_cast %94 : vector<1x4x8x128xf32> to vector<4x8x128xf32>
    %96 = vector.extract_strided_slice %55 {offsets = [0, 0], sizes = [8, 128], strides = [1, 1]} : vector<16x256xf32> to vector<8x128xf32>
    %97 = vector.extract_strided_slice %55 {offsets = [0, 128], sizes = [8, 128], strides = [1, 1]} : vector<16x256xf32> to vector<8x128xf32>
    %98 = vector.shape_cast %96 : vector<8x128xf32> to vector<1x8x128xf32>
    %99 = vector.shape_cast %97 : vector<8x128xf32> to vector<1x8x128xf32>
    %100 = tpu.concatenate %98, %99 in 0 : vector<1x8x128xf32>, vector<1x8x128xf32> -> vector<2x8x128xf32>
    %101 = vector.extract_strided_slice %87 {offsets = [0, 0], sizes = [8, 128], strides = [1, 1]} : vector<16x256xf32> to vector<8x128xf32>
    %102 = vector.extract_strided_slice %87 {offsets = [0, 128], sizes = [8, 128], strides = [1, 1]} : vector<16x256xf32> to vector<8x128xf32>
    %103 = vector.shape_cast %101 : vector<8x128xf32> to vector<1x8x128xf32>
    %104 = vector.shape_cast %102 : vector<8x128xf32> to vector<1x8x128xf32>
    %105 = tpu.concatenate %103, %104 in 0 : vector<1x8x128xf32>, vector<1x8x128xf32> -> vector<2x8x128xf32>
    %106 = vector.extract_strided_slice %88 {offsets = [0, 0], sizes = [8, 128], strides = [1, 1]} : vector<16x256xf32> to vector<8x128xf32>
    %107 = vector.extract_strided_slice %88 {offsets = [0, 128], sizes = [8, 128], strides = [1, 1]} : vector<16x256xf32> to vector<8x128xf32>
    %108 = vector.shape_cast %106 : vector<8x128xf32> to vector<1x8x128xf32>
    %109 = vector.shape_cast %107 : vector<8x128xf32> to vector<1x8x128xf32>
    %110 = tpu.concatenate %108, %109 in 0 : vector<1x8x128xf32>, vector<1x8x128xf32> -> vector<2x8x128xf32>
    %111 = vector.extract_strided_slice %93 {offsets = [0, 0, 0], sizes = [2, 8, 128], strides = [1, 1, 1]} : vector<4x8x128xf32> to vector<2x8x128xf32>
    %112 = tpu.concatenate %111, %105 in 1 : vector<2x8x128xf32>, vector<2x8x128xf32> -> vector<2x16x128xf32>
    %113 = vector.extract_strided_slice %95 {offsets = [0, 0, 0], sizes = [2, 8, 128], strides = [1, 1, 1]} : vector<4x8x128xf32> to vector<2x8x128xf32>
    %114 = tpu.concatenate %113, %110 in 1 : vector<2x8x128xf32>, vector<2x8x128xf32> -> vector<2x16x128xf32>
    %115 = arith.truncf %100 : vector<2x8x128xf32> to vector<2x8x128xbf16>
    %116 = arith.truncf %112 : vector<2x16x128xf32> to vector<2x16x128xbf16>
    "tpu.trace_start"() <{level = 10 : i32, message = "hsd,htd->hst"}> : () -> ()
    %cst_38 = arith.constant dense<0.000000e+00> : vector<2x8x16xf32>
    %117 = tpu.matmul %115, %116, %cst_38 {dimension_numbers = #tpu.dot_dimension_numbers<[2], [2], [1], [1], [0, 0, 0, 1, 1, 1], [0], [0]>} : vector<2x8x128xbf16>, vector<2x16x128xbf16>, vector<2x8x16xf32> -> vector<2x8x16xf32>
    "tpu.trace_stop"() : () -> ()
    %118 = vector.extract_strided_slice %90 {offsets = [0, 0], sizes = [8, 1], strides = [1, 1]} : vector<16x1xi32> to vector<8x1xi32>
    %119 = vector.broadcast %118 : vector<8x1xi32> to vector<8x16xi32>
    %120 = arith.cmpi sle, %89, %119 : vector<8x16xi32>
    %121 = vector.extract_strided_slice %91 {offsets = [0, 0], sizes = [1, 16], strides = [1, 1]} : vector<2x16xi32> to vector<1x16xi32>
    %c0_i32_39 = arith.constant 0 : i32
    %122 = vector.broadcast %c0_i32_39 : i32 to vector<1x16xi32>
    %123 = arith.cmpi sgt, %121, %122 : vector<1x16xi32>
    %124 = vector.broadcast %123 : vector<1x16xi1> to vector<8x16xi1>
    %125 = arith.andi %120, %124 : vector<8x16xi1>
    %126 = vector.shape_cast %125 : vector<8x16xi1> to vector<1x8x16xi1>
    %cst_40 = arith.constant -1.000000e+30 : f32
    %127 = vector.shape_cast %126 : vector<1x8x16xi1> to vector<1x8x16xi1>
    %128 = vector.broadcast %127 : vector<1x8x16xi1> to vector<2x8x16xi1>
    %129 = vector.broadcast %cst_40 : f32 to vector<2x8x16xf32>
    %130 = arith.select %128, %117, %129 : vector<2x8x16xi1>, vector<2x8x16xf32>
    %cst_41 = arith.constant dense<0xFF800000> : vector<2x8xf32>
    %131 = vector.multi_reduction <maximumf>, %130, %cst_41 [2] : vector<2x8x16xf32> to vector<2x8xf32>
    %132 = vector.shape_cast %131 : vector<2x8xf32> to vector<2x8x1xf32>
    %133 = vector.broadcast %132 : vector<2x8x1xf32> to vector<2x8x16xf32>
    %134 = arith.subf %130, %133 : vector<2x8x16xf32>
    %135 = math.exp %134 : vector<2x8x16xf32>
    %cst_42 = arith.constant dense<0.000000e+00> : vector<2x8xf32>
    %136 = vector.multi_reduction <add>, %135, %cst_42 [2] : vector<2x8x16xf32> to vector<2x8xf32>
    %137 = vector.shape_cast %136 : vector<2x8xf32> to vector<2x8x1xf32>
    %138 = tpu.reciprocal %137 : vector<2x8x1xf32> -> vector<2x8x1xf32>
    %139 = vector.broadcast %138 : vector<2x8x1xf32> to vector<2x8x16xf32>
    %140 = arith.mulf %135, %139 : vector<2x8x16xf32>
    %141 = arith.truncf %140 : vector<2x8x16xf32> to vector<2x8x16xbf16>
    %142 = arith.truncf %114 : vector<2x16x128xf32> to vector<2x16x128xbf16>
    "tpu.trace_start"() <{level = 10 : i32, message = "hst,htd->hsd"}> : () -> ()
    %cst_43 = arith.constant dense<0.000000e+00> : vector<2x8x128xf32>
    %143 = tpu.matmul %141, %142, %cst_43 {dimension_numbers = #tpu.dot_dimension_numbers<[2], [1], [1], [2], [0, 0, 0, 1, 1, 2], [0], [0]>} : vector<2x8x16xbf16>, vector<2x16x128xbf16>, vector<2x8x128xf32> -> vector<2x8x128xf32>
    "tpu.trace_stop"() : () -> ()
    %144 = vector.extract_strided_slice %143 {offsets = [0, 0, 0], sizes = [1, 8, 128], strides = [1, 1, 1]} : vector<2x8x128xf32> to vector<1x8x128xf32>
    %145 = vector.shape_cast %144 : vector<1x8x128xf32> to vector<8x128xf32>
    %146 = vector.extract_strided_slice %143 {offsets = [1, 0, 0], sizes = [1, 8, 128], strides = [1, 1, 1]} : vector<2x8x128xf32> to vector<1x8x128xf32>
    %147 = vector.shape_cast %146 : vector<1x8x128xf32> to vector<8x128xf32>
    %148 = tpu.concatenate %145, %147 in 1 : vector<8x128xf32>, vector<8x128xf32> -> vector<8x256xf32>
    %149 = vector.extract_strided_slice %112 {offsets = [0, 0, 0], sizes = [1, 16, 128], strides = [1, 1, 1]} : vector<2x16x128xf32> to vector<1x16x128xf32>
    %150 = vector.shape_cast %149 : vector<1x16x128xf32> to vector<16x128xf32>
    %151 = vector.extract_strided_slice %112 {offsets = [1, 0, 0], sizes = [1, 16, 128], strides = [1, 1, 1]} : vector<2x16x128xf32> to vector<1x16x128xf32>
    %152 = vector.shape_cast %151 : vector<1x16x128xf32> to vector<16x128xf32>
    %153 = vector.extract_strided_slice %114 {offsets = [0, 0, 0], sizes = [1, 16, 128], strides = [1, 1, 1]} : vector<2x16x128xf32> to vector<1x16x128xf32>
    %154 = vector.shape_cast %153 : vector<1x16x128xf32> to vector<16x128xf32>
    %155 = vector.extract_strided_slice %114 {offsets = [1, 0, 0], sizes = [1, 16, 128], strides = [1, 1, 1]} : vector<2x16x128xf32> to vector<1x16x128xf32>
    %156 = vector.shape_cast %155 : vector<1x16x128xf32> to vector<16x128xf32>
    %157 = tpu.concatenate %150, %152, %154, %156 in 1 : vector<16x128xf32>, vector<16x128xf32>, vector<16x128xf32>, vector<16x128xf32> -> vector<16x512xf32>
    %c0_44 = arith.constant 0 : index
    %c0_45 = arith.constant 0 : index
    %c0_46 = arith.constant 0 : index
    %c0_47 = arith.constant 0 : index
    %158 = vector.load %arg17[%c0_44, %c0_45, %c0_46, %c0_47] : memref<1x2x16x512xf32, #tpu.memory_space<vmem>>, vector<1x1x16x512xf32>
    %159 = vector.shape_cast %158 : vector<1x1x16x512xf32> to vector<16x512xf32>
    %160 = vector.shape_cast %157 : vector<16x512xf32> to vector<1x1x16x512xf32>
    tpu.vector_store %arg17[%c0_44, %c0_45, %c0_46, %c0_47], %160 {strides = array<i32>} : memref<1x2x16x512xf32, #tpu.memory_space<vmem>>, vector<1x1x16x512xf32>,
    %161 = vector.extract_strided_slice %55 {offsets = [8, 0], sizes = [8, 128], strides = [1, 1]} : vector<16x256xf32> to vector<8x128xf32>
    %162 = vector.extract_strided_slice %55 {offsets = [8, 128], sizes = [8, 128], strides = [1, 1]} : vector<16x256xf32> to vector<8x128xf32>
    %163 = vector.shape_cast %161 : vector<8x128xf32> to vector<1x8x128xf32>
    %164 = vector.shape_cast %162 : vector<8x128xf32> to vector<1x8x128xf32>
    %165 = tpu.concatenate %163, %164 in 0 : vector<1x8x128xf32>, vector<1x8x128xf32> -> vector<2x8x128xf32>
    %166 = vector.extract_strided_slice %87 {offsets = [8, 0], sizes = [8, 128], strides = [1, 1]} : vector<16x256xf32> to vector<8x128xf32>
    %167 = vector.extract_strided_slice %87 {offsets = [8, 128], sizes = [8, 128], strides = [1, 1]} : vector<16x256xf32> to vector<8x128xf32>
    %168 = vector.shape_cast %166 : vector<8x128xf32> to vector<1x8x128xf32>
    %169 = vector.shape_cast %167 : vector<8x128xf32> to vector<1x8x128xf32>
    %170 = tpu.concatenate %168, %169 in 0 : vector<1x8x128xf32>, vector<1x8x128xf32> -> vector<2x8x128xf32>
    %171 = vector.extract_strided_slice %88 {offsets = [8, 0], sizes = [8, 128], strides = [1, 1]} : vector<16x256xf32> to vector<8x128xf32>
    %172 = vector.extract_strided_slice %88 {offsets = [8, 128], sizes = [8, 128], strides = [1, 1]} : vector<16x256xf32> to vector<8x128xf32>
    %173 = vector.shape_cast %171 : vector<8x128xf32> to vector<1x8x128xf32>
    %174 = vector.shape_cast %172 : vector<8x128xf32> to vector<1x8x128xf32>
    %175 = tpu.concatenate %173, %174 in 0 : vector<1x8x128xf32>, vector<1x8x128xf32> -> vector<2x8x128xf32>
    %176 = vector.extract_strided_slice %93 {offsets = [2, 0, 0], sizes = [2, 8, 128], strides = [1, 1, 1]} : vector<4x8x128xf32> to vector<2x8x128xf32>
    %177 = tpu.concatenate %176, %170 in 1 : vector<2x8x128xf32>, vector<2x8x128xf32> -> vector<2x16x128xf32>
    %178 = vector.extract_strided_slice %95 {offsets = [2, 0, 0], sizes = [2, 8, 128], strides = [1, 1, 1]} : vector<4x8x128xf32> to vector<2x8x128xf32>
    %179 = tpu.concatenate %178, %175 in 1 : vector<2x8x128xf32>, vector<2x8x128xf32> -> vector<2x16x128xf32>
    %180 = arith.truncf %165 : vector<2x8x128xf32> to vector<2x8x128xbf16>
    %181 = arith.truncf %177 : vector<2x16x128xf32> to vector<2x16x128xbf16>
    "tpu.trace_start"() <{level = 10 : i32, message = "hsd,htd->hst"}> : () -> ()
    %cst_48 = arith.constant dense<0.000000e+00> : vector<2x8x16xf32>
    %182 = tpu.matmul %180, %181, %cst_48 {dimension_numbers = #tpu.dot_dimension_numbers<[2], [2], [1], [1], [0, 0, 0, 1, 1, 1], [0], [0]>} : vector<2x8x128xbf16>, vector<2x16x128xbf16>, vector<2x8x16xf32> -> vector<2x8x16xf32>
    "tpu.trace_stop"() : () -> ()
    %183 = vector.extract_strided_slice %90 {offsets = [8, 0], sizes = [8, 1], strides = [1, 1]} : vector<16x1xi32> to vector<8x1xi32>
    %184 = vector.broadcast %183 : vector<8x1xi32> to vector<8x16xi32>
    %185 = arith.cmpi sle, %89, %184 : vector<8x16xi32>
    %186 = vector.extract_strided_slice %91 {offsets = [1, 0], sizes = [1, 16], strides = [1, 1]} : vector<2x16xi32> to vector<1x16xi32>
    %c0_i32_49 = arith.constant 0 : i32
    %187 = vector.broadcast %c0_i32_49 : i32 to vector<1x16xi32>
    %188 = arith.cmpi sgt, %186, %187 : vector<1x16xi32>
    %189 = vector.broadcast %188 : vector<1x16xi1> to vector<8x16xi1>
    %190 = arith.andi %185, %189 : vector<8x16xi1>
    %191 = vector.shape_cast %190 : vector<8x16xi1> to vector<1x8x16xi1>
    %cst_50 = arith.constant -1.000000e+30 : f32
    %192 = vector.shape_cast %191 : vector<1x8x16xi1> to vector<1x8x16xi1>
    %193 = vector.broadcast %192 : vector<1x8x16xi1> to vector<2x8x16xi1>
    %194 = vector.broadcast %cst_50 : f32 to vector<2x8x16xf32>
    %195 = arith.select %193, %182, %194 : vector<2x8x16xi1>, vector<2x8x16xf32>
    %cst_51 = arith.constant dense<0xFF800000> : vector<2x8xf32>
    %196 = vector.multi_reduction <maximumf>, %195, %cst_51 [2] : vector<2x8x16xf32> to vector<2x8xf32>
    %197 = vector.shape_cast %196 : vector<2x8xf32> to vector<2x8x1xf32>
    %198 = vector.broadcast %197 : vector<2x8x1xf32> to vector<2x8x16xf32>
    %199 = arith.subf %195, %198 : vector<2x8x16xf32>
    %200 = math.exp %199 : vector<2x8x16xf32>
    %cst_52 = arith.constant dense<0.000000e+00> : vector<2x8xf32>
    %201 = vector.multi_reduction <add>, %200, %cst_52 [2] : vector<2x8x16xf32> to vector<2x8xf32>
    %202 = vector.shape_cast %201 : vector<2x8xf32> to vector<2x8x1xf32>
    %203 = tpu.reciprocal %202 : vector<2x8x1xf32> -> vector<2x8x1xf32>
    %204 = vector.broadcast %203 : vector<2x8x1xf32> to vector<2x8x16xf32>
    %205 = arith.mulf %200, %204 : vector<2x8x16xf32>
    %206 = arith.truncf %205 : vector<2x8x16xf32> to vector<2x8x16xbf16>
    %207 = arith.truncf %179 : vector<2x16x128xf32> to vector<2x16x128xbf16>
    "tpu.trace_start"() <{level = 10 : i32, message = "hst,htd->hsd"}> : () -> ()
    %cst_53 = arith.constant dense<0.000000e+00> : vector<2x8x128xf32>
    %208 = tpu.matmul %206, %207, %cst_53 {dimension_numbers = #tpu.dot_dimension_numbers<[2], [1], [1], [2], [0, 0, 0, 1, 1, 2], [0], [0]>} : vector<2x8x16xbf16>, vector<2x16x128xbf16>, vector<2x8x128xf32> -> vector<2x8x128xf32>
    "tpu.trace_stop"() : () -> ()
    %209 = vector.extract_strided_slice %208 {offsets = [0, 0, 0], sizes = [1, 8, 128], strides = [1, 1, 1]} : vector<2x8x128xf32> to vector<1x8x128xf32>
    %210 = vector.shape_cast %209 : vector<1x8x128xf32> to vector<8x128xf32>
    %211 = vector.extract_strided_slice %208 {offsets = [1, 0, 0], sizes = [1, 8, 128], strides = [1, 1, 1]} : vector<2x8x128xf32> to vector<1x8x128xf32>
    %212 = vector.shape_cast %211 : vector<1x8x128xf32> to vector<8x128xf32>
    %213 = tpu.concatenate %210, %212 in 1 : vector<8x128xf32>, vector<8x128xf32> -> vector<8x256xf32>
    %214 = vector.extract_strided_slice %177 {offsets = [0, 0, 0], sizes = [1, 16, 128], strides = [1, 1, 1]} : vector<2x16x128xf32> to vector<1x16x128xf32>
    %215 = vector.shape_cast %214 : vector<1x16x128xf32> to vector<16x128xf32>
    %216 = vector.extract_strided_slice %177 {offsets = [1, 0, 0], sizes = [1, 16, 128], strides = [1, 1, 1]} : vector<2x16x128xf32> to vector<1x16x128xf32>
    %217 = vector.shape_cast %216 : vector<1x16x128xf32> to vector<16x128xf32>
    %218 = vector.extract_strided_slice %179 {offsets = [0, 0, 0], sizes = [1, 16, 128], strides = [1, 1, 1]} : vector<2x16x128xf32> to vector<1x16x128xf32>
    %219 = vector.shape_cast %218 : vector<1x16x128xf32> to vector<16x128xf32>
    %220 = vector.extract_strided_slice %179 {offsets = [1, 0, 0], sizes = [1, 16, 128], strides = [1, 1, 1]} : vector<2x16x128xf32> to vector<1x16x128xf32>
    %221 = vector.shape_cast %220 : vector<1x16x128xf32> to vector<16x128xf32>
    %222 = tpu.concatenate %215, %217, %219, %221 in 1 : vector<16x128xf32>, vector<16x128xf32>, vector<16x128xf32>, vector<16x128xf32> -> vector<16x512xf32>
    %c0_54 = arith.constant 0 : index
    %c1 = arith.constant 1 : index
    %c0_55 = arith.constant 0 : index
    %c0_56 = arith.constant 0 : index
    %223 = vector.load %arg17[%c0_54, %c1, %c0_55, %c0_56] : memref<1x2x16x512xf32, #tpu.memory_space<vmem>>, vector<1x1x16x512xf32>
    %224 = vector.shape_cast %223 : vector<1x1x16x512xf32> to vector<16x512xf32>
    %225 = vector.shape_cast %222 : vector<16x512xf32> to vector<1x1x16x512xf32>
    tpu.vector_store %arg17[%c0_54, %c1, %c0_55, %c0_56], %225 {strides = array<i32>} : memref<1x2x16x512xf32, #tpu.memory_space<vmem>>, vector<1x1x16x512xf32>,
    %226 = tpu.concatenate %148, %213 in 0 : vector<8x256xf32>, vector<8x256xf32> -> vector<16x256xf32>
    %227 = arith.truncf %226 : vector<16x256xf32> to vector<16x256xbf16>
    %c0_57 = arith.constant 0 : index
    %c0_58 = arith.constant 0 : index
    %c0_59 = arith.constant 0 : index
    %228 = vector.load %arg8[%c0_57, %c0_58, %c0_59] : memref<1x256x256xbf16, #tpu.memory_space<vmem>>, vector<1x256x256xbf16>
    %229 = vector.shape_cast %228 : vector<1x256x256xbf16> to vector<256x256xbf16>
    %cst_60 = arith.constant dense<0.000000e+00> : vector<16x256xf32>
    %230 = tpu.matmul %227, %229, %cst_60 {dimension_numbers = #tpu.dot_dimension_numbers<[1], [0], [0], [1], [0, 0, 1, 1], [], []>} : vector<16x256xbf16>, vector<256x256xbf16>, vector<16x256xf32> -> vector<16x256xf32>
    %231 = arith.addf %3, %230 : vector<16x256xf32>
    %c0_61 = arith.constant 0 : index
    %c0_62 = arith.constant 0 : index
    %c0_63 = arith.constant 0 : index
    %232 = vector.load %arg9[%c0_61, %c0_62, %c0_63] : memref<1x1x256xf32, #tpu.memory_space<vmem>>, vector<1x1x256xf32>
    %233 = vector.shape_cast %232 : vector<1x1x256xf32> to vector<1x256xf32>
    %234 = arith.mulf %231, %231 : vector<16x256xf32>
    %cst_64 = arith.constant dense<0.000000e+00> : vector<16xf32>
    %235 = vector.multi_reduction <add>, %234, %cst_64 [1] : vector<16x256xf32> to vector<16xf32>
    %236 = vector.shape_cast %235 : vector<16xf32> to vector<16x1xf32>
    %cst_65 = arith.constant 2.560000e+02 : f32
    %237 = vector.broadcast %cst_65 : f32 to vector<16x1xf32>
    %238 = arith.divf %236, %237 : vector<16x1xf32>
    %cst_66 = arith.constant 9.99999997E-7 : f32
    %239 = vector.broadcast %cst_66 : f32 to vector<16x1xf32>
    %240 = arith.addf %238, %239 : vector<16x1xf32>
    %241 = math.rsqrt %240 : vector<16x1xf32>
    %242 = vector.broadcast %241 : vector<16x1xf32> to vector<16x256xf32>
    %243 = arith.mulf %231, %242 : vector<16x256xf32>
    %244 = vector.broadcast %233 : vector<1x256xf32> to vector<16x256xf32>
    %245 = arith.mulf %243, %244 : vector<16x256xf32>
    %246 = arith.truncf %245 : vector<16x256xf32> to vector<16x256xbf16>
    %c0_67 = arith.constant 0 : index
    %c0_68 = arith.constant 0 : index
    %c0_69 = arith.constant 0 : index
    %247 = vector.load %arg10[%c0_67, %c0_68, %c0_69] : memref<1x256x1024xbf16, #tpu.memory_space<vmem>>, vector<1x256x1024xbf16>
    %248 = vector.shape_cast %247 : vector<1x256x1024xbf16> to vector<256x1024xbf16>
    %cst_70 = arith.constant dense<0.000000e+00> : vector<16x1024xf32>
    %249 = tpu.matmul %246, %248, %cst_70 {dimension_numbers = #tpu.dot_dimension_numbers<[1], [0], [0], [1], [0, 0, 1, 1], [], []>} : vector<16x256xbf16>, vector<256x1024xbf16>, vector<16x1024xf32> -> vector<16x1024xf32>
    %250 = vector.extract_strided_slice %249 {offsets = [0, 0], sizes = [16, 512], strides = [1, 1]} : vector<16x1024xf32> to vector<16x512xf32>
    %251 = arith.mulf %250, %250 : vector<16x512xf32>
    %252 = arith.mulf %250, %251 : vector<16x512xf32>
    %cst_71 = arith.constant 4.471500e-02 : f32
    %253 = vector.broadcast %cst_71 : f32 to vector<16x512xf32>
    %254 = arith.mulf %253, %252 : vector<16x512xf32>
    %255 = arith.addf %250, %254 : vector<16x512xf32>
    %cst_72 = arith.constant 0.797884583 : f32
    %256 = vector.broadcast %cst_72 : f32 to vector<16x512xf32>
    %257 = arith.mulf %256, %255 : vector<16x512xf32>
    %258 = math.tanh %257 : vector<16x512xf32>
    %cst_73 = arith.constant 1.000000e+00 : f32
    %259 = vector.broadcast %cst_73 : f32 to vector<16x512xf32>
    %260 = arith.addf %259, %258 : vector<16x512xf32>
    %cst_74 = arith.constant 5.000000e-01 : f32
    %261 = vector.broadcast %cst_74 : f32 to vector<16x512xf32>
    %262 = arith.mulf %261, %260 : vector<16x512xf32>
    %263 = arith.mulf %250, %262 : vector<16x512xf32>
    %264 = vector.extract_strided_slice %249 {offsets = [0, 512], sizes = [16, 512], strides = [1, 1]} : vector<16x1024xf32> to vector<16x512xf32>
    %265 = arith.mulf %263, %264 : vector<16x512xf32>
    %266 = arith.truncf %265 : vector<16x512xf32> to vector<16x512xbf16>
    %c0_75 = arith.constant 0 : index
    %c0_76 = arith.constant 0 : index
    %c0_77 = arith.constant 0 : index
    %267 = vector.load %arg11[%c0_75, %c0_76, %c0_77] : memref<1x512x256xbf16, #tpu.memory_space<vmem>>, vector<1x512x256xbf16>
    %268 = vector.shape_cast %267 : vector<1x512x256xbf16> to vector<512x256xbf16>
    %cst_78 = arith.constant dense<0.000000e+00> : vector<16x256xf32>
    %269 = tpu.matmul %266, %268, %cst_78 {dimension_numbers = #tpu.dot_dimension_numbers<[1], [0], [0], [1], [0, 0, 1, 1], [], []>} : vector<16x512xbf16>, vector<512x256xbf16>, vector<16x256xf32> -> vector<16x256xf32>
    %270 = arith.addf %231, %269 : vector<16x256xf32>
    %c0_79 = arith.constant 0 : index
    %c0_80 = arith.constant 0 : index
    %271 = vector.load %arg18[%c0_79, %c0_80] : memref<16x256xf32, #tpu.memory_space<vmem>>, vector<16x256xf32>
    tpu.vector_store %arg18[%c0_79, %c0_80], %270 {strides = array<i32>} : memref<16x256xf32, #tpu.memory_space<vmem>>, vector<16x256xf32>,
    %c1_i32_81 = arith.constant 1 : i32
    %272 = arith.cmpi eq, %arg0, %c1_i32_81 : i32
    %273 = arith.extui %272 : i1 to i32
    %c0_i32_82 = arith.constant 0 : i32
    %274 = arith.cmpi ne, %273, %c0_i32_82 : i32
    scf.if %274 {
      %c0_83 = arith.constant 0 : index
      %c0_84 = arith.constant 0 : index
      %275 = vector.load %arg14[%c0_83, %c0_84] : memref<1x256xf32, #tpu.memory_space<vmem>>, vector<1x256xf32>
      %276 = arith.mulf %270, %270 : vector<16x256xf32>
      %cst_85 = arith.constant dense<0.000000e+00> : vector<16xf32>
      %277 = vector.multi_reduction <add>, %276, %cst_85 [1] : vector<16x256xf32> to vector<16xf32>
      %278 = vector.shape_cast %277 : vector<16xf32> to vector<16x1xf32>
      %cst_86 = arith.constant 2.560000e+02 : f32
      %279 = vector.broadcast %cst_86 : f32 to vector<16x1xf32>
      %280 = arith.divf %278, %279 : vector<16x1xf32>
      %cst_87 = arith.constant 9.99999997E-7 : f32
      %281 = vector.broadcast %cst_87 : f32 to vector<16x1xf32>
      %282 = arith.addf %280, %281 : vector<16x1xf32>
      %283 = math.rsqrt %282 : vector<16x1xf32>
      %284 = vector.broadcast %283 : vector<16x1xf32> to vector<16x256xf32>
      %285 = arith.mulf %270, %284 : vector<16x256xf32>
      %286 = vector.broadcast %275 : vector<1x256xf32> to vector<16x256xf32>
      %287 = arith.mulf %285, %286 : vector<16x256xf32>
      %288 = arith.truncf %287 : vector<16x256xf32> to vector<16x256xbf16>
      %c0_88 = arith.constant 0 : index
      %c0_89 = arith.constant 0 : index
      %289 = vector.load %arg15[%c0_88, %c0_89] : memref<256x512xbf16, #tpu.memory_space<vmem>>, vector<256x512xbf16>
      %cst_90 = arith.constant dense<0.000000e+00> : vector<16x512xf32>
      %290 = tpu.matmul %288, %289, %cst_90 {dimension_numbers = #tpu.dot_dimension_numbers<[1], [0], [0], [1], [0, 0, 1, 1], [], []>} : vector<16x256xbf16>, vector<256x512xbf16>, vector<16x512xf32> -> vector<16x512xf32>
      %c0_91 = arith.constant 0 : index
      %c0_92 = arith.constant 0 : index
      %291 = vector.load %arg16[%c0_91, %c0_92] : memref<16x512xf32, #tpu.memory_space<vmem>>, vector<16x512xf32>
      tpu.vector_store %arg16[%c0_91, %c0_92], %290 {strides = array<i32>} : memref<16x512xf32, #tpu.memory_space<vmem>>, vector<16x512xf32>,
    } else {
    }
    return
  }
  func.func @transform_0(%arg0: i32) -> (i32, i32) {
    %c0_i32 = arith.constant 0 : i32
    %c0_i32_0 = arith.constant 0 : i32
    %c0_i32_1 = arith.constant 0 : i32
    return %c0_i32, %c0_i32_0 : i32, i32
  }
  func.func @transform_1(%arg0: i32) -> (i32, i32) {
    %c0_i32 = arith.constant 0 : i32
    %c0_i32_0 = arith.constant 0 : i32
    %c0_i32_1 = arith.constant 0 : i32
    return %c0_i32, %c0_i32_0 : i32, i32
  }
  func.func @transform_2(%arg0: i32) -> (i32, i32) {
    %c0_i32 = arith.constant 0 : i32
    %c0_i32_0 = arith.constant 0 : i32
    %c0_i32_1 = arith.constant 0 : i32
    return %c0_i32, %c0_i32_0 : i32, i32
  }
  func.func @transform_3(%arg0: i32) -> (i32, i32) {
    %c0_i32 = arith.constant 0 : i32
    %c0_i32_0 = arith.constant 0 : i32
    %c0_i32_1 = arith.constant 0 : i32
    return %c0_i32, %c0_i32_0 : i32, i32
  }
  func.func @transform_4(%arg0: i32) -> (i32, i32) {
    %c0_i32 = arith.constant 0 : i32
    %c0_i32_0 = arith.constant 0 : i32
    %c0_i32_1 = arith.constant 0 : i32
    return %c0_i32, %c0_i32_0 : i32, i32
  }
  func.func @transform_5(%arg0: i32) -> (i32, i32, i32) {
    %c0_i32 = arith.constant 0 : i32
    %c0_i32_0 = arith.constant 0 : i32
    %c0_i32_1 = arith.constant 0 : i32
    return %arg0, %c0_i32, %c0_i32_0 : i32, i32, i32
  }
  func.func @transform_6(%arg0: i32) -> (i32, i32, i32) {
    %c0_i32 = arith.constant 0 : i32
    %c0_i32_0 = arith.constant 0 : i32
    %c0_i32_1 = arith.constant 0 : i32
    return %arg0, %c0_i32, %c0_i32_0 : i32, i32, i32
  }
  func.func @transform_7(%arg0: i32) -> (i32, i32, i32) {
    %c0_i32 = arith.constant 0 : i32
    %c0_i32_0 = arith.constant 0 : i32
    %c0_i32_1 = arith.constant 0 : i32
    return %arg0, %c0_i32, %c0_i32_0 : i32, i32, i32
  }
  func.func @transform_8(%arg0: i32) -> (i32, i32, i32) {
    %c0_i32 = arith.constant 0 : i32
    %c0_i32_0 = arith.constant 0 : i32
    %c0_i32_1 = arith.constant 0 : i32
    return %arg0, %c0_i32, %c0_i32_0 : i32, i32, i32
  }
  func.func @transform_9(%arg0: i32) -> (i32, i32, i32) {
    %c0_i32 = arith.constant 0 : i32
    %c0_i32_0 = arith.constant 0 : i32
    %c0_i32_1 = arith.constant 0 : i32
    return %arg0, %c0_i32, %c0_i32_0 : i32, i32, i32
  }
  func.func @transform_10(%arg0: i32) -> (i32, i32, i32) {
    %c0_i32 = arith.constant 0 : i32
    %c0_i32_0 = arith.constant 0 : i32
    %c0_i32_1 = arith.constant 0 : i32
    return %arg0, %c0_i32, %c0_i32_0 : i32, i32, i32
  }
  func.func @transform_11(%arg0: i32) -> (i32, i32, i32, i32) {
    %c0_i32 = arith.constant 0 : i32
    %c0_i32_0 = arith.constant 0 : i32
    %c0_i32_1 = arith.constant 0 : i32
    %c0_i32_2 = arith.constant 0 : i32
    return %arg0, %c0_i32, %c0_i32_0, %c0_i32_1 : i32, i32, i32, i32
  }
  func.func @transform_12(%arg0: i32) -> (i32, i32, i32, i32) {
    %c0_i32 = arith.constant 0 : i32
    %c0_i32_0 = arith.constant 0 : i32
    %c0_i32_1 = arith.constant 0 : i32
    %c0_i32_2 = arith.constant 0 : i32
    return %arg0, %c0_i32, %c0_i32_0, %c0_i32_1 : i32, i32, i32, i32
  }
  func.func @transform_13(%arg0: i32) -> (i32, i32) {
    %c0_i32 = arith.constant 0 : i32
    %c0_i32_0 = arith.constant 0 : i32
    %c0_i32_1 = arith.constant 0 : i32
    return %c0_i32, %c0_i32_0 : i32, i32
  }
  func.func @transform_14(%arg0: i32) -> (i32, i32) {
    %c0_i32 = arith.constant 0 : i32
    %c0_i32_0 = arith.constant 0 : i32
    %c0_i32_1 = arith.constant 0 : i32
    return %c0_i32, %c0_i32_0 : i32, i32
  }
  func.func @transform_15(%arg0: i32) -> (i32, i32) {
    %c0_i32 = arith.constant 0 : i32
    %c0_i32_0 = arith.constant 0 : i32
    %c0_i32_1 = arith.constant 0 : i32
    return %c0_i32, %c0_i32_0 : i32, i32
  }
  func.func @transform_16(%arg0: i32) -> (i32, i32, i32, i32) {
    %c0_i32 = arith.constant 0 : i32
    %c0_i32_0 = arith.constant 0 : i32
    %c0_i32_1 = arith.constant 0 : i32
    %c0_i32_2 = arith.constant 0 : i32
    return %arg0, %c0_i32, %c0_i32_0, %c0_i32_1 : i32, i32, i32, i32
  }
}

</mosaic_0001>

<llo_original>
// kernel: llm_forward.1
$region0: #{llm_forward.1}
  #allocation0 [shape = 'u32[]', space=smem, size = 0x4, offset = 0x4, fixed_abs, tag = 'smem constant byte address 0x4 - core index']
  #allocation1 [shape = 'u32[72,128]{1,0:T(1,128)}', space=vmem, size = 0x9000, scoped, tag = 'internal scratch']
  #allocation2 [shape = 'f32[16,256]{1,0:T(8,128)}', space=vmem, size = 0x4000, scoped, tag = 'scratch operand']
  %s0 = inlined_call_operand.vmem [shape: f32[16,256], index: 0, kind: input, shape index: {}]
  %s1 = inlined_call_operand.vmem [shape: f32[16,256], index: 1, kind: input, shape index: {}]
  %s2 = inlined_call_operand.vmem [shape: f32[16,256], index: 2, kind: input, shape index: {}]
  %s3 = inlined_call_operand.vmem [shape: s32[16,1], index: 3, kind: input, shape index: {}]
  %s4 = inlined_call_operand.vmem [shape: s32[2,16], index: 4, kind: input, shape index: {}]
  %s5 = inlined_call_operand.vmem [shape: f32[2,1,256], index: 5, kind: input, shape index: {}]
  %s6 = inlined_call_operand.hbm [shape: bf16[2,256,768], index: 6, kind: input, shape index: {}]
  %s7 = inlined_call_operand.hbm [shape: bf16[2,256,256], index: 7, kind: input, shape index: {}]
  %s8 = inlined_call_operand.vmem [shape: f32[2,1,256], index: 8, kind: input, shape index: {}]
  %s9 = inlined_call_operand.hbm [shape: bf16[2,256,1024], index: 9, kind: input, shape index: {}]
  %s10 = inlined_call_operand.hbm [shape: bf16[2,512,256], index: 10, kind: input, shape index: {}]
  %s11 = inlined_call_operand.vmem [shape: f32[2,4,8,128], index: 11, kind: input, shape index: {}]
  %s12 = inlined_call_operand.vmem [shape: f32[2,4,8,128], index: 12, kind: input, shape index: {}]
  %s13 = inlined_call_operand.vmem [shape: f32[1,256], index: 13, kind: input, shape index: {}]
  %s14 = inlined_call_operand.hbm [shape: bf16[256,512], index: 14, kind: input, shape index: {}]
  %s15 = inlined_call_operand.vmem [shape: f32[16,512], index: 15, kind: output, shape index: {0}]
  %s16 = inlined_call_operand.vmem [shape: f32[2,2,16,512], index: 16, kind: output, shape index: {1}]
  %17 = xla_tuple %s15, %s16
  %s18 = sld [smem:[#allocation0]]
  $region129: #{llm_forward.1} parent=0
    _
  %s20 = ssub.s32 1, %s18
  %s21 = scalar_select 0, %s20, %s18
  $region1: #{llm_forward.1} parent=0
    #allocation3 [shape = 'u8[786432]{0}', space=vmem, size = 0xc0000, scoped, tag = 'input window, operand 6']
    #allocation4 [shape = 's32[2]{0}', space=sflag, size = 0x8, scoped, tag = 'scoped memory for llm_forward.1']
    #allocation5 [shape = 'u8[262144]{0}', space=vmem, size = 0x40000, scoped, tag = 'input window, operand 7']
    #allocation6 [shape = 's32[2]{0}', space=sflag, size = 0x8, scoped, tag = 'scoped memory for llm_forward.1']
    #allocation7 [shape = 'u8[1048576]{0}', space=vmem, size = 0x100000, scoped, tag = 'input window, operand 9']
    #allocation8 [shape = 'u8[524288]{0}', space=vmem, size = 0x80000, scoped, tag = 'input window, operand 10']
    #allocation9 [shape = 's32[2]{0}', space=sflag, size = 0x8, scoped, tag = 'scoped memory for llm_forward.1']
    #allocation10 [shape = 'u8[262144]{0}', space=vmem, size = 0x40000, scoped, tag = 'input window, operand 14, single buffered']
    %22 = vsyncpa [#allocation4], 0
    %s23 = scalar_lea.sflag [#allocation4], 1
    %24 = vsyncpa %s23, 0
    %25 = vsyncpa [#allocation6], 0
    %s26 = scalar_lea.sflag [#allocation6], 1
    %27 = vsyncpa %s26, 0
    %28 = vsyncpa [#allocation9], 0
    %s29 = scalar_lea.sflag [#allocation9], 1
    %30 = vsyncpa %s29, 0
    loop: start=0, step=1, limit=4
    $region2: #{llm_forward.1} parent=1 // loop_pre_header
      _
    $region3: #{llm_forward.1} parent=1 // loop_header
      %s32 = sphi 0, %s36
      %p33 = scmp.ge.s32.totalorder %s32, 4
      %s40 = sphi 0, %s40
      %s42 = sphi 0, %s40
      %s43 = sphi 0, %s42
      %s57 = sphi 0, %s43
      %s61 = sphi 0, %s61
      %s63 = sphi 0, %s61
      %s64 = sphi 0, %s63
      %s78 = sphi 0, %s64
      %s82 = sphi 0, %s82
      %s84 = sphi 0, %s82
      %s85 = sphi 0, %s84
      %s99 = sphi 0, %s85
      %s103 = sphi 0, %s103
      %s105 = sphi 0, %s103
      %s106 = sphi 0, %s105
      %s120 = sphi 0, %s106
      %s124 = sphi 0, %s124
      %s126 = sphi 0, %s124
      %s127 = sphi 0, %s126
      %s141 = sphi 0, %s127
      %s147 = sphi 0, %s149
      %s150 = sphi 0, %s147
      %s151 = sphi 0, %s150
      %s167 = sphi 0, %s151
      %s173 = sphi 0, %s175
      %s176 = sphi 0, %s173
      %s177 = sphi 0, %s176
      %s193 = sphi 0, %s177
      %s199 = sphi 0, %s201
      %s202 = sphi 0, %s199
      %s203 = sphi 0, %s202
      %s219 = sphi 0, %s203
      %s225 = sphi 0, %s227
      %s228 = sphi 0, %s225
      %s229 = sphi 0, %s228
      %s245 = sphi 0, %s229
      %s251 = sphi 0, %s253
      %s254 = sphi 0, %s251
      %s255 = sphi 0, %s254
      %s271 = sphi 0, %s255
      %s277 = sphi 0, %s279
      %s280 = sphi 0, %s277
      %s281 = sphi 0, %s280
      %s297 = sphi 0, %s281
      %s303 = sphi 0, %s305
      %s306 = sphi 0, %s303
      %s307 = sphi 0, %s306
      %s323 = sphi 0, %s307
      %s329 = sphi 0, %s331
      %s332 = sphi 0, %s329
      %s333 = sphi 0, %s332
      %s349 = sphi 0, %s333
      %s353 = sphi 0, %s353
      %s355 = sphi 0, %s353
      %s356 = sphi 0, %s355
      %s370 = sphi 0, %s356
      %s374 = sphi 0, %s374
      %s376 = sphi 0, %s374
      %s377 = sphi 0, %s376
      %s391 = sphi 0, %s377
      %s395 = sphi 0, %s395
      %s397 = sphi 0, %s395
      %s398 = sphi 0, %s397
      %s412 = sphi 0, %s398
      %s418 = sphi 0, %s420
      %s421 = sphi 0, %s418
      %s422 = sphi 0, %s421
      %s438 = sphi 0, %s422
    $region4: #{llm_forward.1} parent=1 // loop_header_branch
      %35 = sbr.rel (%p33) target = $region8
    $region5: #{llm_forward.1} parent=1 // loop_body
      %s37 = ssub.s32 %s32, 1
      %s38 = ssub.s32 %s32, 2
      %s39 = sadd.s32 %s32, 1
      %s41 = sadd.s32 %s40, 1
      %p44 = scmp.eq.s32.totalorder %s32, 1
      %p45 = scmp.ne.s32.totalorder %s40, %s42
      %p46 = scmp.eq.s32.totalorder %s32, 0
      %p47 = por %p45, %p46
      %p48 = scmp.ne.s32.totalorder %s40, %s42
      %p49 = scmp.eq.s32.totalorder %s37, 1
      %p50 = por %p48, %p49
      %p51 = scmp.ne.s32.totalorder %s42, %s43
      %p52 = scmp.eq.s32.totalorder %s37, 0
      %p53 = por %p51, %p52
      %p54 = scmp.ne.s32.totalorder %s42, %s43
      %p55 = scmp.eq.s32.totalorder %s38, 1
      %p56 = por %p54, %p55
      %p58 = scmp.ne.s32.totalorder %s43, %s57
      %p59 = scmp.eq.s32.totalorder %s38, 0
      %p60 = por %p58, %p59
      %s62 = sadd.s32 %s61, 1
      %p65 = scmp.eq.s32.totalorder %s32, 1
      %p66 = scmp.ne.s32.totalorder %s61, %s63
      %p67 = scmp.eq.s32.totalorder %s32, 0
      %p68 = por %p66, %p67
      %p69 = scmp.ne.s32.totalorder %s61, %s63
      %p70 = scmp.eq.s32.totalorder %s37, 1
      %p71 = por %p69, %p70
      %p72 = scmp.ne.s32.totalorder %s63, %s64
      %p73 = scmp.eq.s32.totalorder %s37, 0
      %p74 = por %p72, %p73
      %p75 = scmp.ne.s32.totalorder %s63, %s64
      %p76 = scmp.eq.s32.totalorder %s38, 1
      %p77 = por %p75, %p76
      %p79 = scmp.ne.s32.totalorder %s64, %s78
      %p80 = scmp.eq.s32.totalorder %s38, 0
      %p81 = por %p79, %p80
      %s83 = sadd.s32 %s82, 1
      %p86 = scmp.eq.s32.totalorder %s32, 1
      %p87 = scmp.ne.s32.totalorder %s82, %s84
      %p88 = scmp.eq.s32.totalorder %s32, 0
      %p89 = por %p87, %p88
      %p90 = scmp.ne.s32.totalorder %s82, %s84
      %p91 = scmp.eq.s32.totalorder %s37, 1
      %p92 = por %p90, %p91
      %p93 = scmp.ne.s32.totalorder %s84, %s85
      %p94 = scmp.eq.s32.totalorder %s37, 0
      %p95 = por %p93, %p94
      %p96 = scmp.ne.s32.totalorder %s84, %s85
      %p97 = scmp.eq.s32.totalorder %s38, 1
      %p98 = por %p96, %p97
      %p100 = scmp.ne.s32.totalorder %s85, %s99
      %p101 = scmp.eq.s32.totalorder %s38, 0
      %p102 = por %p100, %p101
      %s104 = sadd.s32 %s103, 1
      %p107 = scmp.eq.s32.totalorder %s32, 1
      %p108 = scmp.ne.s32.totalorder %s103, %s105
      %p109 = scmp.eq.s32.totalorder %s32, 0
      %p110 = por %p108, %p109
      %p111 = scmp.ne.s32.totalorder %s103, %s105
      %p112 = scmp.eq.s32.totalorder %s37, 1
      %p113 = por %p111, %p112
      %p114 = scmp.ne.s32.totalorder %s105, %s106
      %p115 = scmp.eq.s32.totalorder %s37, 0
      %p116 = por %p114, %p115
      %p117 = scmp.ne.s32.totalorder %s105, %s106
      %p118 = scmp.eq.s32.totalorder %s38, 1
      %p119 = por %p117, %p118
      %p121 = scmp.ne.s32.totalorder %s106, %s120
      %p122 = scmp.eq.s32.totalorder %s38, 0
      %p123 = por %p121, %p122
      %s125 = sadd.s32 %s124, 1
      %p128 = scmp.eq.s32.totalorder %s32, 1
      %p129 = scmp.ne.s32.totalorder %s124, %s126
      %p130 = scmp.eq.s32.totalorder %s32, 0
      %p131 = por %p129, %p130
      %p132 = scmp.ne.s32.totalorder %s124, %s126
      %p133 = scmp.eq.s32.totalorder %s37, 1
      %p134 = por %p132, %p133
      %p135 = scmp.ne.s32.totalorder %s126, %s127
      %p136 = scmp.eq.s32.totalorder %s37, 0
      %p137 = por %p135, %p136
      %p138 = scmp.ne.s32.totalorder %s126, %s127
      %p139 = scmp.eq.s32.totalorder %s38, 1
      %p140 = por %p138, %p139
      %p142 = scmp.ne.s32.totalorder %s127, %s141
      %p143 = scmp.eq.s32.totalorder %s38, 0
      %p144 = por %p142, %p143
      %s145 = ssub.s32 %s32, %s39
      %p146 = scmp.eq.s32.totalorder %s145, 0
      %s148 = sadd.s32 %s147, 1
      %s149 = scalar_select %p146, %s147, %s148
      %p152 = pneg %p146
      %p153 = scmp.eq.s32.totalorder %s32, 1
      %p154 = por %p152, %p153
      %p155 = scmp.ne.s32.totalorder %s147, %s150
      %p156 = scmp.eq.s32.totalorder %s32, 0
      %p157 = por %p155, %p156
      %p158 = scmp.ne.s32.totalorder %s147, %s150
      %p159 = scmp.eq.s32.totalorder %s37, 1
      %p160 = por %p158, %p159
      %p161 = scmp.ne.s32.totalorder %s150, %s151
      %p162 = scmp.eq.s32.totalorder %s37, 0
      %p163 = por %p161, %p162
      %p164 = scmp.ne.s32.totalorder %s150, %s151
      %p165 = scmp.eq.s32.totalorder %s38, 1
      %p166 = por %p164, %p165
      %p168 = scmp.ne.s32.totalorder %s151, %s167
      %p169 = scmp.eq.s32.totalorder %s38, 0
      %p170 = por %p168, %p169
      %s171 = ssub.s32 %s32, %s39
      %p172 = scmp.eq.s32.totalorder %s171, 0
      %s174 = sadd.s32 %s173, 1
      %s175 = scalar_select %p172, %s173, %s174
      %p178 = pneg %p172
      %p179 = scmp.eq.s32.totalorder %s32, 1
      %p180 = por %p178, %p179
      %p181 = scmp.ne.s32.totalorder %s173, %s176
      %p182 = scmp.eq.s32.totalorder %s32, 0
      %p183 = por %p181, %p182
      %p184 = scmp.ne.s32.totalorder %s173, %s176
      %p185 = scmp.eq.s32.totalorder %s37, 1
      %p186 = por %p184, %p185
      %p187 = scmp.ne.s32.totalorder %s176, %s177
      %p188 = scmp.eq.s32.totalorder %s37, 0
      %p189 = por %p187, %p188
      %p190 = scmp.ne.s32.totalorder %s176, %s177
      %p191 = scmp.eq.s32.totalorder %s38, 1
      %p192 = por %p190, %p191
      %p194 = scmp.ne.s32.totalorder %s177, %s193
      %p195 = scmp.eq.s32.totalorder %s38, 0
      %p196 = por %p194, %p195
      %s197 = ssub.s32 %s32, %s39
      %p198 = scmp.eq.s32.totalorder %s197, 0
      %s200 = sadd.s32 %s199, 1
      %s201 = scalar_select %p198, %s199, %s200
      %p204 = pneg %p198
      %p205 = scmp.eq.s32.totalorder %s32, 1
      %p206 = por %p204, %p205
      %p207 = scmp.ne.s32.totalorder %s199, %s202
      %p208 = scmp.eq.s32.totalorder %s32, 0
      %p209 = por %p207, %p208
      %p210 = scmp.ne.s32.totalorder %s199, %s202
      %p211 = scmp.eq.s32.totalorder %s37, 1
      %p212 = por %p210, %p211
      %p213 = scmp.ne.s32.totalorder %s202, %s203
      %p214 = scmp.eq.s32.totalorder %s37, 0
      %p215 = por %p213, %p214
      %p216 = scmp.ne.s32.totalorder %s202, %s203
      %p217 = scmp.eq.s32.totalorder %s38, 1
      %p218 = por %p216, %p217
      %p220 = scmp.ne.s32.totalorder %s203, %s219
      %p221 = scmp.eq.s32.totalorder %s38, 0
      %p222 = por %p220, %p221
      %s223 = ssub.s32 %s32, %s39
      %p224 = scmp.eq.s32.totalorder %s223, 0
      %s226 = sadd.s32 %s225, 1
      %s227 = scalar_select %p224, %s225, %s226
      %p230 = pneg %p224
      %p231 = scmp.eq.s32.totalorder %s32, 1
      %p232 = por %p230, %p231
      %p233 = scmp.ne.s32.totalorder %s225, %s228
      %p234 = scmp.eq.s32.totalorder %s32, 0
      %p235 = por %p233, %p234
      %p236 = scmp.ne.s32.totalorder %s225, %s228
      %p237 = scmp.eq.s32.totalorder %s37, 1
      %p238 = por %p236, %p237
      %p239 = scmp.ne.s32.totalorder %s228, %s229
      %p240 = scmp.eq.s32.totalorder %s37, 0
      %p241 = por %p239, %p240
      %p242 = scmp.ne.s32.totalorder %s228, %s229
      %p243 = scmp.eq.s32.totalorder %s38, 1
      %p244 = por %p242, %p243
      %p246 = scmp.ne.s32.totalorder %s229, %s245
      %p247 = scmp.eq.s32.totalorder %s38, 0
      %p248 = por %p246, %p247
      %s249 = ssub.s32 %s32, %s39
      %p250 = scmp.eq.s32.totalorder %s249, 0
      %s252 = sadd.s32 %s251, 1
      %s253 = scalar_select %p250, %s251, %s252
      %p256 = pneg %p250
      %p257 = scmp.eq.s32.totalorder %s32, 1
      %p258 = por %p256, %p257
      %p259 = scmp.ne.s32.totalorder %s251, %s254
      %p260 = scmp.eq.s32.totalorder %s32, 0
      %p261 = por %p259, %p260
      %p262 = scmp.ne.s32.totalorder %s251, %s254
      %p263 = scmp.eq.s32.totalorder %s37, 1
      %p264 = por %p262, %p263
      %p265 = scmp.ne.s32.totalorder %s254, %s255
      %p266 = scmp.eq.s32.totalorder %s37, 0
      %p267 = por %p265, %p266
      %p268 = scmp.ne.s32.totalorder %s254, %s255
      %p269 = scmp.eq.s32.totalorder %s38, 1
      %p270 = por %p268, %p269
      %p272 = scmp.ne.s32.totalorder %s255, %s271
      %p273 = scmp.eq.s32.totalorder %s38, 0
      %p274 = por %p272, %p273
      %s275 = ssub.s32 %s32, %s39
      %p276 = scmp.eq.s32.totalorder %s275, 0
      %s278 = sadd.s32 %s277, 1
      %s279 = scalar_select %p276, %s277, %s278
      %p282 = pneg %p276
      %p283 = scmp.eq.s32.totalorder %s32, 1
      %p284 = por %p282, %p283
      %p285 = scmp.ne.s32.totalorder %s277, %s280
      %p286 = scmp.eq.s32.totalorder %s32, 0
      %p287 = por %p285, %p286
      %p288 = scmp.ne.s32.totalorder %s277, %s280
      %p289 = scmp.eq.s32.totalorder %s37, 1
      %p290 = por %p288, %p289
      %p291 = scmp.ne.s32.totalorder %s280, %s281
      %p292 = scmp.eq.s32.totalorder %s37, 0
      %p293 = por %p291, %p292
      %p294 = scmp.ne.s32.totalorder %s280, %s281
      %p295 = scmp.eq.s32.totalorder %s38, 1
      %p296 = por %p294, %p295
      %p298 = scmp.ne.s32.totalorder %s281, %s297
      %p299 = scmp.eq.s32.totalorder %s38, 0
      %p300 = por %p298, %p299
      %s301 = ssub.s32 %s32, %s39
      %p302 = scmp.eq.s32.totalorder %s301, 0
      %s304 = sadd.s32 %s303, 1
      %s305 = scalar_select %p302, %s303, %s304
      %p308 = pneg %p302
      %p309 = scmp.eq.s32.totalorder %s32, 1
      %p310 = por %p308, %p309
      %p311 = scmp.ne.s32.totalorder %s303, %s306
      %p312 = scmp.eq.s32.totalorder %s32, 0
      %p313 = por %p311, %p312
      %p314 = scmp.ne.s32.totalorder %s303, %s306
      %p315 = scmp.eq.s32.totalorder %s37, 1
      %p316 = por %p314, %p315
      %p317 = scmp.ne.s32.totalorder %s306, %s307
      %p318 = scmp.eq.s32.totalorder %s37, 0
      %p319 = por %p317, %p318
      %p320 = scmp.ne.s32.totalorder %s306, %s307
      %p321 = scmp.eq.s32.totalorder %s38, 1
      %p322 = por %p320, %p321
      %p324 = scmp.ne.s32.totalorder %s307, %s323
      %p325 = scmp.eq.s32.totalorder %s38, 0
      %p326 = por %p324, %p325
      %s327 = ssub.s32 %s32, %s39
      %p328 = scmp.eq.s32.totalorder %s327, 0
      %s330 = sadd.s32 %s329, 1
      %s331 = scalar_select %p328, %s329, %s330
      %p334 = pneg %p328
      %p335 = scmp.eq.s32.totalorder %s32, 1
      %p336 = por %p334, %p335
      %p337 = scmp.ne.s32.totalorder %s329, %s332
      %p338 = scmp.eq.s32.totalorder %s32, 0
      %p339 = por %p337, %p338
      %p340 = scmp.ne.s32.totalorder %s329, %s332
      %p341 = scmp.eq.s32.totalorder %s37, 1
      %p342 = por %p340, %p341
      %p343 = scmp.ne.s32.totalorder %s332, %s333
      %p344 = scmp.eq.s32.totalorder %s37, 0
      %p345 = por %p343, %p344
      %p346 = scmp.ne.s32.totalorder %s332, %s333
      %p347 = scmp.eq.s32.totalorder %s38, 1
      %p348 = por %p346, %p347
      %p350 = scmp.ne.s32.totalorder %s333, %s349
      %p351 = scmp.eq.s32.totalorder %s38, 0
      %p352 = por %p350, %p351
      %s354 = sadd.s32 %s353, 1
      %p357 = scmp.eq.s32.totalorder %s32, 1
      %p358 = scmp.ne.s32.totalorder %s353, %s355
      %p359 = scmp.eq.s32.totalorder %s32, 0
      %p360 = por %p358, %p359
      %p361 = scmp.ne.s32.totalorder %s353, %s355
      %p362 = scmp.eq.s32.totalorder %s37, 1
      %p363 = por %p361, %p362
      %p364 = scmp.ne.s32.totalorder %s355, %s356
      %p365 = scmp.eq.s32.totalorder %s37, 0
      %p366 = por %p364, %p365
      %p367 = scmp.ne.s32.totalorder %s355, %s356
      %p368 = scmp.eq.s32.totalorder %s38, 1
      %p369 = por %p367, %p368
      %p371 = scmp.ne.s32.totalorder %s356, %s370
      %p372 = scmp.eq.s32.totalorder %s38, 0
      %p373 = por %p371, %p372
      %s375 = sadd.s32 %s374, 1
      %p378 = scmp.eq.s32.totalorder %s32, 1
      %p379 = scmp.ne.s32.totalorder %s374, %s376
      %p380 = scmp.eq.s32.totalorder %s32, 0
      %p381 = por %p379, %p380
      %p382 = scmp.ne.s32.totalorder %s374, %s376
      %p383 = scmp.eq.s32.totalorder %s37, 1
      %p384 = por %p382, %p383
      %p385 = scmp.ne.s32.totalorder %s376, %s377
      %p386 = scmp.eq.s32.totalorder %s37, 0
      %p387 = por %p385, %p386
      %p388 = scmp.ne.s32.totalorder %s376, %s377
      %p389 = scmp.eq.s32.totalorder %s38, 1
      %p390 = por %p388, %p389
      %p392 = scmp.ne.s32.totalorder %s377, %s391
      %p393 = scmp.eq.s32.totalorder %s38, 0
      %p394 = por %p392, %p393
      %s396 = sadd.s32 %s395, 1
      %p399 = scmp.eq.s32.totalorder %s32, 1
      %p400 = scmp.ne.s32.totalorder %s395, %s397
      %p401 = scmp.eq.s32.totalorder %s32, 0
      %p402 = por %p400, %p401
      %p403 = scmp.ne.s32.totalorder %s395, %s397
      %p404 = scmp.eq.s32.totalorder %s37, 1
      %p405 = por %p403, %p404
      %p406 = scmp.ne.s32.totalorder %s397, %s398
      %p407 = scmp.eq.s32.totalorder %s37, 0
      %p408 = por %p406, %p407
      %p409 = scmp.ne.s32.totalorder %s397, %s398
      %p410 = scmp.eq.s32.totalorder %s38, 1
      %p411 = por %p409, %p410
      %p413 = scmp.ne.s32.totalorder %s398, %s412
      %p414 = scmp.eq.s32.totalorder %s38, 0
      %p415 = por %p413, %p414
      %s416 = ssub.s32 %s32, %s39
      %p417 = scmp.eq.s32.totalorder %s416, 0
      %s419 = sadd.s32 %s418, 1
      %s420 = scalar_select %p417, %s418, %s419
      %p423 = pneg %p417
      %p424 = scmp.eq.s32.totalorder %s32, 1
      %p425 = por %p423, %p424
      %p426 = scmp.ne.s32.totalorder %s418, %s421
      %p427 = scmp.eq.s32.totalorder %s32, 0
      %p428 = por %p426, %p427
      %p429 = scmp.ne.s32.totalorder %s418, %s421
      %p430 = scmp.eq.s32.totalorder %s37, 1
      %p431 = por %p429, %p430
      %p432 = scmp.ne.s32.totalorder %s421, %s422
      %p433 = scmp.eq.s32.totalorder %s37, 0
      %p434 = por %p432, %p433
      %p435 = scmp.ne.s32.totalorder %s421, %s422
      %p436 = scmp.eq.s32.totalorder %s38, 1
      %p437 = por %p435, %p436
      %p439 = scmp.ne.s32.totalorder %s422, %s438
      %p440 = scmp.eq.s32.totalorder %s38, 0
      %p441 = por %p439, %p440
      %p442 = scmp.le.s32.totalorder 1, %s32
      %p443 = scmp.lt.s32.totalorder %s32, 3
      %p444 = pnand %p442, %p443
      %p445 = pneg %p444
      // Predicated region
      $region9: #{llm_forward.1} parent=5 // pred_check
        _
      $region10: #{llm_forward.1} parent=5 // pred_check_branch
        %447 = sbr.rel (%p444) target = $region12
      $region11: #{llm_forward.1} parent=5 // pred_region
        %s448 = ssub.s32 %s32, 1
        // Predicated region
        $region13: #{llm_forward.1} parent=11 // pred_check
          %p449 = pneg %p53
        $region14: #{llm_forward.1} parent=11 // pred_check_branch
          %451 = sbr.rel (%p449) target = $region16
        $region15: #{llm_forward.1} parent=11 // pred_region
          _
        $region16: #{llm_forward.1} parent=11 // pred_fallthru
          _
        // Predicated region
        $region17: #{llm_forward.1} parent=11 // pred_check
          %p452 = pneg %p74
        $region18: #{llm_forward.1} parent=11 // pred_check_branch
          %454 = sbr.rel (%p452) target = $region20
        $region19: #{llm_forward.1} parent=11 // pred_region
          _
        $region20: #{llm_forward.1} parent=11 // pred_fallthru
          _
        // Predicated region
        $region21: #{llm_forward.1} parent=11 // pred_check
          %p455 = pneg %p95
        $region22: #{llm_forward.1} parent=11 // pred_check_branch
          %457 = sbr.rel (%p455) target = $region24
        $region23: #{llm_forward.1} parent=11 // pred_region
          _
        $region24: #{llm_forward.1} parent=11 // pred_fallthru
          _
        // Predicated region
        $region25: #{llm_forward.1} parent=11 // pred_check
          %p458 = pneg %p116
        $region26: #{llm_forward.1} parent=11 // pred_check_branch
          %460 = sbr.rel (%p458) target = $region28
        $region27: #{llm_forward.1} parent=11 // pred_region
          _
        $region28: #{llm_forward.1} parent=11 // pred_fallthru
          _
        // Predicated region
        $region29: #{llm_forward.1} parent=11 // pred_check
          %p461 = pneg %p137
        $region30: #{llm_forward.1} parent=11 // pred_check_branch
          %463 = sbr.rel (%p461) target = $region32
        $region31: #{llm_forward.1} parent=11 // pred_region
          _
        $region32: #{llm_forward.1} parent=11 // pred_fallthru
          _
        // Predicated region
        $region33: #{llm_forward.1} parent=11 // pred_check
          %p464 = pneg %p366
        $region34: #{llm_forward.1} parent=11 // pred_check_branch
          %466 = sbr.rel (%p464) target = $region36
        $region35: #{llm_forward.1} parent=11 // pred_region
          _
        $region36: #{llm_forward.1} parent=11 // pred_fallthru
          _
        // Predicated region
        $region37: #{llm_forward.1} parent=11 // pred_check
          %p467 = pneg %p387
        $region38: #{llm_forward.1} parent=11 // pred_check_branch
          %469 = sbr.rel (%p467) target = $region40
        $region39: #{llm_forward.1} parent=11 // pred_region
          %471 = vsyncadd [#allocation9], 0
          %s472 = sshll.u32 %s14, 4
          %s473 = int_to_ptr.hbm [resolvable:$true] %s472
          %s474 = sshll.u32 [#allocation10], 4
          %s475 = int_to_ptr.vmem [resolvable:$true] %s474
          %480 = dma.hbm_to_vmem [thread:$0]  %s473, 8192, %s475, [#allocation9], 256, 256, 16
        $region40: #{llm_forward.1} parent=11 // pred_fallthru
          _
      $region12: #{llm_forward.1} parent=5 // pred_fallthru
        _
      %p481 = scmp.lt.s32.totalorder %s32, 2
      // Predicated region
      $region41: #{llm_forward.1} parent=5 // pred_check
        %p482 = pneg %p481
      $region42: #{llm_forward.1} parent=5 // pred_check_branch
        %484 = sbr.rel (%p482) target = $region44
      $region43: #{llm_forward.1} parent=5 // pred_region
        // Predicated region
        $region45: #{llm_forward.1} parent=43 // pred_check
          %p485 = pneg %p157
        $region46: #{llm_forward.1} parent=43 // pred_check_branch
          %487 = sbr.rel (%p485) target = $region48
        $region47: #{llm_forward.1} parent=43 // pred_region
          %p488 = scmp.lt.s32.totalorder %s32, 1
          %s489 = scalar_select %p488, %s32, 1
          %s490 = smul.addr %s489, 2
          %s491 = scalar_lea.vmem %s5, %s490
        $region48: #{llm_forward.1} parent=43 // pred_fallthru
          _
        // Predicated region
        $region49: #{llm_forward.1} parent=43 // pred_check
          %p492 = pneg %p183
        $region50: #{llm_forward.1} parent=43 // pred_check_branch
          %494 = sbr.rel (%p492) target = $region52
        $region51: #{llm_forward.1} parent=43 // pred_region
          %s495 = sand.u32 %s173, 1
          %s496 = scalar_lea.sflag [#allocation4], %s495
          %s497 = sand.u32 %s173, 1
          %s498 = smul.addr %s497, 768
          %s499 = scalar_lea.vmem [#allocation3], %s498
          %501 = vsyncadd %s496, 0
          %s502 = smul.addr %s32, 192
          %s503 = smul.addr %s502, 4
          %s504 = scalar_lea.hbm %s6, %s503
          %s505 = sshll.u32 %s504, 4
          %s506 = int_to_ptr.hbm [resolvable:$true] %s505
          %s507 = sshll.u32 %s499, 4
          %s508 = int_to_ptr.vmem [resolvable:$true] %s507
          %513 = dma.hbm_to_vmem [thread:$0]  %s506, 12288, %s508, %s496, 384, 384, 24
        $region52: #{llm_forward.1} parent=43 // pred_fallthru
          _
        // Predicated region
        $region53: #{llm_forward.1} parent=43 // pred_check
          %p514 = pneg %p209
        $region54: #{llm_forward.1} parent=43 // pred_check_branch
          %516 = sbr.rel (%p514) target = $region56
        $region55: #{llm_forward.1} parent=43 // pred_region
          %s517 = sand.u32 %s32, 1
          %s518 = scalar_lea.sflag [#allocation6], %s517
          %s519 = sand.u32 %s199, 1
          %s520 = smul.addr %s519, 256
          %s521 = scalar_lea.vmem [#allocation5], %s520
          %523 = vsyncadd %s518, 0
          %s524 = smul.addr %s32, 64
          %s525 = smul.addr %s524, 4
          %s526 = scalar_lea.hbm %s7, %s525
          %s527 = sshll.u32 %s526, 4
          %s528 = int_to_ptr.hbm [resolvable:$true] %s527
          %s529 = sshll.u32 %s521, 4
          %s530 = int_to_ptr.vmem [resolvable:$true] %s529
          %535 = dma.hbm_to_vmem [thread:$0]  %s528, 4096, %s530, %s518, 128, 128, 8
        $region56: #{llm_forward.1} parent=43 // pred_fallthru
          _
        // Predicated region
        $region57: #{llm_forward.1} parent=43 // pred_check
          %p536 = pneg %p235
        $region58: #{llm_forward.1} parent=43 // pred_check_branch
          %538 = sbr.rel (%p536) target = $region60
        $region59: #{llm_forward.1} parent=43 // pred_region
          %p539 = scmp.lt.s32.totalorder %s32, 1
          %s540 = scalar_select %p539, %s32, 1
          %s541 = smul.addr %s540, 2
          %s542 = scalar_lea.vmem %s8, %s541
        $region60: #{llm_forward.1} parent=43 // pred_fallthru
          _
        // Predicated region
        $region61: #{llm_forward.1} parent=43 // pred_check
          %p543 = pneg %p261
        $region62: #{llm_forward.1} parent=43 // pred_check_branch
          %545 = sbr.rel (%p543) target = $region64
        $region63: #{llm_forward.1} parent=43 // pred_region
          %s546 = sand.u32 %s32, 1
          %s547 = scalar_lea.sflag [#allocation6], %s546
          %s548 = sand.u32 %s251, 1
          %s549 = smul.addr %s548, 1024
          %s550 = scalar_lea.vmem [#allocation7], %s549
          %552 = vsyncadd %s547, 0
          %s553 = smul.addr %s32, 256
          %s554 = smul.addr %s553, 4
          %s555 = scalar_lea.hbm %s9, %s554
          %s556 = sshll.u32 %s555, 4
          %s557 = int_to_ptr.hbm [resolvable:$true] %s556
          %s558 = sshll.u32 %s550, 4
          %s559 = int_to_ptr.vmem [resolvable:$true] %s558
          %564 = dma.hbm_to_vmem [thread:$0]  %s557, 16384, %s559, %s547, 512, 512, 32
        $region64: #{llm_forward.1} parent=43 // pred_fallthru
          _
        // Predicated region
        $region65: #{llm_forward.1} parent=43 // pred_check
          %p565 = pneg %p287
        $region66: #{llm_forward.1} parent=43 // pred_check_branch
          %567 = sbr.rel (%p565) target = $region68
        $region67: #{llm_forward.1} parent=43 // pred_region
          %s568 = sand.u32 %s32, 1
          %s569 = scalar_lea.sflag [#allocation9], %s568
          %s570 = sand.u32 %s277, 1
          %s571 = smul.addr %s570, 512
          %s572 = scalar_lea.vmem [#allocation8], %s571
          %574 = vsyncadd %s569, 0
          %s575 = smul.addr %s32, 128
          %s576 = smul.addr %s575, 4
          %s577 = scalar_lea.hbm %s10, %s576
          %s578 = sshll.u32 %s577, 4
          %s579 = int_to_ptr.hbm [resolvable:$true] %s578
          %s580 = sshll.u32 %s572, 4
          %s581 = int_to_ptr.vmem [resolvable:$true] %s580
          %586 = dma.hbm_to_vmem [thread:$0]  %s579, 8192, %s581, %s569, 128, 128, 8
        $region68: #{llm_forward.1} parent=43 // pred_fallthru
          _
        // Predicated region
        $region69: #{llm_forward.1} parent=43 // pred_check
          %p587 = pneg %p313
        $region70: #{llm_forward.1} parent=43 // pred_check_branch
          %589 = sbr.rel (%p587) target = $region72
        $region71: #{llm_forward.1} parent=43 // pred_region
          %p590 = scmp.lt.s32.totalorder %s32, 1
          %s591 = scalar_select %p590, %s32, 1
          %s592 = smul.addr %s591, 4
          %s593 = smul.addr %s592, 8
          %s594 = scalar_lea.vmem %s11, %s593
        $region72: #{llm_forward.1} parent=43 // pred_fallthru
          _
        // Predicated region
        $region73: #{llm_forward.1} parent=43 // pred_check
          %p595 = pneg %p339
        $region74: #{llm_forward.1} parent=43 // pred_check_branch
          %597 = sbr.rel (%p595) target = $region76
        $region75: #{llm_forward.1} parent=43 // pred_region
          %p598 = scmp.lt.s32.totalorder %s32, 1
          %s599 = scalar_select %p598, %s32, 1
          %s600 = smul.addr %s599, 4
          %s601 = smul.addr %s600, 8
          %s602 = scalar_lea.vmem %s12, %s601
        $region76: #{llm_forward.1} parent=43 // pred_fallthru
          _
      $region44: #{llm_forward.1} parent=5 // pred_fallthru
        _
      %p603 = scmp.le.s32.totalorder 1, %s32
      %p604 = scmp.lt.s32.totalorder %s32, 3
      %p605 = pnand %p603, %p604
      %p606 = pneg %p605
      // Predicated region
      $region77: #{llm_forward.1} parent=5 // pred_check
        _
      $region78: #{llm_forward.1} parent=5 // pred_check_branch
        %608 = sbr.rel (%p605) target = $region80
      $region79: #{llm_forward.1} parent=5 // pred_region
        %s609 = ssub.s32 %s32, 1
        %s610 = sand.u32 %s176, 1
        %s611 = scalar_lea.sflag [#allocation4], %s610
        %s612 = sand.u32 %s176, 1
        %s613 = smul.addr %s612, 768
        %s614 = scalar_lea.vmem [#allocation3], %s613
        // Predicated region
        $region81: #{llm_forward.1} parent=79 // pred_check
          %p615 = pneg %p189
        $region82: #{llm_forward.1} parent=79 // pred_check_branch
          %617 = sbr.rel (%p615) target = $region84
        $region83: #{llm_forward.1} parent=79 // pred_region
          %619 = dma.done %s611, 12288
        $region84: #{llm_forward.1} parent=79 // pred_fallthru
          _
        %s620 = sand.u32 %s37, 1
        %s621 = scalar_lea.sflag [#allocation6], %s620
        %s622 = sand.u32 %s202, 1
        %s623 = smul.addr %s622, 256
        %s624 = scalar_lea.vmem [#allocation5], %s623
        // Predicated region
        $region85: #{llm_forward.1} parent=79 // pred_check
          %p625 = pneg %p215
        $region86: #{llm_forward.1} parent=79 // pred_check_branch
          %627 = sbr.rel (%p625) target = $region88
        $region87: #{llm_forward.1} parent=79 // pred_region
          %629 = dma.done %s621, 4096
        $region88: #{llm_forward.1} parent=79 // pred_fallthru
          _
        %s630 = sand.u32 %s37, 1
        %s631 = scalar_lea.sflag [#allocation6], %s630
        %s632 = sand.u32 %s254, 1
        %s633 = smul.addr %s632, 1024
        %s634 = scalar_lea.vmem [#allocation7], %s633
        // Predicated region
        $region89: #{llm_forward.1} parent=79 // pred_check
          %p635 = pneg %p267
        $region90: #{llm_forward.1} parent=79 // pred_check_branch
          %637 = sbr.rel (%p635) target = $region92
        $region91: #{llm_forward.1} parent=79 // pred_region
          %639 = dma.done %s631, 16384
        $region92: #{llm_forward.1} parent=79 // pred_fallthru
          _
        %s640 = sand.u32 %s37, 1
        %s641 = scalar_lea.sflag [#allocation9], %s640
        %s642 = sand.u32 %s280, 1
        %s643 = smul.addr %s642, 512
        %s644 = scalar_lea.vmem [#allocation8], %s643
        // Predicated region
        $region93: #{llm_forward.1} parent=79 // pred_check
          %p645 = pneg %p293
        $region94: #{llm_forward.1} parent=79 // pred_check_branch
          %647 = sbr.rel (%p645) target = $region96
        $region95: #{llm_forward.1} parent=79 // pred_region
          %649 = dma.done %s641, 8192
        $region96: #{llm_forward.1} parent=79 // pred_fallthru
          _
        // Predicated region
        $region97: #{llm_forward.1} parent=79 // pred_check
          %p650 = pneg %p387
        $region98: #{llm_forward.1} parent=79 // pred_check_branch
          %652 = sbr.rel (%p650) target = $region100
        $region99: #{llm_forward.1} parent=79 // pred_region
          %654 = dma.done [#allocation9], 8192
        $region100: #{llm_forward.1} parent=79 // pred_fallthru
          _
        %p655 = pneg %p53
        %p656 = pneg %p50
        %p657 = pneg %p74
        %p658 = pneg %p71
        %p659 = pneg %p95
        %p660 = pneg %p92
        %p661 = pneg %p116
        %p662 = pneg %p113
        %p663 = pneg %p137
        %p664 = pneg %p134
        %p665 = scmp.lt.s32.totalorder %s37, 1
        %s666 = scalar_select %p665, %s37, 1
        %s667 = smul.addr %s666, 2
        %s668 = scalar_lea.vmem %s5, %s667
        %p669 = pneg %p163
        %p670 = pneg %p160
        %s671 = sand.u32 %s176, 1
        %s672 = scalar_lea.sflag [#allocation4], %s671
        %s673 = sand.u32 %s176, 1
        %s674 = smul.addr %s673, 768
        %s675 = scalar_lea.vmem [#allocation3], %s674
        %p676 = pneg %p189
        %p677 = pneg %p186
        %s678 = sand.u32 %s37, 1
        %s679 = scalar_lea.sflag [#allocation6], %s678
        %s680 = sand.u32 %s202, 1
        %s681 = smul.addr %s680, 256
        %s682 = scalar_lea.vmem [#allocation5], %s681
        %p683 = pneg %p215
        %p684 = pneg %p212
        %p685 = scmp.lt.s32.totalorder %s37, 1
        %s686 = scalar_select %p685, %s37, 1
        %s687 = smul.addr %s686, 2
        %s688 = scalar_lea.vmem %s8, %s687
        %p689 = pneg %p241
        %p690 = pneg %p238
        %s691 = sand.u32 %s37, 1
        %s692 = scalar_lea.sflag [#allocation6], %s691
        %s693 = sand.u32 %s254, 1
        %s694 = smul.addr %s693, 1024
        %s695 = scalar_lea.vmem [#allocation7], %s694
        %p696 = pneg %p267
        %p697 = pneg %p264
        %s698 = sand.u32 %s37, 1
        %s699 = scalar_lea.sflag [#allocation9], %s698
        %s700 = sand.u32 %s280, 1
        %s701 = smul.addr %s700, 512
        %s702 = scalar_lea.vmem [#allocation8], %s701
        %p703 = pneg %p293
        %p704 = pneg %p290
        %p705 = scmp.lt.s32.totalorder %s37, 1
        %s706 = scalar_select %p705, %s37, 1
        %s707 = smul.addr %s706, 4
        %s708 = smul.addr %s707, 8
        %s709 = scalar_lea.vmem %s11, %s708
        %p710 = pneg %p319
        %p711 = pneg %p316
        %p712 = scmp.lt.s32.totalorder %s37, 1
        %s713 = scalar_select %p712, %s37, 1
        %s714 = smul.addr %s713, 4
        %s715 = smul.addr %s714, 8
        %s716 = scalar_lea.vmem %s12, %s715
        %p717 = pneg %p345
        %p718 = pneg %p342
        %p719 = pneg %p366
        %p720 = pneg %p363
        %p721 = pneg %p387
        %p722 = pneg %p384
        %p723 = pneg %p408
        %p724 = pneg %p405
        %p725 = pneg %p434
        %p726 = pneg %p431
        %p727 = scmp.lt.s32.totalorder %s37, 1
        %s728 = scalar_select %p727, %s37, 1
        %s729 = smul.addr %s728, 16
        %s730 = smul.addr %s729, 8
        %s731 = scalar_lea.vmem %s16, %s730
        %p732 = scmp.lt.s32.totalorder %s37, 1
        %s733 = scalar_select %p732, %s37, 1
        %s734 = smul.addr %s733, 2
        %s735 = scalar_lea.vmem %s5, %s734
        %p736 = scmp.lt.s32.totalorder %s37, 1
        %s737 = scalar_select %p736, %s37, 1
        %s738 = smul.addr %s737, 2
        %s739 = scalar_lea.vmem %s8, %s738
        %p740 = scmp.lt.s32.totalorder %s37, 1
        %s741 = scalar_select %p740, %s37, 1
        %s742 = smul.addr %s741, 4
        %s743 = smul.addr %s742, 8
        %s744 = scalar_lea.vmem %s11, %s743
        %p745 = scmp.lt.s32.totalorder %s37, 1
        %s746 = scalar_select %p745, %s37, 1
        %s747 = smul.addr %s746, 4
        %s748 = smul.addr %s747, 8
        %s749 = scalar_lea.vmem %s12, %s748
        %p750 = scmp.lt.s32.totalorder %s37, 1
        %s751 = scalar_select %p750, %s37, 1
        %s752 = smul.addr %s751, 16
        %s753 = smul.addr %s752, 8
        %s754 = scalar_lea.vmem %s16, %s753
        %p756 = scmp.eq.s32.totalorder %s37, 0
        // Predicated region
        $region101: #{llm_forward.1} parent=79 // pred_check
          %p757 = pneg %p756
        $region102: #{llm_forward.1} parent=79 // pred_check_branch
          %759 = sbr.rel (%p757) target = $region104
        $region103: #{llm_forward.1} parent=79 // pred_region
          %v760 = vld [vmem:[%s0] sm:$0xff]
          %v761 = vld [vmem:[%s0 + $0x8] sm:$0xff]
          %v762 = vld [vmem:[%s0 + $0x10] sm:$0xff]
          %v763 = vld [vmem:[%s0 + $0x18] sm:$0xff]
          %764 = vst [vmem:[#allocation2] sm:$0xff] %v760
          %765 = vst [vmem:[#allocation2 + $0x8] sm:$0xff] %v761
          %766 = vst [vmem:[#allocation2 + $0x10] sm:$0xff] %v762
          %767 = vst [vmem:[#allocation2 + $0x18] sm:$0xff] %v763
        $region104: #{llm_forward.1} parent=79 // pred_fallthru
          _
        %v768 = vld [vmem:[#allocation2] sm:$0xff]
        %v769 = vld [vmem:[#allocation2 + $0x8] sm:$0xff]
        %v770 = vld [vmem:[#allocation2 + $0x10] sm:$0xff]
        %v771 = vld [vmem:[#allocation2 + $0x18] sm:$0xff]
        %v772 = vld [vmem:[%s735] sm:$0x3]
        %v773 = vmul.f32 %v768, %v768
        %v774 = vmul.f32 %v769, %v769
        %v775 = vmul.f32 %v770, %v770
        %v776 = vmul.f32 %v771, %v771
        %v777 = vadd.f32 %v773, %v774
        %778 = vadd.xlane.f32.xlu0 %v777
        %v779 = vpop.xlane.xlu0 %778
        %v780 = vadd.f32 %v775, %v776
        %781 = vadd.xlane.f32.xlu0 %v780
        %v782 = vpop.xlane.xlu0 %781
        %v783 = vrcp.pop 256.0
        %v784 = vmul.f32 256.0, %v783
        %v785 = vsub.f32 1.0, %v784
        %v786 = vmul.f32 %v783, %v785
        %v787 = vadd.f32 %v783, %v786
        %vm788 = vweird.f32 %v783
        %v789 = vsel %vm788, %v783, %v787
        %v790 = vmul.f32 %v779, %v789
        %v791 = vmul.f32 %v782, %v789
        %v792 = vadd.f32 %v790, 1e-06
        %v793 = vadd.f32 %v791, 1e-06
        %v794 = vrsqrt.pop %v792
        %v795 = vmul.f32 %v794, %v792
        %v796 = vmul.f32 %v795, %v794
        %v797 = vmul.f32 0.5, %v796
        %v798 = vsub.f32 1.5, %v797
        %v799 = vmul.f32 %v794, %v798
        %vm800 = vweird.f32 %v792
        %vm801 = vweird.f32 %v794
        %vm802 = vmor %vm800, %vm801
        %v803 = vsel %vm802, %v794, %v799
        %v804 = vrsqrt.pop %v793
        %v805 = vmul.f32 %v804, %v793
        %v806 = vmul.f32 %v805, %v804
        %v807 = vmul.f32 0.5, %v806
        %v808 = vsub.f32 1.5, %v807
        %v809 = vmul.f32 %v804, %v808
        %vm810 = vweird.f32 %v793
        %vm811 = vweird.f32 %v804
        %vm812 = vmor %vm810, %vm811
        %v813 = vsel %vm812, %v804, %v809
        %v814 = vmul.f32 %v768, %v803
        %v815 = vmul.f32 %v769, %v803
        %v816 = vmul.f32 %v770, %v813
        %v817 = vmul.f32 %v771, %v813
        %v819 = vperm.slane %v772, 0
        %v820 = vperm.slane %v772, 1
        %v823 = vmul.f32 %v814, %v819
        %v824 = vmul.f32 %v815, %v820
        %v825 = vmul.f32 %v816, %v819
        %v826 = vmul.f32 %v817, %v820
        %v827 = vpack.c.bf16 %v825, %v823
        %v828 = vpack.c.bf16 %v826, %v824
        %v829 = vld [vmem:[%s614] sm:$0xff]
        %v830 = vld [vmem:[%s614 + $0x8] sm:$0xff]
        %v831 = vld [vmem:[%s614 + $0x10] sm:$0xff]
        %v832 = vld [vmem:[%s614 + $0x18] sm:$0xff]
        %v833 = vld [vmem:[%s614 + $0x20] sm:$0xff]
        %v834 = vld [vmem:[%s614 + $0x28] sm:$0xff]
        %v835 = vld [vmem:[%s614 + $0x30] sm:$0xff]
        %v836 = vld [vmem:[%s614 + $0x38] sm:$0xff]
        %v837 = vld [vmem:[%s614 + $0x40] sm:$0xff]
        %v838 = vld [vmem:[%s614 + $0x48] sm:$0xff]
        %v839 = vld [vmem:[%s614 + $0x50] sm:$0xff]
        %v840 = vld [vmem:[%s614 + $0x58] sm:$0xff]
        %v841 = vld [vmem:[%s614 + $0x60] sm:$0xff]
        %v842 = vld [vmem:[%s614 + $0x68] sm:$0xff]
        %v843 = vld [vmem:[%s614 + $0x70] sm:$0xff]
        %v844 = vld [vmem:[%s614 + $0x78] sm:$0xff]
        %v845 = vld [vmem:[%s614 + $0x80] sm:$0xff]
        %v846 = vld [vmem:[%s614 + $0x88] sm:$0xff]
        %v847 = vld [vmem:[%s614 + $0x90] sm:$0xff]
        %v848 = vld [vmem:[%s614 + $0x98] sm:$0xff]
        %v849 = vld [vmem:[%s614 + $0xa0] sm:$0xff]
        %v850 = vld [vmem:[%s614 + $0xa8] sm:$0xff]
        %v851 = vld [vmem:[%s614 + $0xb0] sm:$0xff]
        %v852 = vld [vmem:[%s614 + $0xb8] sm:$0xff]
        %v853 = vld [vmem:[%s614 + $0xc0] sm:$0xff]
        %v854 = vld [vmem:[%s614 + $0xc8] sm:$0xff]
        %v855 = vld [vmem:[%s614 + $0xd0] sm:$0xff]
        %v856 = vld [vmem:[%s614 + $0xd8] sm:$0xff]
        %v857 = vld [vmem:[%s614 + $0xe0] sm:$0xff]
        %v858 = vld [vmem:[%s614 + $0xe8] sm:$0xff]
        %v859 = vld [vmem:[%s614 + $0xf0] sm:$0xff]
        %v860 = vld [vmem:[%s614 + $0xf8] sm:$0xff]
        %v861 = vld [vmem:[%s614 + $0x100] sm:$0xff]
        %v862 = vld [vmem:[%s614 + $0x108] sm:$0xff]
        %v863 = vld [vmem:[%s614 + $0x110] sm:$0xff]
        %v864 = vld [vmem:[%s614 + $0x118] sm:$0xff]
        %v865 = vld [vmem:[%s614 + $0x120] sm:$0xff]
        %v866 = vld [vmem:[%s614 + $0x128] sm:$0xff]
        %v867 = vld [vmem:[%s614 + $0x130] sm:$0xff]
        %v868 = vld [vmem:[%s614 + $0x138] sm:$0xff]
        %v869 = vld [vmem:[%s614 + $0x140] sm:$0xff]
        %v870 = vld [vmem:[%s614 + $0x148] sm:$0xff]
        %v871 = vld [vmem:[%s614 + $0x150] sm:$0xff]
        %v872 = vld [vmem:[%s614 + $0x158] sm:$0xff]
        %v873 = vld [vmem:[%s614 + $0x160] sm:$0xff]
        %v874 = vld [vmem:[%s614 + $0x168] sm:$0xff]
        %v875 = vld [vmem:[%s614 + $0x170] sm:$0xff]
        %v876 = vld [vmem:[%s614 + $0x178] sm:$0xff]
        %v877 = vld [vmem:[%s614 + $0x180] sm:$0xff]
        %v878 = vld [vmem:[%s614 + $0x188] sm:$0xff]
        %v879 = vld [vmem:[%s614 + $0x190] sm:$0xff]
        %v880 = vld [vmem:[%s614 + $0x198] sm:$0xff]
        %v881 = vld [vmem:[%s614 + $0x1a0] sm:$0xff]
        %v882 = vld [vmem:[%s614 + $0x1a8] sm:$0xff]
        %v883 = vld [vmem:[%s614 + $0x1b0] sm:$0xff]
        %v884 = vld [vmem:[%s614 + $0x1b8] sm:$0xff]
        %v885 = vld [vmem:[%s614 + $0x1c0] sm:$0xff]
        %v886 = vld [vmem:[%s614 + $0x1c8] sm:$0xff]
        %v887 = vld [vmem:[%s614 + $0x1d0] sm:$0xff]
        %v888 = vld [vmem:[%s614 + $0x1d8] sm:$0xff]
        %v889 = vld [vmem:[%s614 + $0x1e0] sm:$0xff]
        %v890 = vld [vmem:[%s614 + $0x1e8] sm:$0xff]
        %v891 = vld [vmem:[%s614 + $0x1f0] sm:$0xff]
        %v892 = vld [vmem:[%s614 + $0x1f8] sm:$0xff]
        %v893 = vld [vmem:[%s614 + $0x200] sm:$0xff]
        %v894 = vld [vmem:[%s614 + $0x208] sm:$0xff]
        %v895 = vld [vmem:[%s614 + $0x210] sm:$0xff]
        %v896 = vld [vmem:[%s614 + $0x218] sm:$0xff]
        %v897 = vld [vmem:[%s614 + $0x220] sm:$0xff]
        %v898 = vld [vmem:[%s614 + $0x228] sm:$0xff]
        %v899 = vld [vmem:[%s614 + $0x230] sm:$0xff]
        %v900 = vld [vmem:[%s614 + $0x238] sm:$0xff]
        %v901 = vld [vmem:[%s614 + $0x240] sm:$0xff]
        %v902 = vld [vmem:[%s614 + $0x248] sm:$0xff]
        %v903 = vld [vmem:[%s614 + $0x250] sm:$0xff]
        %v904 = vld [vmem:[%s614 + $0x258] sm:$0xff]
        %v905 = vld [vmem:[%s614 + $0x260] sm:$0xff]
        %v906 = vld [vmem:[%s614 + $0x268] sm:$0xff]
        %v907 = vld [vmem:[%s614 + $0x270] sm:$0xff]
        %v908 = vld [vmem:[%s614 + $0x278] sm:$0xff]
        %v909 = vld [vmem:[%s614 + $0x280] sm:$0xff]
        %v910 = vld [vmem:[%s614 + $0x288] sm:$0xff]
        %v911 = vld [vmem:[%s614 + $0x290] sm:$0xff]
        %v912 = vld [vmem:[%s614 + $0x298] sm:$0xff]
        %v913 = vld [vmem:[%s614 + $0x2a0] sm:$0xff]
        %v914 = vld [vmem:[%s614 + $0x2a8] sm:$0xff]
        %v915 = vld [vmem:[%s614 + $0x2b0] sm:$0xff]
        %v916 = vld [vmem:[%s614 + $0x2b8] sm:$0xff]
        %v917 = vld [vmem:[%s614 + $0x2c0] sm:$0xff]
        %v918 = vld [vmem:[%s614 + $0x2c8] sm:$0xff]
        %v919 = vld [vmem:[%s614 + $0x2d0] sm:$0xff]
        %v920 = vld [vmem:[%s614 + $0x2d8] sm:$0xff]
        %v921 = vld [vmem:[%s614 + $0x2e0] sm:$0xff]
        %v922 = vld [vmem:[%s614 + $0x2e8] sm:$0xff]
        %v923 = vld [vmem:[%s614 + $0x2f0] sm:$0xff]
        %v924 = vld [vmem:[%s614 + $0x2f8] sm:$0xff]
        %v1021 = vunpack.c.l.b16 %v829
        %v1022 = vunpack.c.h.b16 %v829
        %v1023 = vunpack.c.l.b16 %v830
        %v1024 = vunpack.c.h.b16 %v830
        %v1025 = vunpack.c.l.b16 %v831
        %v1026 = vunpack.c.h.b16 %v831
        %v1027 = vunpack.c.l.b16 %v832
        %v1028 = vunpack.c.h.b16 %v832
        %v1029 = vunpack.c.l.b16 %v833
        %v1030 = vunpack.c.h.b16 %v833
        %v1031 = vunpack.c.l.b16 %v834
        %v1032 = vunpack.c.h.b16 %v834
        %v1033 = vunpack.c.l.b16 %v835
        %v1034 = vunpack.c.h.b16 %v835
        %v1035 = vunpack.c.l.b16 %v836
        %v1036 = vunpack.c.h.b16 %v836
        %v1037 = vunpack.c.l.b16 %v837
        %v1038 = vunpack.c.h.b16 %v837
        %v1039 = vunpack.c.l.b16 %v838
        %v1040 = vunpack.c.h.b16 %v838
        %v1041 = vunpack.c.l.b16 %v839
        %v1042 = vunpack.c.h.b16 %v839
        %v1043 = vunpack.c.l.b16 %v840
        %v1044 = vunpack.c.h.b16 %v840
        %v1045 = vunpack.c.l.b16 %v841
        %v1046 = vunpack.c.h.b16 %v841
        %v1047 = vunpack.c.l.b16 %v842
        %v1048 = vunpack.c.h.b16 %v842
        %v1049 = vunpack.c.l.b16 %v843
        %v1050 = vunpack.c.h.b16 %v843
        %v1051 = vunpack.c.l.b16 %v844
        %v1052 = vunpack.c.h.b16 %v844
        %v1053 = vunpack.c.l.b16 %v845
        %v1054 = vunpack.c.h.b16 %v845
        %v1055 = vunpack.c.l.b16 %v846
        %v1056 = vunpack.c.h.b16 %v846
        %v1057 = vunpack.c.l.b16 %v847
        %v1058 = vunpack.c.h.b16 %v847
        %v1059 = vunpack.c.l.b16 %v848
        %v1060 = vunpack.c.h.b16 %v848
        %v1061 = vunpack.c.l.b16 %v849
        %v1062 = vunpack.c.h.b16 %v849
        %v1063 = vunpack.c.l.b16 %v850
        %v1064 = vunpack.c.h.b16 %v850
        %v1065 = vunpack.c.l.b16 %v851
        %v1066 = vunpack.c.h.b16 %v851
        %v1067 = vunpack.c.l.b16 %v852
        %v1068 = vunpack.c.h.b16 %v852
        %v1069 = vunpack.c.l.b16 %v853
        %v1070 = vunpack.c.h.b16 %v853
        %v1071 = vunpack.c.l.b16 %v854
        %v1072 = vunpack.c.h.b16 %v854
        %v1073 = vunpack.c.l.b16 %v855
        %v1074 = vunpack.c.h.b16 %v855
        %v1075 = vunpack.c.l.b16 %v856
        %v1076 = vunpack.c.h.b16 %v856
        %v1077 = vunpack.c.l.b16 %v857
        %v1078 = vunpack.c.h.b16 %v857
        %v1079 = vunpack.c.l.b16 %v858
        %v1080 = vunpack.c.h.b16 %v858
        %v1081 = vunpack.c.l.b16 %v859
        %v1082 = vunpack.c.h.b16 %v859
        %v1083 = vunpack.c.l.b16 %v860
        %v1084 = vunpack.c.h.b16 %v860
        %v1085 = vunpack.c.l.b16 %v861
        %v1086 = vunpack.c.h.b16 %v861
        %v1087 = vunpack.c.l.b16 %v862
        %v1088 = vunpack.c.h.b16 %v862
        %v1089 = vunpack.c.l.b16 %v863
        %v1090 = vunpack.c.h.b16 %v863
        %v1091 = vunpack.c.l.b16 %v864
        %v1092 = vunpack.c.h.b16 %v864
        %v1093 = vunpack.c.l.b16 %v865
        %v1094 = vunpack.c.h.b16 %v865
        %v1095 = vunpack.c.l.b16 %v866
        %v1096 = vunpack.c.h.b16 %v866
        %v1097 = vunpack.c.l.b16 %v867
        %v1098 = vunpack.c.h.b16 %v867
        %v1099 = vunpack.c.l.b16 %v868
        %v1100 = vunpack.c.h.b16 %v868
        %v1101 = vunpack.c.l.b16 %v869
        %v1102 = vunpack.c.h.b16 %v869
        %v1103 = vunpack.c.l.b16 %v870
        %v1104 = vunpack.c.h.b16 %v870
        %v1105 = vunpack.c.l.b16 %v871
        %v1106 = vunpack.c.h.b16 %v871
        %v1107 = vunpack.c.l.b16 %v872
        %v1108 = vunpack.c.h.b16 %v872
        %v1109 = vunpack.c.l.b16 %v873
        %v1110 = vunpack.c.h.b16 %v873
        %v1111 = vunpack.c.l.b16 %v874
        %v1112 = vunpack.c.h.b16 %v874
        %v1113 = vunpack.c.l.b16 %v875
        %v1114 = vunpack.c.h.b16 %v875
        %v1115 = vunpack.c.l.b16 %v876
        %v1116 = vunpack.c.h.b16 %v876
        %v1117 = vunpack.c.l.b16 %v877
        %v1118 = vunpack.c.h.b16 %v877
        %v1119 = vunpack.c.l.b16 %v878
        %v1120 = vunpack.c.h.b16 %v878
        %v1121 = vunpack.c.l.b16 %v879
        %v1122 = vunpack.c.h.b16 %v879
        %v1123 = vunpack.c.l.b16 %v880
        %v1124 = vunpack.c.h.b16 %v880
        %v1125 = vunpack.c.l.b16 %v881
        %v1126 = vunpack.c.h.b16 %v881
        %v1127 = vunpack.c.l.b16 %v882
        %v1128 = vunpack.c.h.b16 %v882
        %v1129 = vunpack.c.l.b16 %v883
        %v1130 = vunpack.c.h.b16 %v883
        %v1131 = vunpack.c.l.b16 %v884
        %v1132 = vunpack.c.h.b16 %v884
        %v1133 = vunpack.c.l.b16 %v885
        %v1134 = vunpack.c.h.b16 %v885
        %v1135 = vunpack.c.l.b16 %v886
        %v1136 = vunpack.c.h.b16 %v886
        %v1137 = vunpack.c.l.b16 %v887
        %v1138 = vunpack.c.h.b16 %v887
        %v1139 = vunpack.c.l.b16 %v888
        %v1140 = vunpack.c.h.b16 %v888
        %v1141 = vunpack.c.l.b16 %v889
        %v1142 = vunpack.c.h.b16 %v889
        %v1143 = vunpack.c.l.b16 %v890
        %v1144 = vunpack.c.h.b16 %v890
        %v1145 = vunpack.c.l.b16 %v891
        %v1146 = vunpack.c.h.b16 %v891
        %v1147 = vunpack.c.l.b16 %v892
        %v1148 = vunpack.c.h.b16 %v892
        %v1149 = vunpack.c.l.b16 %v893
        %v1150 = vunpack.c.h.b16 %v893
        %v1151 = vunpack.c.l.b16 %v894
        %v1152 = vunpack.c.h.b16 %v894
        %v1153 = vunpack.c.l.b16 %v895
        %v1154 = vunpack.c.h.b16 %v895
        %v1155 = vunpack.c.l.b16 %v896
        %v1156 = vunpack.c.h.b16 %v896
        %v1157 = vunpack.c.l.b16 %v897
        %v1158 = vunpack.c.h.b16 %v897
        %v1159 = vunpack.c.l.b16 %v898
        %v1160 = vunpack.c.h.b16 %v898
        %v1161 = vunpack.c.l.b16 %v899
        %v1162 = vunpack.c.h.b16 %v899
        %v1163 = vunpack.c.l.b16 %v900
        %v1164 = vunpack.c.h.b16 %v900
        %v1165 = vunpack.c.l.b16 %v901
        %v1166 = vunpack.c.h.b16 %v901
        %v1167 = vunpack.c.l.b16 %v902
        %v1168 = vunpack.c.h.b16 %v902
        %v1169 = vunpack.c.l.b16 %v903
        %v1170 = vunpack.c.h.b16 %v903
        %v1171 = vunpack.c.l.b16 %v904
        %v1172 = vunpack.c.h.b16 %v904
        %v1173 = vunpack.c.l.b16 %v905
        %v1174 = vunpack.c.h.b16 %v905
        %v1175 = vunpack.c.l.b16 %v906
        %v1176 = vunpack.c.h.b16 %v906
        %v1177 = vunpack.c.l.b16 %v907
        %v1178 = vunpack.c.h.b16 %v907
        %v1179 = vunpack.c.l.b16 %v908
        %v1180 = vunpack.c.h.b16 %v908
        %v1181 = vunpack.c.l.b16 %v909
        %v1182 = vunpack.c.h.b16 %v909
        %v1183 = vunpack.c.l.b16 %v910
        %v1184 = vunpack.c.h.b16 %v910
        %v1185 = vunpack.c.l.b16 %v911
        %v1186 = vunpack.c.h.b16 %v911
        %v1187 = vunpack.c.l.b16 %v912
        %v1188 = vunpack.c.h.b16 %v912
        %v1189 = vunpack.c.l.b16 %v913
        %v1190 = vunpack.c.h.b16 %v913
        %v1191 = vunpack.c.l.b16 %v914
        %v1192 = vunpack.c.h.b16 %v914
        %v1193 = vunpack.c.l.b16 %v915
        %v1194 = vunpack.c.h.b16 %v915
        %v1195 = vunpack.c.l.b16 %v916
        %v1196 = vunpack.c.h.b16 %v916
        %v1197 = vunpack.c.l.b16 %v917
        %v1198 = vunpack.c.h.b16 %v917
        %v1199 = vunpack.c.l.b16 %v918
        %v1200 = vunpack.c.h.b16 %v918
        %v1201 = vunpack.c.l.b16 %v919
        %v1202 = vunpack.c.h.b16 %v919
        %v1203 = vunpack.c.l.b16 %v920
        %v1204 = vunpack.c.h.b16 %v920
        %v1205 = vunpack.c.l.b16 %v921
        %v1206 = vunpack.c.h.b16 %v921
        %v1207 = vunpack.c.l.b16 %v922
        %v1208 = vunpack.c.h.b16 %v922
        %v1209 = vunpack.c.l.b16 %v923
        %v1210 = vunpack.c.h.b16 %v923
        %v1211 = vunpack.c.l.b16 %v924
        %v1212 = vunpack.c.h.b16 %v924
        %v1213 = vpack.c.b16 %v1027, %v1021
        %v1214 = vpack.c.b16 %v1028, %v1022
        %v1215 = vpack.c.b16 %v1029, %v1023
        %v1216 = vpack.c.b16 %v1030, %v1024
        %v1217 = vpack.c.b16 %v1031, %v1025
        %v1218 = vpack.c.b16 %v1032, %v1026
        %v1219 = vpack.c.b16 %v1039, %v1033
        %v1220 = vpack.c.b16 %v1040, %v1034
        %v1221 = vpack.c.b16 %v1041, %v1035
        %v1222 = vpack.c.b16 %v1042, %v1036
        %v1223 = vpack.c.b16 %v1043, %v1037
        %v1224 = vpack.c.b16 %v1044, %v1038
        %v1225 = vpack.c.b16 %v1051, %v1045
        %v1226 = vpack.c.b16 %v1052, %v1046
        %v1227 = vpack.c.b16 %v1053, %v1047
        %v1228 = vpack.c.b16 %v1054, %v1048
        %v1229 = vpack.c.b16 %v1055, %v1049
        %v1230 = vpack.c.b16 %v1056, %v1050
        %v1231 = vpack.c.b16 %v1063, %v1057
        %v1232 = vpack.c.b16 %v1064, %v1058
        %v1233 = vpack.c.b16 %v1065, %v1059
        %v1234 = vpack.c.b16 %v1066, %v1060
        %v1235 = vpack.c.b16 %v1067, %v1061
        %v1236 = vpack.c.b16 %v1068, %v1062
        %v1237 = vpack.c.b16 %v1075, %v1069
        %v1238 = vpack.c.b16 %v1076, %v1070
        %v1239 = vpack.c.b16 %v1077, %v1071
        %v1240 = vpack.c.b16 %v1078, %v1072
        %v1241 = vpack.c.b16 %v1079, %v1073
        %v1242 = vpack.c.b16 %v1080, %v1074
        %v1243 = vpack.c.b16 %v1087, %v1081
        %v1244 = vpack.c.b16 %v1088, %v1082
        %v1245 = vpack.c.b16 %v1089, %v1083
        %v1246 = vpack.c.b16 %v1090, %v1084
        %v1247 = vpack.c.b16 %v1091, %v1085
        %v1248 = vpack.c.b16 %v1092, %v1086
        %v1249 = vpack.c.b16 %v1099, %v1093
        %v1250 = vpack.c.b16 %v1100, %v1094
        %v1251 = vpack.c.b16 %v1101, %v1095
        %v1252 = vpack.c.b16 %v1102, %v1096
        %v1253 = vpack.c.b16 %v1103, %v1097
        %v1254 = vpack.c.b16 %v1104, %v1098
        %v1255 = vpack.c.b16 %v1111, %v1105
        %v1256 = vpack.c.b16 %v1112, %v1106
        %v1257 = vpack.c.b16 %v1113, %v1107
        %v1258 = vpack.c.b16 %v1114, %v1108
        %v1259 = vpack.c.b16 %v1115, %v1109
        %v1260 = vpack.c.b16 %v1116, %v1110
        %v1261 = vpack.c.b16 %v1123, %v1117
        %v1262 = vpack.c.b16 %v1124, %v1118
        %v1263 = vpack.c.b16 %v1125, %v1119
        %v1264 = vpack.c.b16 %v1126, %v1120
        %v1265 = vpack.c.b16 %v1127, %v1121
        %v1266 = vpack.c.b16 %v1128, %v1122
        %v1267 = vpack.c.b16 %v1135, %v1129
        %v1268 = vpack.c.b16 %v1136, %v1130
        %v1269 = vpack.c.b16 %v1137, %v1131
        %v1270 = vpack.c.b16 %v1138, %v1132
        %v1271 = vpack.c.b16 %v1139, %v1133
        %v1272 = vpack.c.b16 %v1140, %v1134
        %v1273 = vpack.c.b16 %v1147, %v1141
        %v1274 = vpack.c.b16 %v1148, %v1142
        %v1275 = vpack.c.b16 %v1149, %v1143
        %v1276 = vpack.c.b16 %v1150, %v1144
        %v1277 = vpack.c.b16 %v1151, %v1145
        %v1278 = vpack.c.b16 %v1152, %v1146
        %v1279 = vpack.c.b16 %v1159, %v1153
        %v1280 = vpack.c.b16 %v1160, %v1154
        %v1281 = vpack.c.b16 %v1161, %v1155
        %v1282 = vpack.c.b16 %v1162, %v1156
        %v1283 = vpack.c.b16 %v1163, %v1157
        %v1284 = vpack.c.b16 %v1164, %v1158
        %v1285 = vpack.c.b16 %v1171, %v1165
        %v1286 = vpack.c.b16 %v1172, %v1166
        %v1287 = vpack.c.b16 %v1173, %v1167
        %v1288 = vpack.c.b16 %v1174, %v1168
        %v1289 = vpack.c.b16 %v1175, %v1169
        %v1290 = vpack.c.b16 %v1176, %v1170
        %v1291 = vpack.c.b16 %v1183, %v1177
        %v1292 = vpack.c.b16 %v1184, %v1178
        %v1293 = vpack.c.b16 %v1185, %v1179
        %v1294 = vpack.c.b16 %v1186, %v1180
        %v1295 = vpack.c.b16 %v1187, %v1181
        %v1296 = vpack.c.b16 %v1188, %v1182
        %v1297 = vpack.c.b16 %v1195, %v1189
        %v1298 = vpack.c.b16 %v1196, %v1190
        %v1299 = vpack.c.b16 %v1197, %v1191
        %v1300 = vpack.c.b16 %v1198, %v1192
        %v1301 = vpack.c.b16 %v1199, %v1193
        %v1302 = vpack.c.b16 %v1200, %v1194
        %v1303 = vpack.c.b16 %v1207, %v1201
        %v1304 = vpack.c.b16 %v1208, %v1202
        %v1305 = vpack.c.b16 %v1209, %v1203
        %v1306 = vpack.c.b16 %v1210, %v1204
        %v1307 = vpack.c.b16 %v1211, %v1205
        %v1308 = vpack.c.b16 %v1212, %v1206
        %1405 = vmatpush.bf16.msra.mxu0 %v1255
        %1406 = vmatpush.bf16.msra.mxu0 %v1249
        %1407 = vmatpush.bf16.msra.mxu0 %v1243
        %1408 = vmatpush.bf16.msra.mxu0 %v1237
        %1409 = vmatpush.bf16.msra.mxu0 %v1231
        %1410 = vmatpush.bf16.msra.mxu0 %v1225
        %1411 = vmatpush.bf16.msra.mxu0 %v1219
        %1412 = vmatpush.bf16.msra.mxu0 %v1213
        %1413 = vmatmul.bf16.gmra.mxu0 %v827
        %v1414 = vpop.f32.mrf.mxu0
        %v1415 = vadd.f32 0.0, %v1414
        %v1416 = vpop.f32.mrf.mxu0
        %v1417 = vadd.f32 0.0, %v1416
        %1418 = vdwg.mxu0
        %1419 = vmatpush.bf16.msra.mxu0 %v1303
        %1420 = vmatpush.bf16.msra.mxu0 %v1297
        %1421 = vmatpush.bf16.msra.mxu0 %v1291
        %1422 = vmatpush.bf16.msra.mxu0 %v1285
        %1423 = vmatpush.bf16.msra.mxu0 %v1279
        %1424 = vmatpush.bf16.msra.mxu0 %v1273
        %1425 = vmatpush.bf16.msra.mxu0 %v1267
        %1426 = vmatpush.bf16.msra.mxu0 %v1261
        %1427 = vmatmul.bf16.gmra.mxu0 %v828
        %v1428 = vpop.f32.mrf.mxu0
        %v1429 = vadd.f32 %v1415, %v1428
        %v1430 = vpop.f32.mrf.mxu0
        %v1431 = vadd.f32 %v1417, %v1430
        %1432 = vdwg.mxu0
        %1433 = vmatpush.bf16.msra.mxu0 %v1256
        %1434 = vmatpush.bf16.msra.mxu0 %v1250
        %1435 = vmatpush.bf16.msra.mxu0 %v1244
        %1436 = vmatpush.bf16.msra.mxu0 %v1238
        %1437 = vmatpush.bf16.msra.mxu0 %v1232
        %1438 = vmatpush.bf16.msra.mxu0 %v1226
        %1439 = vmatpush.bf16.msra.mxu0 %v1220
        %1440 = vmatpush.bf16.msra.mxu0 %v1214
        %1441 = vmatmul.bf16.gmra.mxu0 %v827
        %v1442 = vpop.f32.mrf.mxu0
        %v1443 = vadd.f32 0.0, %v1442
        %v1444 = vpop.f32.mrf.mxu0
        %v1445 = vadd.f32 0.0, %v1444
        %1446 = vdwg.mxu0
        %1447 = vmatpush.bf16.msra.mxu0 %v1304
        %1448 = vmatpush.bf16.msra.mxu0 %v1298
        %1449 = vmatpush.bf16.msra.mxu0 %v1292
        %1450 = vmatpush.bf16.msra.mxu0 %v1286
        %1451 = vmatpush.bf16.msra.mxu0 %v1280
        %1452 = vmatpush.bf16.msra.mxu0 %v1274
        %1453 = vmatpush.bf16.msra.mxu0 %v1268
        %1454 = vmatpush.bf16.msra.mxu0 %v1262
        %1455 = vmatmul.bf16.gmra.mxu0 %v828
        %v1456 = vpop.f32.mrf.mxu0
        %v1457 = vadd.f32 %v1443, %v1456
        %v1458 = vpop.f32.mrf.mxu0
        %v1459 = vadd.f32 %v1445, %v1458
        %1460 = vdwg.mxu0
        %1461 = vmatpush.bf16.msra.mxu0 %v1257
        %1462 = vmatpush.bf16.msra.mxu0 %v1251
        %1463 = vmatpush.bf16.msra.mxu0 %v1245
        %1464 = vmatpush.bf16.msra.mxu0 %v1239
        %1465 = vmatpush.bf16.msra.mxu0 %v1233
        %1466 = vmatpush.bf16.msra.mxu0 %v1227
        %1467 = vmatpush.bf16.msra.mxu0 %v1221
        %1468 = vmatpush.bf16.msra.mxu0 %v1215
        %1469 = vmatmul.bf16.gmra.mxu0 %v827
        %v1470 = vpop.f32.mrf.mxu0
        %v1471 = vadd.f32 0.0, %v1470
        %v1472 = vpop.f32.mrf.mxu0
        %v1473 = vadd.f32 0.0, %v1472
        %1474 = vdwg.mxu0
        %1475 = vmatpush.bf16.msra.mxu0 %v1305
        %1476 = vmatpush.bf16.msra.mxu0 %v1299
        %1477 = vmatpush.bf16.msra.mxu0 %v1293
        %1478 = vmatpush.bf16.msra.mxu0 %v1287
        %1479 = vmatpush.bf16.msra.mxu0 %v1281
        %1480 = vmatpush.bf16.msra.mxu0 %v1275
        %1481 = vmatpush.bf16.msra.mxu0 %v1269
        %1482 = vmatpush.bf16.msra.mxu0 %v1263
        %1483 = vmatmul.bf16.gmra.mxu0 %v828
        %v1484 = vpop.f32.mrf.mxu0
        %v1485 = vadd.f32 %v1471, %v1484
        %v1486 = vpop.f32.mrf.mxu0
        %v1487 = vadd.f32 %v1473, %v1486
        %1488 = vdwg.mxu0
        %1489 = vmatpush.bf16.msra.mxu0 %v1258
        %1490 = vmatpush.bf16.msra.mxu0 %v1252
        %1491 = vmatpush.bf16.msra.mxu0 %v1246
        %1492 = vmatpush.bf16.msra.mxu0 %v1240
        %1493 = vmatpush.bf16.msra.mxu0 %v1234
        %1494 = vmatpush.bf16.msra.mxu0 %v1228
        %1495 = vmatpush.bf16.msra.mxu0 %v1222
        %1496 = vmatpush.bf16.msra.mxu0 %v1216
        %1497 = vmatmul.bf16.gmra.mxu0 %v827
        %v1498 = vpop.f32.mrf.mxu0
        %v1499 = vadd.f32 0.0, %v1498
        %v1500 = vpop.f32.mrf.mxu0
        %v1501 = vadd.f32 0.0, %v1500
        %1502 = vdwg.mxu0
        %1503 = vmatpush.bf16.msra.mxu0 %v1306
        %1504 = vmatpush.bf16.msra.mxu0 %v1300
        %1505 = vmatpush.bf16.msra.mxu0 %v1294
        %1506 = vmatpush.bf16.msra.mxu0 %v1288
        %1507 = vmatpush.bf16.msra.mxu0 %v1282
        %1508 = vmatpush.bf16.msra.mxu0 %v1276
        %1509 = vmatpush.bf16.msra.mxu0 %v1270
        %1510 = vmatpush.bf16.msra.mxu0 %v1264
        %1511 = vmatmul.bf16.gmra.mxu0 %v828
        %v1512 = vpop.f32.mrf.mxu0
        %v1513 = vadd.f32 %v1499, %v1512
        %v1514 = vpop.f32.mrf.mxu0
        %v1515 = vadd.f32 %v1501, %v1514
        %1516 = vdwg.mxu0
        %1517 = vmatpush.bf16.msra.mxu0 %v1259
        %1518 = vmatpush.bf16.msra.mxu0 %v1253
        %1519 = vmatpush.bf16.msra.mxu0 %v1247
        %1520 = vmatpush.bf16.msra.mxu0 %v1241
        %1521 = vmatpush.bf16.msra.mxu0 %v1235
        %1522 = vmatpush.bf16.msra.mxu0 %v1229
        %1523 = vmatpush.bf16.msra.mxu0 %v1223
        %1524 = vmatpush.bf16.msra.mxu0 %v1217
        %1525 = vmatmul.bf16.gmra.mxu0 %v827
        %v1526 = vpop.f32.mrf.mxu0
        %v1527 = vadd.f32 0.0, %v1526
        %v1528 = vpop.f32.mrf.mxu0
        %v1529 = vadd.f32 0.0, %v1528
        %1530 = vdwg.mxu0
        %1531 = vmatpush.bf16.msra.mxu0 %v1307
        %1532 = vmatpush.bf16.msra.mxu0 %v1301
        %1533 = vmatpush.bf16.msra.mxu0 %v1295
        %1534 = vmatpush.bf16.msra.mxu0 %v1289
        %1535 = vmatpush.bf16.msra.mxu0 %v1283
        %1536 = vmatpush.bf16.msra.mxu0 %v1277
        %1537 = vmatpush.bf16.msra.mxu0 %v1271
        %1538 = vmatpush.bf16.msra.mxu0 %v1265
        %1539 = vmatmul.bf16.gmra.mxu0 %v828
        %v1540 = vpop.f32.mrf.mxu0
        %v1541 = vadd.f32 %v1527, %v1540
        %v1542 = vpop.f32.mrf.mxu0
        %v1543 = vadd.f32 %v1529, %v1542
        %1544 = vdwg.mxu0
        %1545 = vmatpush.bf16.msra.mxu0 %v1260
        %1546 = vmatpush.bf16.msra.mxu0 %v1254
        %1547 = vmatpush.bf16.msra.mxu0 %v1248
        %1548 = vmatpush.bf16.msra.mxu0 %v1242
        %1549 = vmatpush.bf16.msra.mxu0 %v1236
        %1550 = vmatpush.bf16.msra.mxu0 %v1230
        %1551 = vmatpush.bf16.msra.mxu0 %v1224
        %1552 = vmatpush.bf16.msra.mxu0 %v1218
        %1553 = vmatmul.bf16.gmra.mxu0 %v827
        %v1554 = vpop.f32.mrf.mxu0
        %v1555 = vadd.f32 0.0, %v1554
        %v1556 = vpop.f32.mrf.mxu0
        %v1557 = vadd.f32 0.0, %v1556
        %1558 = vdwg.mxu0
        %1559 = vmatpush.bf16.msra.mxu0 %v1308
        %1560 = vmatpush.bf16.msra.mxu0 %v1302
        %1561 = vmatpush.bf16.msra.mxu0 %v1296
        %1562 = vmatpush.bf16.msra.mxu0 %v1290
        %1563 = vmatpush.bf16.msra.mxu0 %v1284
        %1564 = vmatpush.bf16.msra.mxu0 %v1278
        %1565 = vmatpush.bf16.msra.mxu0 %v1272
        %1566 = vmatpush.bf16.msra.mxu0 %v1266
        %1567 = vmatmul.bf16.gmra.mxu0 %v828
        %v1568 = vpop.f32.mrf.mxu0
        %v1569 = vadd.f32 %v1555, %v1568
        %v1570 = vpop.f32.mrf.mxu0
        %v1571 = vadd.f32 %v1557, %v1570
        %1572 = vdwg.mxu0
        %v1573 = vld [vmem:[%s1] sm:$0xff]
        %v1574 = vld [vmem:[%s1 + $0x8] sm:$0xff]
        %v1575 = vld [vmem:[%s1 + $0x10] sm:$0xff]
        %v1576 = vld [vmem:[%s1 + $0x18] sm:$0xff]
        %v1577 = vld [vmem:[%s2] sm:$0xff]
        %v1578 = vld [vmem:[%s2 + $0x8] sm:$0xff]
        %v1579 = vld [vmem:[%s2 + $0x10] sm:$0xff]
        %v1580 = vld [vmem:[%s2 + $0x18] sm:$0xff]
        %1585 = vrot.lane.b32.xlu0 %v1429, 64
        %v1586 = vpop.permute.xlu0 %1585
        %1587 = vrot.lane.b32.xlu0 %v1457, 64
        %v1588 = vpop.permute.xlu0 %1587
        %1589 = vrot.lane.b32.xlu0 %v1431, 64
        %v1590 = vpop.permute.xlu0 %1589
        %1591 = vrot.lane.b32.xlu0 %v1459, 64
        %v1592 = vpop.permute.xlu0 %1591
        %vm1593 = vcmask 523264
        %v1594 = vsel %vm1593, %v1586, %v1588
        %v1595 = vsel %vm1593, %v1590, %v1592
        %v1602 = vsel %vm1593, %v1588, %v1586
        %v1603 = vsel %vm1593, %v1592, %v1590
        %v1604 = vlaneseq
        %v1605 = vand.u32 %v1604, 127
        %v1606 = vadd.s32 %v1605, 128
        %vm1607 = vcmp.lt.s32.totalorder %v1605, 0
        %v1608 = vsub.s32 0, %v1605
        %v1609 = vsel %vm1607, %v1608, %v1605
        %v1610 = vshrl.u32 %v1609, 7
        %v1611 = vand.u32 %v1609, 127
        %v1612 = vsub.s32 0, %v1611
        %v1613 = vsel %vm1607, %v1612, %v1611
        %vm1614 = vcmp.lt.s32.totalorder %v1606, 0
        %v1615 = vsub.s32 0, %v1606
        %v1616 = vsel %vm1614, %v1615, %v1606
        %v1617 = vshrl.u32 %v1616, 7
        %v1618 = vand.u32 %v1616, 127
        %v1619 = vsub.s32 0, %v1618
        %v1620 = vsel %vm1614, %v1619, %v1618
        %vm1621 = vcmp.ne.s32.totalorder %v1613, 0
        %vm1622 = vcmp.ne.s32.totalorder %v1620, 0
        %vm1623 = vcmp.lt.s32.totalorder %v1613, 0
        %vm1624 = vcmp.lt.s32.totalorder %v1620, 0
        %vm1625 = vmand %vm1623, %vm1621
        %vm1626 = vmand %vm1624, %vm1622
        %v1627 = vadd.s32 %v1613, 128
        %v1628 = vadd.s32 %v1620, 128
        %v1629 = vsel %vm1625, %v1627, %v1613
        %v1630 = vsel %vm1626, %v1628, %v1620
        %vm1631 = vcmp.lt.s32.totalorder %v1629, 64
        %vm1632 = vcmp.lt.s32.totalorder %v1630, 64
        %v1633 = vsel %vm1631, 1, 0
        %v1634 = vsel %vm1632, 1, 0
        %vm1635 = vcmp.eq.s32.totalorder %v1633, 1
        %vm1636 = vcmp.eq.s32.totalorder %v1634, 1
        %v1637 = vsel %vm1635, %v1594, %v1602
        %v1638 = vsel %vm1636, %v1602, %v1594
        %v1639 = vsel %vm1635, %v1595, %v1603
        %v1640 = vsel %vm1636, %v1603, %v1595
        %v1641 = vmul.f32 %v1429, %v1573
        %v1642 = vmul.f32 %v1457, %v1574
        %v1643 = vmul.f32 %v1431, %v1575
        %v1644 = vmul.f32 %v1459, %v1576
        %v1645 = vmul.f32 %v1637, %v1577
        %v1646 = vmul.f32 %v1638, %v1578
        %v1647 = vmul.f32 %v1639, %v1579
        %v1648 = vmul.f32 %v1640, %v1580
        %v1649 = vadd.f32 %v1641, %v1645
        %v1650 = vadd.f32 %v1642, %v1646
        %v1651 = vadd.f32 %v1643, %v1647
        %v1652 = vadd.f32 %v1644, %v1648
        %1657 = vrot.lane.b32.xlu0 %v1485, 64
        %v1658 = vpop.permute.xlu0 %1657
        %1659 = vrot.lane.b32.xlu0 %v1513, 64
        %v1660 = vpop.permute.xlu0 %1659
        %1661 = vrot.lane.b32.xlu0 %v1487, 64
        %v1662 = vpop.permute.xlu0 %1661
        %1663 = vrot.lane.b32.xlu0 %v1515, 64
        %v1664 = vpop.permute.xlu0 %1663
        %v1665 = vsel %vm1593, %v1658, %v1660
        %v1666 = vsel %vm1593, %v1662, %v1664
        %v1673 = vsel %vm1593, %v1660, %v1658
        %v1674 = vsel %vm1593, %v1664, %v1662
        %v1675 = vsel %vm1635, %v1665, %v1673
        %v1676 = vsel %vm1636, %v1673, %v1665
        %v1677 = vsel %vm1635, %v1666, %v1674
        %v1678 = vsel %vm1636, %v1674, %v1666
        %v1679 = vmul.f32 %v1485, %v1573
        %v1680 = vmul.f32 %v1513, %v1574
        %v1681 = vmul.f32 %v1487, %v1575
        %v1682 = vmul.f32 %v1515, %v1576
        %v1683 = vmul.f32 %v1675, %v1577
        %v1684 = vmul.f32 %v1676, %v1578
        %v1685 = vmul.f32 %v1677, %v1579
        %v1686 = vmul.f32 %v1678, %v1580
        %v1687 = vadd.f32 %v1679, %v1683
        %v1688 = vadd.f32 %v1680, %v1684
        %v1689 = vadd.f32 %v1681, %v1685
        %v1690 = vadd.f32 %v1682, %v1686
        %v1691 = vld [vmem:[%s3] sm:$0xff]
        %v1692 = vld [vmem:[%s3 + $0x8] sm:$0xff]
        %v1693 = vld [vmem:[%s4] sm:$0x3]
        %v1694 = vld [vmem:[%s744] sm:$0xff]
        %v1695 = vld [vmem:[%s744 + $0x8] sm:$0xff]
        %v1696 = vld [vmem:[%s744 + $0x10] sm:$0xff]
        %v1697 = vld [vmem:[%s744 + $0x18] sm:$0xff]
        %v1698 = vld [vmem:[%s749] sm:$0xff]
        %v1699 = vld [vmem:[%s749 + $0x8] sm:$0xff]
        %v1700 = vld [vmem:[%s749 + $0x10] sm:$0xff]
        %v1701 = vld [vmem:[%s749 + $0x18] sm:$0xff]
        %v1702 = vpack.c.bf16 %v1649, %v1649
        %v1703 = vpack.c.bf16 %v1650, %v1650
        %v1704 = vpack.c.bf16 %v1694, %v1694
        %v1705 = vpack.c.bf16 %v1687, %v1687
        %v1706 = vpack.c.bf16 %v1695, %v1695
        %v1707 = vpack.c.bf16 %v1688, %v1688
        %v1710 = vunpack.c.l.b16 %v1704
        %v1711 = vunpack.c.l.b16 %v1705
        %v1712 = vpack.c.b16 %v1711, %v1710
        %1714 = vmatpush.bf16.xpose.msra.mxu0 0
        %1715 = vmatpush.bf16.xpose.msra.mxu0 0
        %1716 = vmatpush.bf16.xpose.msra.mxu0 0
        %1717 = vmatpush.bf16.xpose.msra.mxu0 0
        %1718 = vmatpush.bf16.xpose.msra.mxu0 0
        %1719 = vmatpush.bf16.xpose.msra.mxu0 0
        %1720 = vmatpush.bf16.xpose.msra.mxu0 0
        %1721 = vmatpush.bf16.xpose.msra.mxu0 %v1712
        %1722 = vmatmul.bf16.gmra.mxu0 %v1702
        %v1723 = vpop.f32.mrf.mxu0
        %v1724 = vadd.f32 0.0, %v1723
        %v1725 = vpop.f32.mrf.mxu0
        %1726 = vdwg.mxu0
        %v1729 = vunpack.c.l.b16 %v1706
        %v1730 = vunpack.c.l.b16 %v1707
        %v1731 = vpack.c.b16 %v1730, %v1729
        %1733 = vmatpush.bf16.xpose.msra.mxu0 0
        %1734 = vmatpush.bf16.xpose.msra.mxu0 0
        %1735 = vmatpush.bf16.xpose.msra.mxu0 0
        %1736 = vmatpush.bf16.xpose.msra.mxu0 0
        %1737 = vmatpush.bf16.xpose.msra.mxu0 0
        %1738 = vmatpush.bf16.xpose.msra.mxu0 0
        %1739 = vmatpush.bf16.xpose.msra.mxu0 0
        %1740 = vmatpush.bf16.xpose.msra.mxu0 %v1731
        %1741 = vmatmul.bf16.gmra.mxu0 %v1703
        %v1742 = vpop.f32.mrf.mxu0
        %v1743 = vadd.f32 0.0, %v1742
        %v1744 = vpop.f32.mrf.mxu0
        %1745 = vdwg.mxu0
        %1746 = vset.pattern.permute.xlu0 0
        %1747 = vperm.xlu0 %1746, %v1691
        %v1748 = vpop.permute.xlu0 %1747
        %vm1749 = vcmp.le.s32.totalorder %v1605, %v1748
        %vm1750 = vcmp.gt.s32.totalorder %v1693, 0
        %v1751 = vsel %vm1750, 1, 0
        %v1752 = vperm.slane %v1751, 0
        %vm1753 = vcmp.eq.s32.totalorder %v1752, 1
        %vm1754 = vmand %vm1749, %vm1753
        %v1755 = vsel %vm1754, 1, 0
        %vm1756 = vcmp.eq.s32.totalorder %v1755, 1
        %v1757 = vsel %vm1756, %v1724, -1e+30
        %v1758 = vsel %vm1756, %v1743, -1e+30
        %vm1759 = vcmask 130048
        %v1760 = vsel %vm1759, %v1757, -inf
        %1761 = vmax.xlane.f32.xlu0 %v1760
        %v1762 = vpop.xlane.xlu0 %1761
        %v1763 = vsel %vm1759, %v1758, -inf
        %1764 = vmax.xlane.f32.xlu0 %v1763
        %v1765 = vpop.xlane.xlu0 %1764
        %v1766 = vsub.f32 %v1757, %v1762
        %v1767 = vsub.f32 %v1758, %v1765
        %v1768 = vmul.f32 %v1766, 1.442695
        %v1769 = vpow.pop %v1768
        %v1770 = vmul.f32 %v1767, 1.442695
        %v1771 = vpow.pop %v1770
        %v1772 = vsel %vm1759, %v1769, 0.0
        %1773 = vadd.xlane.f32.xlu0 %v1772
        %v1774 = vpop.xlane.xlu0 %1773
        %v1775 = vsel %vm1759, %v1771, 0.0
        %1776 = vadd.xlane.f32.xlu0 %v1775
        %v1777 = vpop.xlane.xlu0 %1776
        %v1778 = vrcp.pop %v1774
        %v1779 = vmul.f32 %v1774, %v1778
        %v1780 = vsub.f32 1.0, %v1779
        %v1781 = vmul.f32 %v1778, %v1780
        %v1782 = vadd.f32 %v1778, %v1781
        %vm1783 = vweird.f32 %v1774
        %vm1784 = vweird.f32 %v1778
        %vm1785 = vmor %vm1783, %vm1784
        %v1786 = vsel %vm1785, %v1778, %v1782
        %v1787 = vand.u32 2147483647, %v1774
        %vm1788 = vcmp.eq.f32.partialorder %v1787, 8.507059e+37
        %v1789 = vand.u32 %v1774, 2147483648
        %v1790 = vor.u32 1.1754944e-38, %v1789
        %v1791 = vsel %vm1788, %v1790, %v1786
        %v1792 = vrcp.pop %v1777
        %v1793 = vmul.f32 %v1777, %v1792
        %v1794 = vsub.f32 1.0, %v1793
        %v1795 = vmul.f32 %v1792, %v1794
        %v1796 = vadd.f32 %v1792, %v1795
        %vm1797 = vweird.f32 %v1777
        %vm1798 = vweird.f32 %v1792
        %vm1799 = vmor %vm1797, %vm1798
        %v1800 = vsel %vm1799, %v1792, %v1796
        %v1801 = vand.u32 2147483647, %v1777
        %vm1802 = vcmp.eq.f32.partialorder %v1801, 8.507059e+37
        %v1803 = vand.u32 %v1777, 2147483648
        %v1804 = vor.u32 1.1754944e-38, %v1803
        %v1805 = vsel %vm1802, %v1804, %v1800
        %v1806 = vmul.f32 %v1769, %v1791
        %v1807 = vmul.f32 %v1771, %v1805
        %v1808 = vpack.c.bf16 %v1806, %v1806
        %v1809 = vpack.c.bf16 %v1807, %v1807
        %v1810 = vpack.c.bf16 %v1698, %v1698
        %v1811 = vpack.c.bf16 %v1541, %v1541
        %v1812 = vpack.c.bf16 %v1699, %v1699
        %v1813 = vpack.c.bf16 %v1569, %v1569
        %v1816 = vunpack.c.l.b16 %v1810
        %v1817 = vunpack.c.l.b16 %v1811
        %v1818 = vpack.c.b16 %v1817, %v1816
        %v1821 = vsel %vm1759, %v1808, 0
        %1823 = vmatpush.bf16.msra.mxu0 0
        %1824 = vmatpush.bf16.msra.mxu0 0
        %1825 = vmatpush.bf16.msra.mxu0 0
        %1826 = vmatpush.bf16.msra.mxu0 0
        %1827 = vmatpush.bf16.msra.mxu0 0
        %1828 = vmatpush.bf16.msra.mxu0 0
        %1829 = vmatpush.bf16.msra.mxu0 0
        %1830 = vmatpush.bf16.msra.mxu0 %v1818
        %1831 = vmatmul.bf16.gmra.mxu0 %v1821
        %v1832 = vpop.f32.mrf.mxu0
        %v1833 = vadd.f32 0.0, %v1832
        %v1834 = vpop.f32.mrf.mxu0
        %1835 = vdwg.mxu0
        %v1838 = vunpack.c.l.b16 %v1812
        %v1839 = vunpack.c.l.b16 %v1813
        %v1840 = vpack.c.b16 %v1839, %v1838
        %v1843 = vsel %vm1759, %v1809, 0
        %1845 = vmatpush.bf16.msra.mxu0 0
        %1846 = vmatpush.bf16.msra.mxu0 0
        %1847 = vmatpush.bf16.msra.mxu0 0
        %1848 = vmatpush.bf16.msra.mxu0 0
        %1849 = vmatpush.bf16.msra.mxu0 0
        %1850 = vmatpush.bf16.msra.mxu0 0
        %1851 = vmatpush.bf16.msra.mxu0 0
        %1852 = vmatpush.bf16.msra.mxu0 %v1840
        %1853 = vmatmul.bf16.gmra.mxu0 %v1843
        %v1854 = vpop.f32.mrf.mxu0
        %v1855 = vadd.f32 0.0, %v1854
        %v1856 = vpop.f32.mrf.mxu0
        %1857 = vdwg.mxu0
        %1858 = vst [vmem:[%s754] sm:$0xff] %v1694
        %1859 = vst [vmem:[%s754 + $0x8] sm:$0xff] %v1695
        %1860 = vst [vmem:[%s754 + $0x10] sm:$0xff] %v1698
        %1861 = vst [vmem:[%s754 + $0x18] sm:$0xff] %v1699
        %1862 = vst [vmem:[%s754 + $0x20] sm:$0xff] %v1687
        %1863 = vst [vmem:[%s754 + $0x28] sm:$0xff] %v1688
        %1864 = vst [vmem:[%s754 + $0x30] sm:$0xff] %v1541
        %1865 = vst [vmem:[%s754 + $0x38] sm:$0xff] %v1569
        %v1866 = vpack.c.bf16 %v1651, %v1651
        %v1867 = vpack.c.bf16 %v1652, %v1652
        %v1868 = vpack.c.bf16 %v1696, %v1696
        %v1869 = vpack.c.bf16 %v1689, %v1689
        %v1870 = vpack.c.bf16 %v1697, %v1697
        %v1871 = vpack.c.bf16 %v1690, %v1690
        %v1874 = vunpack.c.l.b16 %v1868
        %v1875 = vunpack.c.l.b16 %v1869
        %v1876 = vpack.c.b16 %v1875, %v1874
        %1878 = vmatpush.bf16.xpose.msra.mxu0 0
        %1879 = vmatpush.bf16.xpose.msra.mxu0 0
        %1880 = vmatpush.bf16.xpose.msra.mxu0 0
        %1881 = vmatpush.bf16.xpose.msra.mxu0 0
        %1882 = vmatpush.bf16.xpose.msra.mxu0 0
        %1883 = vmatpush.bf16.xpose.msra.mxu0 0
        %1884 = vmatpush.bf16.xpose.msra.mxu0 0
        %1885 = vmatpush.bf16.xpose.msra.mxu0 %v1876
        %1886 = vmatmul.bf16.gmra.mxu0 %v1866
        %v1887 = vpop.f32.mrf.mxu0
        %v1888 = vadd.f32 0.0, %v1887
        %v1889 = vpop.f32.mrf.mxu0
        %1890 = vdwg.mxu0
        %v1893 = vunpack.c.l.b16 %v1870
        %v1894 = vunpack.c.l.b16 %v1871
        %v1895 = vpack.c.b16 %v1894, %v1893
        %1897 = vmatpush.bf16.xpose.msra.mxu0 0
        %1898 = vmatpush.bf16.xpose.msra.mxu0 0
        %1899 = vmatpush.bf16.xpose.msra.mxu0 0
        %1900 = vmatpush.bf16.xpose.msra.mxu0 0
        %1901 = vmatpush.bf16.xpose.msra.mxu0 0
        %1902 = vmatpush.bf16.xpose.msra.mxu0 0
        %1903 = vmatpush.bf16.xpose.msra.mxu0 0
        %1904 = vmatpush.bf16.xpose.msra.mxu0 %v1895
        %1905 = vmatmul.bf16.gmra.mxu0 %v1867
        %v1906 = vpop.f32.mrf.mxu0
        %v1907 = vadd.f32 0.0, %v1906
        %v1908 = vpop.f32.mrf.mxu0
        %1909 = vdwg.mxu0
        %1910 = vset.pattern.permute.xlu0 0
        %1911 = vperm.xlu0 %1910, %v1692
        %v1912 = vpop.permute.xlu0 %1911
        %vm1913 = vcmp.le.s32.totalorder %v1605, %v1912
        %v1914 = vperm.slane %v1751, 1
        %vm1915 = vcmp.eq.s32.totalorder %v1914, 1
        %vm1916 = vmand %vm1913, %vm1915
        %v1917 = vsel %vm1916, 1, 0
        %vm1918 = vcmp.eq.s32.totalorder %v1917, 1
        %v1919 = vsel %vm1918, %v1888, -1e+30
        %v1920 = vsel %vm1918, %v1907, -1e+30
        %v1921 = vsel %vm1759, %v1919, -inf
        %1922 = vmax.xlane.f32.xlu0 %v1921
        %v1923 = vpop.xlane.xlu0 %1922
        %v1924 = vsel %vm1759, %v1920, -inf
        %1925 = vmax.xlane.f32.xlu0 %v1924
        %v1926 = vpop.xlane.xlu0 %1925
        %v1927 = vsub.f32 %v1919, %v1923
        %v1928 = vsub.f32 %v1920, %v1926
        %v1929 = vmul.f32 %v1927, 1.442695
        %v1930 = vpow.pop %v1929
        %v1931 = vmul.f32 %v1928, 1.442695
        %v1932 = vpow.pop %v1931
        %v1933 = vsel %vm1759, %v1930, 0.0
        %1934 = vadd.xlane.f32.xlu0 %v1933
        %v1935 = vpop.xlane.xlu0 %1934
        %v1936 = vsel %vm1759, %v1932, 0.0
        %1937 = vadd.xlane.f32.xlu0 %v1936
        %v1938 = vpop.xlane.xlu0 %1937
        %v1939 = vrcp.pop %v1935
        %v1940 = vmul.f32 %v1935, %v1939
        %v1941 = vsub.f32 1.0, %v1940
        %v1942 = vmul.f32 %v1939, %v1941
        %v1943 = vadd.f32 %v1939, %v1942
        %vm1944 = vweird.f32 %v1935
        %vm1945 = vweird.f32 %v1939
        %vm1946 = vmor %vm1944, %vm1945
        %v1947 = vsel %vm1946, %v1939, %v1943
        %v1948 = vand.u32 2147483647, %v1935
        %vm1949 = vcmp.eq.f32.partialorder %v1948, 8.507059e+37
        %v1950 = vand.u32 %v1935, 2147483648
        %v1951 = vor.u32 1.1754944e-38, %v1950
        %v1952 = vsel %vm1949, %v1951, %v1947
        %v1953 = vrcp.pop %v1938
        %v1954 = vmul.f32 %v1938, %v1953
        %v1955 = vsub.f32 1.0, %v1954
        %v1956 = vmul.f32 %v1953, %v1955
        %v1957 = vadd.f32 %v1953, %v1956
        %vm1958 = vweird.f32 %v1938
        %vm1959 = vweird.f32 %v1953
        %vm1960 = vmor %vm1958, %vm1959
        %v1961 = vsel %vm1960, %v1953, %v1957
        %v1962 = vand.u32 2147483647, %v1938
        %vm1963 = vcmp.eq.f32.partialorder %v1962, 8.507059e+37
        %v1964 = vand.u32 %v1938, 2147483648
        %v1965 = vor.u32 1.1754944e-38, %v1964
        %v1966 = vsel %vm1963, %v1965, %v1961
        %v1967 = vmul.f32 %v1930, %v1952
        %v1968 = vmul.f32 %v1932, %v1966
        %v1969 = vpack.c.bf16 %v1967, %v1967
        %v1970 = vpack.c.bf16 %v1968, %v1968
        %v1971 = vpack.c.bf16 %v1700, %v1700
        %v1972 = vpack.c.bf16 %v1543, %v1543
        %v1973 = vpack.c.bf16 %v1701, %v1701
        %v1974 = vpack.c.bf16 %v1571, %v1571
        %v1977 = vunpack.c.l.b16 %v1971
        %v1978 = vunpack.c.l.b16 %v1972
        %v1979 = vpack.c.b16 %v1978, %v1977
        %v1982 = vsel %vm1759, %v1969, 0
        %1984 = vmatpush.bf16.msra.mxu0 0
        %1985 = vmatpush.bf16.msra.mxu0 0
        %1986 = vmatpush.bf16.msra.mxu0 0
        %1987 = vmatpush.bf16.msra.mxu0 0
        %1988 = vmatpush.bf16.msra.mxu0 0
        %1989 = vmatpush.bf16.msra.mxu0 0
        %1990 = vmatpush.bf16.msra.mxu0 0
        %1991 = vmatpush.bf16.msra.mxu0 %v1979
        %1992 = vmatmul.bf16.gmra.mxu0 %v1982
        %v1993 = vpop.f32.mrf.mxu0
        %v1994 = vadd.f32 0.0, %v1993
        %v1995 = vpop.f32.mrf.mxu0
        %1996 = vdwg.mxu0
        %v1999 = vunpack.c.l.b16 %v1973
        %v2000 = vunpack.c.l.b16 %v1974
        %v2001 = vpack.c.b16 %v2000, %v1999
        %v2004 = vsel %vm1759, %v1970, 0
        %2006 = vmatpush.bf16.msra.mxu0 0
        %2007 = vmatpush.bf16.msra.mxu0 0
        %2008 = vmatpush.bf16.msra.mxu0 0
        %2009 = vmatpush.bf16.msra.mxu0 0
        %2010 = vmatpush.bf16.msra.mxu0 0
        %2011 = vmatpush.bf16.msra.mxu0 0
        %2012 = vmatpush.bf16.msra.mxu0 0
        %2013 = vmatpush.bf16.msra.mxu0 %v2001
        %2014 = vmatmul.bf16.gmra.mxu0 %v2004
        %v2015 = vpop.f32.mrf.mxu0
        %v2016 = vadd.f32 0.0, %v2015
        %v2017 = vpop.f32.mrf.mxu0
        %2018 = vdwg.mxu0
        %s2019 = scalar_lea.vmem %s754, 64
        %2020 = vst [vmem:[%s2019] sm:$0xff] %v1696
        %2021 = vst [vmem:[%s2019 + $0x8] sm:$0xff] %v1697
        %2022 = vst [vmem:[%s2019 + $0x10] sm:$0xff] %v1700
        %2023 = vst [vmem:[%s2019 + $0x18] sm:$0xff] %v1701
        %2024 = vst [vmem:[%s2019 + $0x20] sm:$0xff] %v1689
        %2025 = vst [vmem:[%s2019 + $0x28] sm:$0xff] %v1690
        %2026 = vst [vmem:[%s2019 + $0x30] sm:$0xff] %v1543
        %2027 = vst [vmem:[%s2019 + $0x38] sm:$0xff] %v1571
        %v2028 = vpack.c.bf16 %v1994, %v1833
        %v2029 = vpack.c.bf16 %v2016, %v1855
        %v2030 = vld [vmem:[%s624] sm:$0xff]
        %v2031 = vld [vmem:[%s624 + $0x8] sm:$0xff]
        %v2032 = vld [vmem:[%s624 + $0x10] sm:$0xff]
        %v2033 = vld [vmem:[%s624 + $0x18] sm:$0xff]
        %v2034 = vld [vmem:[%s624 + $0x20] sm:$0xff]
        %v2035 = vld [vmem:[%s624 + $0x28] sm:$0xff]
        %v2036 = vld [vmem:[%s624 + $0x30] sm:$0xff]
        %v2037 = vld [vmem:[%s624 + $0x38] sm:$0xff]
        %v2038 = vld [vmem:[%s624 + $0x40] sm:$0xff]
        %v2039 = vld [vmem:[%s624 + $0x48] sm:$0xff]
        %v2040 = vld [vmem:[%s624 + $0x50] sm:$0xff]
        %v2041 = vld [vmem:[%s624 + $0x58] sm:$0xff]
        %v2042 = vld [vmem:[%s624 + $0x60] sm:$0xff]
        %v2043 = vld [vmem:[%s624 + $0x68] sm:$0xff]
        %v2044 = vld [vmem:[%s624 + $0x70] sm:$0xff]
        %v2045 = vld [vmem:[%s624 + $0x78] sm:$0xff]
        %v2046 = vld [vmem:[%s624 + $0x80] sm:$0xff]
        %v2047 = vld [vmem:[%s624 + $0x88] sm:$0xff]
        %v2048 = vld [vmem:[%s624 + $0x90] sm:$0xff]
        %v2049 = vld [vmem:[%s624 + $0x98] sm:$0xff]
        %v2050 = vld [vmem:[%s624 + $0xa0] sm:$0xff]
        %v2051 = vld [vmem:[%s624 + $0xa8] sm:$0xff]
        %v2052 = vld [vmem:[%s624 + $0xb0] sm:$0xff]
        %v2053 = vld [vmem:[%s624 + $0xb8] sm:$0xff]
        %v2054 = vld [vmem:[%s624 + $0xc0] sm:$0xff]
        %v2055 = vld [vmem:[%s624 + $0xc8] sm:$0xff]
        %v2056 = vld [vmem:[%s624 + $0xd0] sm:$0xff]
        %v2057 = vld [vmem:[%s624 + $0xd8] sm:$0xff]
        %v2058 = vld [vmem:[%s624 + $0xe0] sm:$0xff]
        %v2059 = vld [vmem:[%s624 + $0xe8] sm:$0xff]
        %v2060 = vld [vmem:[%s624 + $0xf0] sm:$0xff]
        %v2061 = vld [vmem:[%s624 + $0xf8] sm:$0xff]
        %v2094 = vunpack.c.l.b16 %v2030
        %v2095 = vunpack.c.h.b16 %v2030
        %v2096 = vunpack.c.l.b16 %v2031
        %v2097 = vunpack.c.h.b16 %v2031
        %v2098 = vunpack.c.l.b16 %v2032
        %v2099 = vunpack.c.h.b16 %v2032
        %v2100 = vunpack.c.l.b16 %v2033
        %v2101 = vunpack.c.h.b16 %v2033
        %v2102 = vunpack.c.l.b16 %v2034
        %v2103 = vunpack.c.h.b16 %v2034
        %v2104 = vunpack.c.l.b16 %v2035
        %v2105 = vunpack.c.h.b16 %v2035
        %v2106 = vunpack.c.l.b16 %v2036
        %v2107 = vunpack.c.h.b16 %v2036
        %v2108 = vunpack.c.l.b16 %v2037
        %v2109 = vunpack.c.h.b16 %v2037
        %v2110 = vunpack.c.l.b16 %v2038
        %v2111 = vunpack.c.h.b16 %v2038
        %v2112 = vunpack.c.l.b16 %v2039
        %v2113 = vunpack.c.h.b16 %v2039
        %v2114 = vunpack.c.l.b16 %v2040
        %v2115 = vunpack.c.h.b16 %v2040
        %v2116 = vunpack.c.l.b16 %v2041
        %v2117 = vunpack.c.h.b16 %v2041
        %v2118 = vunpack.c.l.b16 %v2042
        %v2119 = vunpack.c.h.b16 %v2042
        %v2120 = vunpack.c.l.b16 %v2043
        %v2121 = vunpack.c.h.b16 %v2043
        %v2122 = vunpack.c.l.b16 %v2044
        %v2123 = vunpack.c.h.b16 %v2044
        %v2124 = vunpack.c.l.b16 %v2045
        %v2125 = vunpack.c.h.b16 %v2045
        %v2126 = vunpack.c.l.b16 %v2046
        %v2127 = vunpack.c.h.b16 %v2046
        %v2128 = vunpack.c.l.b16 %v2047
        %v2129 = vunpack.c.h.b16 %v2047
        %v2130 = vunpack.c.l.b16 %v2048
        %v2131 = vunpack.c.h.b16 %v2048
        %v2132 = vunpack.c.l.b16 %v2049
        %v2133 = vunpack.c.h.b16 %v2049
        %v2134 = vunpack.c.l.b16 %v2050
        %v2135 = vunpack.c.h.b16 %v2050
        %v2136 = vunpack.c.l.b16 %v2051
        %v2137 = vunpack.c.h.b16 %v2051
        %v2138 = vunpack.c.l.b16 %v2052
        %v2139 = vunpack.c.h.b16 %v2052
        %v2140 = vunpack.c.l.b16 %v2053
        %v2141 = vunpack.c.h.b16 %v2053
        %v2142 = vunpack.c.l.b16 %v2054
        %v2143 = vunpack.c.h.b16 %v2054
        %v2144 = vunpack.c.l.b16 %v2055
        %v2145 = vunpack.c.h.b16 %v2055
        %v2146 = vunpack.c.l.b16 %v2056
        %v2147 = vunpack.c.h.b16 %v2056
        %v2148 = vunpack.c.l.b16 %v2057
        %v2149 = vunpack.c.h.b16 %v2057
        %v2150 = vunpack.c.l.b16 %v2058
        %v2151 = vunpack.c.h.b16 %v2058
        %v2152 = vunpack.c.l.b16 %v2059
        %v2153 = vunpack.c.h.b16 %v2059
        %v2154 = vunpack.c.l.b16 %v2060
        %v2155 = vunpack.c.h.b16 %v2060
        %v2156 = vunpack.c.l.b16 %v2061
        %v2157 = vunpack.c.h.b16 %v2061
        %v2158 = vpack.c.b16 %v2096, %v2094
        %v2159 = vpack.c.b16 %v2097, %v2095
        %v2160 = vpack.c.b16 %v2100, %v2098
        %v2161 = vpack.c.b16 %v2101, %v2099
        %v2162 = vpack.c.b16 %v2104, %v2102
        %v2163 = vpack.c.b16 %v2105, %v2103
        %v2164 = vpack.c.b16 %v2108, %v2106
        %v2165 = vpack.c.b16 %v2109, %v2107
        %v2166 = vpack.c.b16 %v2112, %v2110
        %v2167 = vpack.c.b16 %v2113, %v2111
        %v2168 = vpack.c.b16 %v2116, %v2114
        %v2169 = vpack.c.b16 %v2117, %v2115
        %v2170 = vpack.c.b16 %v2120, %v2118
        %v2171 = vpack.c.b16 %v2121, %v2119
        %v2172 = vpack.c.b16 %v2124, %v2122
        %v2173 = vpack.c.b16 %v2125, %v2123
        %v2174 = vpack.c.b16 %v2128, %v2126
        %v2175 = vpack.c.b16 %v2129, %v2127
        %v2176 = vpack.c.b16 %v2132, %v2130
        %v2177 = vpack.c.b16 %v2133, %v2131
        %v2178 = vpack.c.b16 %v2136, %v2134
        %v2179 = vpack.c.b16 %v2137, %v2135
        %v2180 = vpack.c.b16 %v2140, %v2138
        %v2181 = vpack.c.b16 %v2141, %v2139
        %v2182 = vpack.c.b16 %v2144, %v2142
        %v2183 = vpack.c.b16 %v2145, %v2143
        %v2184 = vpack.c.b16 %v2148, %v2146
        %v2185 = vpack.c.b16 %v2149, %v2147
        %v2186 = vpack.c.b16 %v2152, %v2150
        %v2187 = vpack.c.b16 %v2153, %v2151
        %v2188 = vpack.c.b16 %v2156, %v2154
        %v2189 = vpack.c.b16 %v2157, %v2155
        %2222 = vmatpush.bf16.msra.mxu0 %v2172
        %2223 = vmatpush.bf16.msra.mxu0 %v2170
        %2224 = vmatpush.bf16.msra.mxu0 %v2168
        %2225 = vmatpush.bf16.msra.mxu0 %v2166
        %2226 = vmatpush.bf16.msra.mxu0 %v2164
        %2227 = vmatpush.bf16.msra.mxu0 %v2162
        %2228 = vmatpush.bf16.msra.mxu0 %v2160
        %2229 = vmatpush.bf16.msra.mxu0 %v2158
        %2230 = vmatmul.bf16.gmra.mxu0 %v2028
        %v2231 = vpop.f32.mrf.mxu0
        %v2232 = vadd.f32 0.0, %v2231
        %v2233 = vpop.f32.mrf.mxu0
        %v2234 = vadd.f32 0.0, %v2233
        %2235 = vdwg.mxu0
        %2236 = vmatpush.bf16.msra.mxu0 %v2188
        %2237 = vmatpush.bf16.msra.mxu0 %v2186
        %2238 = vmatpush.bf16.msra.mxu0 %v2184
        %2239 = vmatpush.bf16.msra.mxu0 %v2182
        %2240 = vmatpush.bf16.msra.mxu0 %v2180
        %2241 = vmatpush.bf16.msra.mxu0 %v2178
        %2242 = vmatpush.bf16.msra.mxu0 %v2176
        %2243 = vmatpush.bf16.msra.mxu0 %v2174
        %2244 = vmatmul.bf16.gmra.mxu0 %v2029
        %v2245 = vpop.f32.mrf.mxu0
        %v2246 = vadd.f32 %v2232, %v2245
        %v2247 = vpop.f32.mrf.mxu0
        %v2248 = vadd.f32 %v2234, %v2247
        %2249 = vdwg.mxu0
        %2250 = vmatpush.bf16.msra.mxu0 %v2173
        %2251 = vmatpush.bf16.msra.mxu0 %v2171
        %2252 = vmatpush.bf16.msra.mxu0 %v2169
        %2253 = vmatpush.bf16.msra.mxu0 %v2167
        %2254 = vmatpush.bf16.msra.mxu0 %v2165
        %2255 = vmatpush.bf16.msra.mxu0 %v2163
        %2256 = vmatpush.bf16.msra.mxu0 %v2161
        %2257 = vmatpush.bf16.msra.mxu0 %v2159
        %2258 = vmatmul.bf16.gmra.mxu0 %v2028
        %v2259 = vpop.f32.mrf.mxu0
        %v2260 = vadd.f32 0.0, %v2259
        %v2261 = vpop.f32.mrf.mxu0
        %v2262 = vadd.f32 0.0, %v2261
        %2263 = vdwg.mxu0
        %2264 = vmatpush.bf16.msra.mxu0 %v2189
        %2265 = vmatpush.bf16.msra.mxu0 %v2187
        %2266 = vmatpush.bf16.msra.mxu0 %v2185
        %2267 = vmatpush.bf16.msra.mxu0 %v2183
        %2268 = vmatpush.bf16.msra.mxu0 %v2181
        %2269 = vmatpush.bf16.msra.mxu0 %v2179
        %2270 = vmatpush.bf16.msra.mxu0 %v2177
        %2271 = vmatpush.bf16.msra.mxu0 %v2175
        %2272 = vmatmul.bf16.gmra.mxu0 %v2029
        %v2273 = vpop.f32.mrf.mxu0
        %v2274 = vadd.f32 %v2260, %v2273
        %v2275 = vpop.f32.mrf.mxu0
        %v2276 = vadd.f32 %v2262, %v2275
        %2277 = vdwg.mxu0
        %v2278 = vadd.f32 %v768, %v2246
        %v2279 = vadd.f32 %v769, %v2274
        %v2280 = vadd.f32 %v770, %v2248
        %v2281 = vadd.f32 %v771, %v2276
        %v2282 = vld [vmem:[%s739] sm:$0x3]
        %v2283 = vmul.f32 %v2278, %v2278
        %v2284 = vmul.f32 %v2279, %v2279
        %v2285 = vmul.f32 %v2280, %v2280
        %v2286 = vmul.f32 %v2281, %v2281
        %v2287 = vadd.f32 %v2283, %v2284
        %2288 = vadd.xlane.f32.xlu0 %v2287
        %v2289 = vpop.xlane.xlu0 %2288
        %v2290 = vadd.f32 %v2285, %v2286
        %2291 = vadd.xlane.f32.xlu0 %v2290
        %v2292 = vpop.xlane.xlu0 %2291
        %v2293 = vmul.f32 %v2289, %v789
        %v2294 = vmul.f32 %v2292, %v789
        %v2295 = vadd.f32 %v2293, 1e-06
        %v2296 = vadd.f32 %v2294, 1e-06
        %v2297 = vrsqrt.pop %v2295
        %v2298 = vmul.f32 %v2297, %v2295
        %v2299 = vmul.f32 %v2298, %v2297
        %v2300 = vmul.f32 0.5, %v2299
        %v2301 = vsub.f32 1.5, %v2300
        %v2302 = vmul.f32 %v2297, %v2301
        %vm2303 = vweird.f32 %v2295
        %vm2304 = vweird.f32 %v2297
        %vm2305 = vmor %vm2303, %vm2304
        %v2306 = vsel %vm2305, %v2297, %v2302
        %v2307 = vrsqrt.pop %v2296
        %v2308 = vmul.f32 %v2307, %v2296
        %v2309 = vmul.f32 %v2308, %v2307
        %v2310 = vmul.f32 0.5, %v2309
        %v2311 = vsub.f32 1.5, %v2310
        %v2312 = vmul.f32 %v2307, %v2311
        %vm2313 = vweird.f32 %v2296
        %vm2314 = vweird.f32 %v2307
        %vm2315 = vmor %vm2313, %vm2314
        %v2316 = vsel %vm2315, %v2307, %v2312
        %v2317 = vmul.f32 %v2278, %v2306
        %v2318 = vmul.f32 %v2279, %v2306
        %v2319 = vmul.f32 %v2280, %v2316
        %v2320 = vmul.f32 %v2281, %v2316
        %v2322 = vperm.slane %v2282, 0
        %v2323 = vperm.slane %v2282, 1
        %v2326 = vmul.f32 %v2317, %v2322
        %v2327 = vmul.f32 %v2318, %v2323
        %v2328 = vmul.f32 %v2319, %v2322
        %v2329 = vmul.f32 %v2320, %v2323
        %v2330 = vpack.c.bf16 %v2328, %v2326
        %v2331 = vpack.c.bf16 %v2329, %v2327
        %v2332 = vld [vmem:[%s634] sm:$0xff]
        %v2333 = vld [vmem:[%s634 + $0x8] sm:$0xff]
        %v2334 = vld [vmem:[%s634 + $0x10] sm:$0xff]
        %v2335 = vld [vmem:[%s634 + $0x18] sm:$0xff]
        %v2336 = vld [vmem:[%s634 + $0x20] sm:$0xff]
        %v2337 = vld [vmem:[%s634 + $0x28] sm:$0xff]
        %v2338 = vld [vmem:[%s634 + $0x30] sm:$0xff]
        %v2339 = vld [vmem:[%s634 + $0x38] sm:$0xff]
        %v2340 = vld [vmem:[%s634 + $0x40] sm:$0xff]
        %v2341 = vld [vmem:[%s634 + $0x48] sm:$0xff]
        %v2342 = vld [vmem:[%s634 + $0x50] sm:$0xff]
        %v2343 = vld [vmem:[%s634 + $0x58] sm:$0xff]
        %v2344 = vld [vmem:[%s634 + $0x60] sm:$0xff]
        %v2345 = vld [vmem:[%s634 + $0x68] sm:$0xff]
        %v2346 = vld [vmem:[%s634 + $0x70] sm:$0xff]
        %v2347 = vld [vmem:[%s634 + $0x78] sm:$0xff]
        %v2348 = vld [vmem:[%s634 + $0x80] sm:$0xff]
        %v2349 = vld [vmem:[%s634 + $0x88] sm:$0xff]
        %v2350 = vld [vmem:[%s634 + $0x90] sm:$0xff]
        %v2351 = vld [vmem:[%s634 + $0x98] sm:$0xff]
        %v2352 = vld [vmem:[%s634 + $0xa0] sm:$0xff]
        %v2353 = vld [vmem:[%s634 + $0xa8] sm:$0xff]
        %v2354 = vld [vmem:[%s634 + $0xb0] sm:$0xff]
        %v2355 = vld [vmem:[%s634 + $0xb8] sm:$0xff]
        %v2356 = vld [vmem:[%s634 + $0xc0] sm:$0xff]
        %v2357 = vld [vmem:[%s634 + $0xc8] sm:$0xff]
        %v2358 = vld [vmem:[%s634 + $0xd0] sm:$0xff]
        %v2359 = vld [vmem:[%s634 + $0xd8] sm:$0xff]
        %v2360 = vld [vmem:[%s634 + $0xe0] sm:$0xff]
        %v2361 = vld [vmem:[%s634 + $0xe8] sm:$0xff]
        %v2362 = vld [vmem:[%s634 + $0xf0] sm:$0xff]
        %v2363 = vld [vmem:[%s634 + $0xf8] sm:$0xff]
        %v2364 = vld [vmem:[%s634 + $0x100] sm:$0xff]
        %v2365 = vld [vmem:[%s634 + $0x108] sm:$0xff]
        %v2366 = vld [vmem:[%s634 + $0x110] sm:$0xff]
        %v2367 = vld [vmem:[%s634 + $0x118] sm:$0xff]
        %v2368 = vld [vmem:[%s634 + $0x120] sm:$0xff]
        %v2369 = vld [vmem:[%s634 + $0x128] sm:$0xff]
        %v2370 = vld [vmem:[%s634 + $0x130] sm:$0xff]
        %v2371 = vld [vmem:[%s634 + $0x138] sm:$0xff]
        %v2372 = vld [vmem:[%s634 + $0x140] sm:$0xff]
        %v2373 = vld [vmem:[%s634 + $0x148] sm:$0xff]
        %v2374 = vld [vmem:[%s634 + $0x150] sm:$0xff]
        %v2375 = vld [vmem:[%s634 + $0x158] sm:$0xff]
        %v2376 = vld [vmem:[%s634 + $0x160] sm:$0xff]
        %v2377 = vld [vmem:[%s634 + $0x168] sm:$0xff]
        %v2378 = vld [vmem:[%s634 + $0x170] sm:$0xff]
        %v2379 = vld [vmem:[%s634 + $0x178] sm:$0xff]
        %v2380 = vld [vmem:[%s634 + $0x180] sm:$0xff]
        %v2381 = vld [vmem:[%s634 + $0x188] sm:$0xff]
        %v2382 = vld [vmem:[%s634 + $0x190] sm:$0xff]
        %v2383 = vld [vmem:[%s634 + $0x198] sm:$0xff]
        %v2384 = vld [vmem:[%s634 + $0x1a0] sm:$0xff]
        %v2385 = vld [vmem:[%s634 + $0x1a8] sm:$0xff]
        %v2386 = vld [vmem:[%s634 + $0x1b0] sm:$0xff]
        %v2387 = vld [vmem:[%s634 + $0x1b8] sm:$0xff]
        %v2388 = vld [vmem:[%s634 + $0x1c0] sm:$0xff]
        %v2389 = vld [vmem:[%s634 + $0x1c8] sm:$0xff]
        %v2390 = vld [vmem:[%s634 + $0x1d0] sm:$0xff]
        %v2391 = vld [vmem:[%s634 + $0x1d8] sm:$0xff]
        %v2392 = vld [vmem:[%s634 + $0x1e0] sm:$0xff]
        %v2393 = vld [vmem:[%s634 + $0x1e8] sm:$0xff]
        %v2394 = vld [vmem:[%s634 + $0x1f0] sm:$0xff]
        %v2395 = vld [vmem:[%s634 + $0x1f8] sm:$0xff]
        %v2396 = vld [vmem:[%s634 + $0x200] sm:$0xff]
        %v2397 = vld [vmem:[%s634 + $0x208] sm:$0xff]
        %v2398 = vld [vmem:[%s634 + $0x210] sm:$0xff]
        %v2399 = vld [vmem:[%s634 + $0x218] sm:$0xff]
        %v2400 = vld [vmem:[%s634 + $0x220] sm:$0xff]
        %v2401 = vld [vmem:[%s634 + $0x228] sm:$0xff]
        %v2402 = vld [vmem:[%s634 + $0x230] sm:$0xff]
        %v2403 = vld [vmem:[%s634 + $0x238] sm:$0xff]
        %v2404 = vld [vmem:[%s634 + $0x240] sm:$0xff]
        %v2405 = vld [vmem:[%s634 + $0x248] sm:$0xff]
        %v2406 = vld [vmem:[%s634 + $0x250] sm:$0xff]
        %v2407 = vld [vmem:[%s634 + $0x258] sm:$0xff]
        %v2408 = vld [vmem:[%s634 + $0x260] sm:$0xff]
        %v2409 = vld [vmem:[%s634 + $0x268] sm:$0xff]
        %v2410 = vld [vmem:[%s634 + $0x270] sm:$0xff]
        %v2411 = vld [vmem:[%s634 + $0x278] sm:$0xff]
        %v2412 = vld [vmem:[%s634 + $0x280] sm:$0xff]
        %v2413 = vld [vmem:[%s634 + $0x288] sm:$0xff]
        %v2414 = vld [vmem:[%s634 + $0x290] sm:$0xff]
        %v2415 = vld [vmem:[%s634 + $0x298] sm:$0xff]
        %v2416 = vld [vmem:[%s634 + $0x2a0] sm:$0xff]
        %v2417 = vld [vmem:[%s634 + $0x2a8] sm:$0xff]
        %v2418 = vld [vmem:[%s634 + $0x2b0] sm:$0xff]
        %v2419 = vld [vmem:[%s634 + $0x2b8] sm:$0xff]
        %v2420 = vld [vmem:[%s634 + $0x2c0] sm:$0xff]
        %v2421 = vld [vmem:[%s634 + $0x2c8] sm:$0xff]
        %v2422 = vld [vmem:[%s634 + $0x2d0] sm:$0xff]
        %v2423 = vld [vmem:[%s634 + $0x2d8] sm:$0xff]
        %v2424 = vld [vmem:[%s634 + $0x2e0] sm:$0xff]
        %v2425 = vld [vmem:[%s634 + $0x2e8] sm:$0xff]
        %v2426 = vld [vmem:[%s634 + $0x2f0] sm:$0xff]
        %v2427 = vld [vmem:[%s634 + $0x2f8] sm:$0xff]
        %v2428 = vld [vmem:[%s634 + $0x300] sm:$0xff]
        %v2429 = vld [vmem:[%s634 + $0x308] sm:$0xff]
        %v2430 = vld [vmem:[%s634 + $0x310] sm:$0xff]
        %v2431 = vld [vmem:[%s634 + $0x318] sm:$0xff]
        %v2432 = vld [vmem:[%s634 + $0x320] sm:$0xff]
        %v2433 = vld [vmem:[%s634 + $0x328] sm:$0xff]
        %v2434 = vld [vmem:[%s634 + $0x330] sm:$0xff]
        %v2435 = vld [vmem:[%s634 + $0x338] sm:$0xff]
        %v2436 = vld [vmem:[%s634 + $0x340] sm:$0xff]
        %v2437 = vld [vmem:[%s634 + $0x348] sm:$0xff]
        %v2438 = vld [vmem:[%s634 + $0x350] sm:$0xff]
        %v2439 = vld [vmem:[%s634 + $0x358] sm:$0xff]
        %v2440 = vld [vmem:[%s634 + $0x360] sm:$0xff]
        %v2441 = vld [vmem:[%s634 + $0x368] sm:$0xff]
        %v2442 = vld [vmem:[%s634 + $0x370] sm:$0xff]
        %v2443 = vld [vmem:[%s634 + $0x378] sm:$0xff]
        %v2444 = vld [vmem:[%s634 + $0x380] sm:$0xff]
        %v2445 = vld [vmem:[%s634 + $0x388] sm:$0xff]
        %v2446 = vld [vmem:[%s634 + $0x390] sm:$0xff]
        %v2447 = vld [vmem:[%s634 + $0x398] sm:$0xff]
        %v2448 = vld [vmem:[%s634 + $0x3a0] sm:$0xff]
        %v2449 = vld [vmem:[%s634 + $0x3a8] sm:$0xff]
        %v2450 = vld [vmem:[%s634 + $0x3b0] sm:$0xff]
        %v2451 = vld [vmem:[%s634 + $0x3b8] sm:$0xff]
        %v2452 = vld [vmem:[%s634 + $0x3c0] sm:$0xff]
        %v2453 = vld [vmem:[%s634 + $0x3c8] sm:$0xff]
        %v2454 = vld [vmem:[%s634 + $0x3d0] sm:$0xff]
        %v2455 = vld [vmem:[%s634 + $0x3d8] sm:$0xff]
        %v2456 = vld [vmem:[%s634 + $0x3e0] sm:$0xff]
        %v2457 = vld [vmem:[%s634 + $0x3e8] sm:$0xff]
        %v2458 = vld [vmem:[%s634 + $0x3f0] sm:$0xff]
        %v2459 = vld [vmem:[%s634 + $0x3f8] sm:$0xff]
        %v2588 = vunpack.c.l.b16 %v2332
        %v2589 = vunpack.c.h.b16 %v2332
        %v2590 = vunpack.c.l.b16 %v2333
        %v2591 = vunpack.c.h.b16 %v2333
        %v2592 = vunpack.c.l.b16 %v2334
        %v2593 = vunpack.c.h.b16 %v2334
        %v2594 = vunpack.c.l.b16 %v2335
        %v2595 = vunpack.c.h.b16 %v2335
        %v2596 = vunpack.c.l.b16 %v2336
        %v2597 = vunpack.c.h.b16 %v2336
        %v2598 = vunpack.c.l.b16 %v2337
        %v2599 = vunpack.c.h.b16 %v2337
        %v2600 = vunpack.c.l.b16 %v2338
        %v2601 = vunpack.c.h.b16 %v2338
        %v2602 = vunpack.c.l.b16 %v2339
        %v2603 = vunpack.c.h.b16 %v2339
        %v2604 = vunpack.c.l.b16 %v2340
        %v2605 = vunpack.c.h.b16 %v2340
        %v2606 = vunpack.c.l.b16 %v2341
        %v2607 = vunpack.c.h.b16 %v2341
        %v2608 = vunpack.c.l.b16 %v2342
        %v2609 = vunpack.c.h.b16 %v2342
        %v2610 = vunpack.c.l.b16 %v2343
        %v2611 = vunpack.c.h.b16 %v2343
        %v2612 = vunpack.c.l.b16 %v2344
        %v2613 = vunpack.c.h.b16 %v2344
        %v2614 = vunpack.c.l.b16 %v2345
        %v2615 = vunpack.c.h.b16 %v2345
        %v2616 = vunpack.c.l.b16 %v2346
        %v2617 = vunpack.c.h.b16 %v2346
        %v2618 = vunpack.c.l.b16 %v2347
        %v2619 = vunpack.c.h.b16 %v2347
        %v2620 = vunpack.c.l.b16 %v2348
        %v2621 = vunpack.c.h.b16 %v2348
        %v2622 = vunpack.c.l.b16 %v2349
        %v2623 = vunpack.c.h.b16 %v2349
        %v2624 = vunpack.c.l.b16 %v2350
        %v2625 = vunpack.c.h.b16 %v2350
        %v2626 = vunpack.c.l.b16 %v2351
        %v2627 = vunpack.c.h.b16 %v2351
        %v2628 = vunpack.c.l.b16 %v2352
        %v2629 = vunpack.c.h.b16 %v2352
        %v2630 = vunpack.c.l.b16 %v2353
        %v2631 = vunpack.c.h.b16 %v2353
        %v2632 = vunpack.c.l.b16 %v2354
        %v2633 = vunpack.c.h.b16 %v2354
        %v2634 = vunpack.c.l.b16 %v2355
        %v2635 = vunpack.c.h.b16 %v2355
        %v2636 = vunpack.c.l.b16 %v2356
        %v2637 = vunpack.c.h.b16 %v2356
        %v2638 = vunpack.c.l.b16 %v2357
        %v2639 = vunpack.c.h.b16 %v2357
        %v2640 = vunpack.c.l.b16 %v2358
        %v2641 = vunpack.c.h.b16 %v2358
        %v2642 = vunpack.c.l.b16 %v2359
        %v2643 = vunpack.c.h.b16 %v2359
        %v2644 = vunpack.c.l.b16 %v2360
        %v2645 = vunpack.c.h.b16 %v2360
        %v2646 = vunpack.c.l.b16 %v2361
        %v2647 = vunpack.c.h.b16 %v2361
        %v2648 = vunpack.c.l.b16 %v2362
        %v2649 = vunpack.c.h.b16 %v2362
        %v2650 = vunpack.c.l.b16 %v2363
        %v2651 = vunpack.c.h.b16 %v2363
        %v2652 = vunpack.c.l.b16 %v2364
        %v2653 = vunpack.c.h.b16 %v2364
        %v2654 = vunpack.c.l.b16 %v2365
        %v2655 = vunpack.c.h.b16 %v2365
        %v2656 = vunpack.c.l.b16 %v2366
        %v2657 = vunpack.c.h.b16 %v2366
        %v2658 = vunpack.c.l.b16 %v2367
        %v2659 = vunpack.c.h.b16 %v2367
        %v2660 = vunpack.c.l.b16 %v2368
        %v2661 = vunpack.c.h.b16 %v2368
        %v2662 = vunpack.c.l.b16 %v2369
        %v2663 = vunpack.c.h.b16 %v2369
        %v2664 = vunpack.c.l.b16 %v2370
        %v2665 = vunpack.c.h.b16 %v2370
        %v2666 = vunpack.c.l.b16 %v2371
        %v2667 = vunpack.c.h.b16 %v2371
        %v2668 = vunpack.c.l.b16 %v2372
        %v2669 = vunpack.c.h.b16 %v2372
        %v2670 = vunpack.c.l.b16 %v2373
        %v2671 = vunpack.c.h.b16 %v2373
        %v2672 = vunpack.c.l.b16 %v2374
        %v2673 = vunpack.c.h.b16 %v2374
        %v2674 = vunpack.c.l.b16 %v2375
        %v2675 = vunpack.c.h.b16 %v2375
        %v2676 = vunpack.c.l.b16 %v2376
        %v2677 = vunpack.c.h.b16 %v2376
        %v2678 = vunpack.c.l.b16 %v2377
        %v2679 = vunpack.c.h.b16 %v2377
        %v2680 = vunpack.c.l.b16 %v2378
        %v2681 = vunpack.c.h.b16 %v2378
        %v2682 = vunpack.c.l.b16 %v2379
        %v2683 = vunpack.c.h.b16 %v2379
        %v2684 = vunpack.c.l.b16 %v2380
        %v2685 = vunpack.c.h.b16 %v2380
        %v2686 = vunpack.c.l.b16 %v2381
        %v2687 = vunpack.c.h.b16 %v2381
        %v2688 = vunpack.c.l.b16 %v2382
        %v2689 = vunpack.c.h.b16 %v2382
        %v2690 = vunpack.c.l.b16 %v2383
        %v2691 = vunpack.c.h.b16 %v2383
        %v2692 = vunpack.c.l.b16 %v2384
        %v2693 = vunpack.c.h.b16 %v2384
        %v2694 = vunpack.c.l.b16 %v2385
        %v2695 = vunpack.c.h.b16 %v2385
        %v2696 = vunpack.c.l.b16 %v2386
        %v2697 = vunpack.c.h.b16 %v2386
        %v2698 = vunpack.c.l.b16 %v2387
        %v2699 = vunpack.c.h.b16 %v2387
        %v2700 = vunpack.c.l.b16 %v2388
        %v2701 = vunpack.c.h.b16 %v2388
        %v2702 = vunpack.c.l.b16 %v2389
        %v2703 = vunpack.c.h.b16 %v2389
        %v2704 = vunpack.c.l.b16 %v2390
        %v2705 = vunpack.c.h.b16 %v2390
        %v2706 = vunpack.c.l.b16 %v2391
        %v2707 = vunpack.c.h.b16 %v2391
        %v2708 = vunpack.c.l.b16 %v2392
        %v2709 = vunpack.c.h.b16 %v2392
        %v2710 = vunpack.c.l.b16 %v2393
        %v2711 = vunpack.c.h.b16 %v2393
        %v2712 = vunpack.c.l.b16 %v2394
        %v2713 = vunpack.c.h.b16 %v2394
        %v2714 = vunpack.c.l.b16 %v2395
        %v2715 = vunpack.c.h.b16 %v2395
        %v2716 = vunpack.c.l.b16 %v2396
        %v2717 = vunpack.c.h.b16 %v2396
        %v2718 = vunpack.c.l.b16 %v2397
        %v2719 = vunpack.c.h.b16 %v2397
        %v2720 = vunpack.c.l.b16 %v2398
        %v2721 = vunpack.c.h.b16 %v2398
        %v2722 = vunpack.c.l.b16 %v2399
        %v2723 = vunpack.c.h.b16 %v2399
        %v2724 = vunpack.c.l.b16 %v2400
        %v2725 = vunpack.c.h.b16 %v2400
        %v2726 = vunpack.c.l.b16 %v2401
        %v2727 = vunpack.c.h.b16 %v2401
        %v2728 = vunpack.c.l.b16 %v2402
        %v2729 = vunpack.c.h.b16 %v2402
        %v2730 = vunpack.c.l.b16 %v2403
        %v2731 = vunpack.c.h.b16 %v2403
        %v2732 = vunpack.c.l.b16 %v2404
        %v2733 = vunpack.c.h.b16 %v2404
        %v2734 = vunpack.c.l.b16 %v2405
        %v2735 = vunpack.c.h.b16 %v2405
        %v2736 = vunpack.c.l.b16 %v2406
        %v2737 = vunpack.c.h.b16 %v2406
        %v2738 = vunpack.c.l.b16 %v2407
        %v2739 = vunpack.c.h.b16 %v2407
        %v2740 = vunpack.c.l.b16 %v2408
        %v2741 = vunpack.c.h.b16 %v2408
        %v2742 = vunpack.c.l.b16 %v2409
        %v2743 = vunpack.c.h.b16 %v2409
        %v2744 = vunpack.c.l.b16 %v2410
        %v2745 = vunpack.c.h.b16 %v2410
        %v2746 = vunpack.c.l.b16 %v2411
        %v2747 = vunpack.c.h.b16 %v2411
        %v2748 = vunpack.c.l.b16 %v2412
        %v2749 = vunpack.c.h.b16 %v2412
        %v2750 = vunpack.c.l.b16 %v2413
        %v2751 = vunpack.c.h.b16 %v2413
        %v2752 = vunpack.c.l.b16 %v2414
        %v2753 = vunpack.c.h.b16 %v2414
        %v2754 = vunpack.c.l.b16 %v2415
        %v2755 = vunpack.c.h.b16 %v2415
        %v2756 = vunpack.c.l.b16 %v2416
        %v2757 = vunpack.c.h.b16 %v2416
        %v2758 = vunpack.c.l.b16 %v2417
        %v2759 = vunpack.c.h.b16 %v2417
        %v2760 = vunpack.c.l.b16 %v2418
        %v2761 = vunpack.c.h.b16 %v2418
        %v2762 = vunpack.c.l.b16 %v2419
        %v2763 = vunpack.c.h.b16 %v2419
        %v2764 = vunpack.c.l.b16 %v2420
        %v2765 = vunpack.c.h.b16 %v2420
        %v2766 = vunpack.c.l.b16 %v2421
        %v2767 = vunpack.c.h.b16 %v2421
        %v2768 = vunpack.c.l.b16 %v2422
        %v2769 = vunpack.c.h.b16 %v2422
        %v2770 = vunpack.c.l.b16 %v2423
        %v2771 = vunpack.c.h.b16 %v2423
        %v2772 = vunpack.c.l.b16 %v2424
        %v2773 = vunpack.c.h.b16 %v2424
        %v2774 = vunpack.c.l.b16 %v2425
        %v2775 = vunpack.c.h.b16 %v2425
        %v2776 = vunpack.c.l.b16 %v2426
        %v2777 = vunpack.c.h.b16 %v2426
        %v2778 = vunpack.c.l.b16 %v2427
        %v2779 = vunpack.c.h.b16 %v2427
        %v2780 = vunpack.c.l.b16 %v2428
        %v2781 = vunpack.c.h.b16 %v2428
        %v2782 = vunpack.c.l.b16 %v2429
        %v2783 = vunpack.c.h.b16 %v2429
        %v2784 = vunpack.c.l.b16 %v2430
        %v2785 = vunpack.c.h.b16 %v2430
        %v2786 = vunpack.c.l.b16 %v2431
        %v2787 = vunpack.c.h.b16 %v2431
        %v2788 = vunpack.c.l.b16 %v2432
        %v2789 = vunpack.c.h.b16 %v2432
        %v2790 = vunpack.c.l.b16 %v2433
        %v2791 = vunpack.c.h.b16 %v2433
        %v2792 = vunpack.c.l.b16 %v2434
        %v2793 = vunpack.c.h.b16 %v2434
        %v2794 = vunpack.c.l.b16 %v2435
        %v2795 = vunpack.c.h.b16 %v2435
        %v2796 = vunpack.c.l.b16 %v2436
        %v2797 = vunpack.c.h.b16 %v2436
        %v2798 = vunpack.c.l.b16 %v2437
        %v2799 = vunpack.c.h.b16 %v2437
        %v2800 = vunpack.c.l.b16 %v2438
        %v2801 = vunpack.c.h.b16 %v2438
        %v2802 = vunpack.c.l.b16 %v2439
        %v2803 = vunpack.c.h.b16 %v2439
        %v2804 = vunpack.c.l.b16 %v2440
        %v2805 = vunpack.c.h.b16 %v2440
        %v2806 = vunpack.c.l.b16 %v2441
        %v2807 = vunpack.c.h.b16 %v2441
        %v2808 = vunpack.c.l.b16 %v2442
        %v2809 = vunpack.c.h.b16 %v2442
        %v2810 = vunpack.c.l.b16 %v2443
        %v2811 = vunpack.c.h.b16 %v2443
        %v2812 = vunpack.c.l.b16 %v2444
        %v2813 = vunpack.c.h.b16 %v2444
        %v2814 = vunpack.c.l.b16 %v2445
        %v2815 = vunpack.c.h.b16 %v2445
        %v2816 = vunpack.c.l.b16 %v2446
        %v2817 = vunpack.c.h.b16 %v2446
        %v2818 = vunpack.c.l.b16 %v2447
        %v2819 = vunpack.c.h.b16 %v2447
        %v2820 = vunpack.c.l.b16 %v2448
        %v2821 = vunpack.c.h.b16 %v2448
        %v2822 = vunpack.c.l.b16 %v2449
        %v2823 = vunpack.c.h.b16 %v2449
        %v2824 = vunpack.c.l.b16 %v2450
        %v2825 = vunpack.c.h.b16 %v2450
        %v2826 = vunpack.c.l.b16 %v2451
        %v2827 = vunpack.c.h.b16 %v2451
        %v2828 = vunpack.c.l.b16 %v2452
        %v2829 = vunpack.c.h.b16 %v2452
        %v2830 = vunpack.c.l.b16 %v2453
        %v2831 = vunpack.c.h.b16 %v2453
        %v2832 = vunpack.c.l.b16 %v2454
        %v2833 = vunpack.c.h.b16 %v2454
        %v2834 = vunpack.c.l.b16 %v2455
        %v2835 = vunpack.c.h.b16 %v2455
        %v2836 = vunpack.c.l.b16 %v2456
        %v2837 = vunpack.c.h.b16 %v2456
        %v2838 = vunpack.c.l.b16 %v2457
        %v2839 = vunpack.c.h.b16 %v2457
        %v2840 = vunpack.c.l.b16 %v2458
        %v2841 = vunpack.c.h.b16 %v2458
        %v2842 = vunpack.c.l.b16 %v2459
        %v2843 = vunpack.c.h.b16 %v2459
        %v2844 = vpack.c.b16 %v2596, %v2588
        %v2845 = vpack.c.b16 %v2597, %v2589
        %v2846 = vpack.c.b16 %v2598, %v2590
        %v2847 = vpack.c.b16 %v2599, %v2591
        %v2848 = vpack.c.b16 %v2600, %v2592
        %v2849 = vpack.c.b16 %v2601, %v2593
        %v2850 = vpack.c.b16 %v2602, %v2594
        %v2851 = vpack.c.b16 %v2603, %v2595
        %v2852 = vpack.c.b16 %v2612, %v2604
        %v2853 = vpack.c.b16 %v2613, %v2605
        %v2854 = vpack.c.b16 %v2614, %v2606
        %v2855 = vpack.c.b16 %v2615, %v2607
        %v2856 = vpack.c.b16 %v2616, %v2608
        %v2857 = vpack.c.b16 %v2617, %v2609
        %v2858 = vpack.c.b16 %v2618, %v2610
        %v2859 = vpack.c.b16 %v2619, %v2611
        %v2860 = vpack.c.b16 %v2628, %v2620
        %v2861 = vpack.c.b16 %v2629, %v2621
        %v2862 = vpack.c.b16 %v2630, %v2622
        %v2863 = vpack.c.b16 %v2631, %v2623
        %v2864 = vpack.c.b16 %v2632, %v2624
        %v2865 = vpack.c.b16 %v2633, %v2625
        %v2866 = vpack.c.b16 %v2634, %v2626
        %v2867 = vpack.c.b16 %v2635, %v2627
        %v2868 = vpack.c.b16 %v2644, %v2636
        %v2869 = vpack.c.b16 %v2645, %v2637
        %v2870 = vpack.c.b16 %v2646, %v2638
        %v2871 = vpack.c.b16 %v2647, %v2639
        %v2872 = vpack.c.b16 %v2648, %v2640
        %v2873 = vpack.c.b16 %v2649, %v2641
        %v2874 = vpack.c.b16 %v2650, %v2642
        %v2875 = vpack.c.b16 %v2651, %v2643
        %v2876 = vpack.c.b16 %v2660, %v2652
        %v2877 = vpack.c.b16 %v2661, %v2653
        %v2878 = vpack.c.b16 %v2662, %v2654
        %v2879 = vpack.c.b16 %v2663, %v2655
        %v2880 = vpack.c.b16 %v2664, %v2656
        %v2881 = vpack.c.b16 %v2665, %v2657
        %v2882 = vpack.c.b16 %v2666, %v2658
        %v2883 = vpack.c.b16 %v2667, %v2659
        %v2884 = vpack.c.b16 %v2676, %v2668
        %v2885 = vpack.c.b16 %v2677, %v2669
        %v2886 = vpack.c.b16 %v2678, %v2670
        %v2887 = vpack.c.b16 %v2679, %v2671
        %v2888 = vpack.c.b16 %v2680, %v2672
        %v2889 = vpack.c.b16 %v2681, %v2673
        %v2890 = vpack.c.b16 %v2682, %v2674
        %v2891 = vpack.c.b16 %v2683, %v2675
        %v2892 = vpack.c.b16 %v2692, %v2684
        %v2893 = vpack.c.b16 %v2693, %v2685
        %v2894 = vpack.c.b16 %v2694, %v2686
        %v2895 = vpack.c.b16 %v2695, %v2687
        %v2896 = vpack.c.b16 %v2696, %v2688
        %v2897 = vpack.c.b16 %v2697, %v2689
        %v2898 = vpack.c.b16 %v2698, %v2690
        %v2899 = vpack.c.b16 %v2699, %v2691
        %v2900 = vpack.c.b16 %v2708, %v2700
        %v2901 = vpack.c.b16 %v2709, %v2701
        %v2902 = vpack.c.b16 %v2710, %v2702
        %v2903 = vpack.c.b16 %v2711, %v2703
        %v2904 = vpack.c.b16 %v2712, %v2704
        %v2905 = vpack.c.b16 %v2713, %v2705
        %v2906 = vpack.c.b16 %v2714, %v2706
        %v2907 = vpack.c.b16 %v2715, %v2707
        %v2908 = vpack.c.b16 %v2724, %v2716
        %v2909 = vpack.c.b16 %v2725, %v2717
        %v2910 = vpack.c.b16 %v2726, %v2718
        %v2911 = vpack.c.b16 %v2727, %v2719
        %v2912 = vpack.c.b16 %v2728, %v2720
        %v2913 = vpack.c.b16 %v2729, %v2721
        %v2914 = vpack.c.b16 %v2730, %v2722
        %v2915 = vpack.c.b16 %v2731, %v2723
        %v2916 = vpack.c.b16 %v2740, %v2732
        %v2917 = vpack.c.b16 %v2741, %v2733
        %v2918 = vpack.c.b16 %v2742, %v2734
        %v2919 = vpack.c.b16 %v2743, %v2735
        %v2920 = vpack.c.b16 %v2744, %v2736
        %v2921 = vpack.c.b16 %v2745, %v2737
        %v2922 = vpack.c.b16 %v2746, %v2738
        %v2923 = vpack.c.b16 %v2747, %v2739
        %v2924 = vpack.c.b16 %v2756, %v2748
        %v2925 = vpack.c.b16 %v2757, %v2749
        %v2926 = vpack.c.b16 %v2758, %v2750
        %v2927 = vpack.c.b16 %v2759, %v2751
        %v2928 = vpack.c.b16 %v2760, %v2752
        %v2929 = vpack.c.b16 %v2761, %v2753
        %v2930 = vpack.c.b16 %v2762, %v2754
        %v2931 = vpack.c.b16 %v2763, %v2755
        %v2932 = vpack.c.b16 %v2772, %v2764
        %v2933 = vpack.c.b16 %v2773, %v2765
        %v2934 = vpack.c.b16 %v2774, %v2766
        %v2935 = vpack.c.b16 %v2775, %v2767
        %v2936 = vpack.c.b16 %v2776, %v2768
        %v2937 = vpack.c.b16 %v2777, %v2769
        %v2938 = vpack.c.b16 %v2778, %v2770
        %v2939 = vpack.c.b16 %v2779, %v2771
        %v2940 = vpack.c.b16 %v2788, %v2780
        %v2941 = vpack.c.b16 %v2789, %v2781
        %v2942 = vpack.c.b16 %v2790, %v2782
        %v2943 = vpack.c.b16 %v2791, %v2783
        %v2944 = vpack.c.b16 %v2792, %v2784
        %v2945 = vpack.c.b16 %v2793, %v2785
        %v2946 = vpack.c.b16 %v2794, %v2786
        %v2947 = vpack.c.b16 %v2795, %v2787
        %v2948 = vpack.c.b16 %v2804, %v2796
        %v2949 = vpack.c.b16 %v2805, %v2797
        %v2950 = vpack.c.b16 %v2806, %v2798
        %v2951 = vpack.c.b16 %v2807, %v2799
        %v2952 = vpack.c.b16 %v2808, %v2800
        %v2953 = vpack.c.b16 %v2809, %v2801
        %v2954 = vpack.c.b16 %v2810, %v2802
        %v2955 = vpack.c.b16 %v2811, %v2803
        %v2956 = vpack.c.b16 %v2820, %v2812
        %v2957 = vpack.c.b16 %v2821, %v2813
        %v2958 = vpack.c.b16 %v2822, %v2814
        %v2959 = vpack.c.b16 %v2823, %v2815
        %v2960 = vpack.c.b16 %v2824, %v2816
        %v2961 = vpack.c.b16 %v2825, %v2817
        %v2962 = vpack.c.b16 %v2826, %v2818
        %v2963 = vpack.c.b16 %v2827, %v2819
        %v2964 = vpack.c.b16 %v2836, %v2828
        %v2965 = vpack.c.b16 %v2837, %v2829
        %v2966 = vpack.c.b16 %v2838, %v2830
        %v2967 = vpack.c.b16 %v2839, %v2831
        %v2968 = vpack.c.b16 %v2840, %v2832
        %v2969 = vpack.c.b16 %v2841, %v2833
        %v2970 = vpack.c.b16 %v2842, %v2834
        %v2971 = vpack.c.b16 %v2843, %v2835
        %3100 = vmatpush.bf16.msra.mxu0 %v2900
        %3101 = vmatpush.bf16.msra.mxu0 %v2892
        %3102 = vmatpush.bf16.msra.mxu0 %v2884
        %3103 = vmatpush.bf16.msra.mxu0 %v2876
        %3104 = vmatpush.bf16.msra.mxu0 %v2868
        %3105 = vmatpush.bf16.msra.mxu0 %v2860
        %3106 = vmatpush.bf16.msra.mxu0 %v2852
        %3107 = vmatpush.bf16.msra.mxu0 %v2844
        %3108 = vmatmul.bf16.gmra.mxu0 %v2330
        %v3109 = vpop.f32.mrf.mxu0
        %v3110 = vadd.f32 0.0, %v3109
        %v3111 = vpop.f32.mrf.mxu0
        %v3112 = vadd.f32 0.0, %v3111
        %3113 = vdwg.mxu0
        %3114 = vmatpush.bf16.msra.mxu0 %v2964
        %3115 = vmatpush.bf16.msra.mxu0 %v2956
        %3116 = vmatpush.bf16.msra.mxu0 %v2948
        %3117 = vmatpush.bf16.msra.mxu0 %v2940
        %3118 = vmatpush.bf16.msra.mxu0 %v2932
        %3119 = vmatpush.bf16.msra.mxu0 %v2924
        %3120 = vmatpush.bf16.msra.mxu0 %v2916
        %3121 = vmatpush.bf16.msra.mxu0 %v2908
        %3122 = vmatmul.bf16.gmra.mxu0 %v2331
        %v3123 = vpop.f32.mrf.mxu0
        %v3124 = vadd.f32 %v3110, %v3123
        %v3125 = vpop.f32.mrf.mxu0
        %v3126 = vadd.f32 %v3112, %v3125
        %3127 = vdwg.mxu0
        %3128 = vmatpush.bf16.msra.mxu0 %v2901
        %3129 = vmatpush.bf16.msra.mxu0 %v2893
        %3130 = vmatpush.bf16.msra.mxu0 %v2885
        %3131 = vmatpush.bf16.msra.mxu0 %v2877
        %3132 = vmatpush.bf16.msra.mxu0 %v2869
        %3133 = vmatpush.bf16.msra.mxu0 %v2861
        %3134 = vmatpush.bf16.msra.mxu0 %v2853
        %3135 = vmatpush.bf16.msra.mxu0 %v2845
        %3136 = vmatmul.bf16.gmra.mxu0 %v2330
        %v3137 = vpop.f32.mrf.mxu0
        %v3138 = vadd.f32 0.0, %v3137
        %v3139 = vpop.f32.mrf.mxu0
        %v3140 = vadd.f32 0.0, %v3139
        %3141 = vdwg.mxu0
        %3142 = vmatpush.bf16.msra.mxu0 %v2965
        %3143 = vmatpush.bf16.msra.mxu0 %v2957
        %3144 = vmatpush.bf16.msra.mxu0 %v2949
        %3145 = vmatpush.bf16.msra.mxu0 %v2941
        %3146 = vmatpush.bf16.msra.mxu0 %v2933
        %3147 = vmatpush.bf16.msra.mxu0 %v2925
        %3148 = vmatpush.bf16.msra.mxu0 %v2917
        %3149 = vmatpush.bf16.msra.mxu0 %v2909
        %3150 = vmatmul.bf16.gmra.mxu0 %v2331
        %v3151 = vpop.f32.mrf.mxu0
        %v3152 = vadd.f32 %v3138, %v3151
        %v3153 = vpop.f32.mrf.mxu0
        %v3154 = vadd.f32 %v3140, %v3153
        %3155 = vdwg.mxu0
        %3156 = vmatpush.bf16.msra.mxu0 %v2902
        %3157 = vmatpush.bf16.msra.mxu0 %v2894
        %3158 = vmatpush.bf16.msra.mxu0 %v2886
        %3159 = vmatpush.bf16.msra.mxu0 %v2878
        %3160 = vmatpush.bf16.msra.mxu0 %v2870
        %3161 = vmatpush.bf16.msra.mxu0 %v2862
        %3162 = vmatpush.bf16.msra.mxu0 %v2854
        %3163 = vmatpush.bf16.msra.mxu0 %v2846
        %3164 = vmatmul.bf16.gmra.mxu0 %v2330
        %v3165 = vpop.f32.mrf.mxu0
        %v3166 = vadd.f32 0.0, %v3165
        %v3167 = vpop.f32.mrf.mxu0
        %v3168 = vadd.f32 0.0, %v3167
        %3169 = vdwg.mxu0
        %3170 = vmatpush.bf16.msra.mxu0 %v2966
        %3171 = vmatpush.bf16.msra.mxu0 %v2958
        %3172 = vmatpush.bf16.msra.mxu0 %v2950
        %3173 = vmatpush.bf16.msra.mxu0 %v2942
        %3174 = vmatpush.bf16.msra.mxu0 %v2934
        %3175 = vmatpush.bf16.msra.mxu0 %v2926
        %3176 = vmatpush.bf16.msra.mxu0 %v2918
        %3177 = vmatpush.bf16.msra.mxu0 %v2910
        %3178 = vmatmul.bf16.gmra.mxu0 %v2331
        %v3179 = vpop.f32.mrf.mxu0
        %v3180 = vadd.f32 %v3166, %v3179
        %v3181 = vpop.f32.mrf.mxu0
        %v3182 = vadd.f32 %v3168, %v3181
        %3183 = vdwg.mxu0
        %3184 = vmatpush.bf16.msra.mxu0 %v2903
        %3185 = vmatpush.bf16.msra.mxu0 %v2895
        %3186 = vmatpush.bf16.msra.mxu0 %v2887
        %3187 = vmatpush.bf16.msra.mxu0 %v2879
        %3188 = vmatpush.bf16.msra.mxu0 %v2871
        %3189 = vmatpush.bf16.msra.mxu0 %v2863
        %3190 = vmatpush.bf16.msra.mxu0 %v2855
        %3191 = vmatpush.bf16.msra.mxu0 %v2847
        %3192 = vmatmul.bf16.gmra.mxu0 %v2330
        %v3193 = vpop.f32.mrf.mxu0
        %v3194 = vadd.f32 0.0, %v3193
        %v3195 = vpop.f32.mrf.mxu0
        %v3196 = vadd.f32 0.0, %v3195
        %3197 = vdwg.mxu0
        %3198 = vmatpush.bf16.msra.mxu0 %v2967
        %3199 = vmatpush.bf16.msra.mxu0 %v2959
        %3200 = vmatpush.bf16.msra.mxu0 %v2951
        %3201 = vmatpush.bf16.msra.mxu0 %v2943
        %3202 = vmatpush.bf16.msra.mxu0 %v2935
        %3203 = vmatpush.bf16.msra.mxu0 %v2927
        %3204 = vmatpush.bf16.msra.mxu0 %v2919
        %3205 = vmatpush.bf16.msra.mxu0 %v2911
        %3206 = vmatmul.bf16.gmra.mxu0 %v2331
        %v3207 = vpop.f32.mrf.mxu0
        %v3208 = vadd.f32 %v3194, %v3207
        %v3209 = vpop.f32.mrf.mxu0
        %v3210 = vadd.f32 %v3196, %v3209
        %3211 = vdwg.mxu0
        %3212 = vmatpush.bf16.msra.mxu0 %v2904
        %3213 = vmatpush.bf16.msra.mxu0 %v2896
        %3214 = vmatpush.bf16.msra.mxu0 %v2888
        %3215 = vmatpush.bf16.msra.mxu0 %v2880
        %3216 = vmatpush.bf16.msra.mxu0 %v2872
        %3217 = vmatpush.bf16.msra.mxu0 %v2864
        %3218 = vmatpush.bf16.msra.mxu0 %v2856
        %3219 = vmatpush.bf16.msra.mxu0 %v2848
        %3220 = vmatmul.bf16.gmra.mxu0 %v2330
        %v3221 = vpop.f32.mrf.mxu0
        %v3222 = vadd.f32 0.0, %v3221
        %v3223 = vpop.f32.mrf.mxu0
        %v3224 = vadd.f32 0.0, %v3223
        %3225 = vdwg.mxu0
        %3226 = vmatpush.bf16.msra.mxu0 %v2968
        %3227 = vmatpush.bf16.msra.mxu0 %v2960
        %3228 = vmatpush.bf16.msra.mxu0 %v2952
        %3229 = vmatpush.bf16.msra.mxu0 %v2944
        %3230 = vmatpush.bf16.msra.mxu0 %v2936
        %3231 = vmatpush.bf16.msra.mxu0 %v2928
        %3232 = vmatpush.bf16.msra.mxu0 %v2920
        %3233 = vmatpush.bf16.msra.mxu0 %v2912
        %3234 = vmatmul.bf16.gmra.mxu0 %v2331
        %v3235 = vpop.f32.mrf.mxu0
        %v3236 = vadd.f32 %v3222, %v3235
        %v3237 = vpop.f32.mrf.mxu0
        %v3238 = vadd.f32 %v3224, %v3237
        %3239 = vdwg.mxu0
        %3240 = vmatpush.bf16.msra.mxu0 %v2905
        %3241 = vmatpush.bf16.msra.mxu0 %v2897
        %3242 = vmatpush.bf16.msra.mxu0 %v2889
        %3243 = vmatpush.bf16.msra.mxu0 %v2881
        %3244 = vmatpush.bf16.msra.mxu0 %v2873
        %3245 = vmatpush.bf16.msra.mxu0 %v2865
        %3246 = vmatpush.bf16.msra.mxu0 %v2857
        %3247 = vmatpush.bf16.msra.mxu0 %v2849
        %3248 = vmatmul.bf16.gmra.mxu0 %v2330
        %v3249 = vpop.f32.mrf.mxu0
        %v3250 = vadd.f32 0.0, %v3249
        %v3251 = vpop.f32.mrf.mxu0
        %v3252 = vadd.f32 0.0, %v3251
        %3253 = vdwg.mxu0
        %3254 = vmatpush.bf16.msra.mxu0 %v2969
        %3255 = vmatpush.bf16.msra.mxu0 %v2961
        %3256 = vmatpush.bf16.msra.mxu0 %v2953
        %3257 = vmatpush.bf16.msra.mxu0 %v2945
        %3258 = vmatpush.bf16.msra.mxu0 %v2937
        %3259 = vmatpush.bf16.msra.mxu0 %v2929
        %3260 = vmatpush.bf16.msra.mxu0 %v2921
        %3261 = vmatpush.bf16.msra.mxu0 %v2913
        %3262 = vmatmul.bf16.gmra.mxu0 %v2331
        %v3263 = vpop.f32.mrf.mxu0
        %v3264 = vadd.f32 %v3250, %v3263
        %v3265 = vpop.f32.mrf.mxu0
        %v3266 = vadd.f32 %v3252, %v3265
        %3267 = vdwg.mxu0
        %3268 = vmatpush.bf16.msra.mxu0 %v2906
        %3269 = vmatpush.bf16.msra.mxu0 %v2898
        %3270 = vmatpush.bf16.msra.mxu0 %v2890
        %3271 = vmatpush.bf16.msra.mxu0 %v2882
        %3272 = vmatpush.bf16.msra.mxu0 %v2874
        %3273 = vmatpush.bf16.msra.mxu0 %v2866
        %3274 = vmatpush.bf16.msra.mxu0 %v2858
        %3275 = vmatpush.bf16.msra.mxu0 %v2850
        %3276 = vmatmul.bf16.gmra.mxu0 %v2330
        %v3277 = vpop.f32.mrf.mxu0
        %v3278 = vadd.f32 0.0, %v3277
        %v3279 = vpop.f32.mrf.mxu0
        %v3280 = vadd.f32 0.0, %v3279
        %3281 = vdwg.mxu0
        %3282 = vmatpush.bf16.msra.mxu0 %v2970
        %3283 = vmatpush.bf16.msra.mxu0 %v2962
        %3284 = vmatpush.bf16.msra.mxu0 %v2954
        %3285 = vmatpush.bf16.msra.mxu0 %v2946
        %3286 = vmatpush.bf16.msra.mxu0 %v2938
        %3287 = vmatpush.bf16.msra.mxu0 %v2930
        %3288 = vmatpush.bf16.msra.mxu0 %v2922
        %3289 = vmatpush.bf16.msra.mxu0 %v2914
        %3290 = vmatmul.bf16.gmra.mxu0 %v2331
        %v3291 = vpop.f32.mrf.mxu0
        %v3292 = vadd.f32 %v3278, %v3291
        %v3293 = vpop.f32.mrf.mxu0
        %v3294 = vadd.f32 %v3280, %v3293
        %3295 = vdwg.mxu0
        %3296 = vmatpush.bf16.msra.mxu0 %v2907
        %3297 = vmatpush.bf16.msra.mxu0 %v2899
        %3298 = vmatpush.bf16.msra.mxu0 %v2891
        %3299 = vmatpush.bf16.msra.mxu0 %v2883
        %3300 = vmatpush.bf16.msra.mxu0 %v2875
        %3301 = vmatpush.bf16.msra.mxu0 %v2867
        %3302 = vmatpush.bf16.msra.mxu0 %v2859
        %3303 = vmatpush.bf16.msra.mxu0 %v2851
        %3304 = vmatmul.bf16.gmra.mxu0 %v2330
        %v3305 = vpop.f32.mrf.mxu0
        %v3306 = vadd.f32 0.0, %v3305
        %v3307 = vpop.f32.mrf.mxu0
        %v3308 = vadd.f32 0.0, %v3307
        %3309 = vdwg.mxu0
        %3310 = vmatpush.bf16.msra.mxu0 %v2971
        %3311 = vmatpush.bf16.msra.mxu0 %v2963
        %3312 = vmatpush.bf16.msra.mxu0 %v2955
        %3313 = vmatpush.bf16.msra.mxu0 %v2947
        %3314 = vmatpush.bf16.msra.mxu0 %v2939
        %3315 = vmatpush.bf16.msra.mxu0 %v2931
        %3316 = vmatpush.bf16.msra.mxu0 %v2923
        %3317 = vmatpush.bf16.msra.mxu0 %v2915
        %3318 = vmatmul.bf16.gmra.mxu0 %v2331
        %v3319 = vpop.f32.mrf.mxu0
        %v3320 = vadd.f32 %v3306, %v3319
        %v3321 = vpop.f32.mrf.mxu0
        %v3322 = vadd.f32 %v3308, %v3321
        %3323 = vdwg.mxu0
        %v3324 = vmul.f32 %v3124, %v3124
        %v3325 = vmul.f32 %v3152, %v3152
        %v3326 = vmul.f32 %v3180, %v3180
        %v3327 = vmul.f32 %v3208, %v3208
        %v3328 = vmul.f32 %v3126, %v3126
        %v3329 = vmul.f32 %v3154, %v3154
        %v3330 = vmul.f32 %v3182, %v3182
        %v3331 = vmul.f32 %v3210, %v3210
        %v3332 = vmul.f32 %v3124, %v3324
        %v3333 = vmul.f32 %v3152, %v3325
        %v3334 = vmul.f32 %v3180, %v3326
        %v3335 = vmul.f32 %v3208, %v3327
        %v3336 = vmul.f32 %v3126, %v3328
        %v3337 = vmul.f32 %v3154, %v3329
        %v3338 = vmul.f32 %v3182, %v3330
        %v3339 = vmul.f32 %v3210, %v3331
        %v3340 = vmul.f32 %v3332, 0.044715
        %v3341 = vmul.f32 %v3333, 0.044715
        %v3342 = vmul.f32 %v3334, 0.044715
        %v3343 = vmul.f32 %v3335, 0.044715
        %v3344 = vmul.f32 %v3336, 0.044715
        %v3345 = vmul.f32 %v3337, 0.044715
        %v3346 = vmul.f32 %v3338, 0.044715
        %v3347 = vmul.f32 %v3339, 0.044715
        %v3348 = vadd.f32 %v3124, %v3340
        %v3349 = vadd.f32 %v3152, %v3341
        %v3350 = vadd.f32 %v3180, %v3342
        %v3351 = vadd.f32 %v3208, %v3343
        %v3352 = vadd.f32 %v3126, %v3344
        %v3353 = vadd.f32 %v3154, %v3345
        %v3354 = vadd.f32 %v3182, %v3346
        %v3355 = vadd.f32 %v3210, %v3347
        %v3356 = vmul.f32 %v3348, 0.7978846
        %v3357 = vmul.f32 %v3349, 0.7978846
        %v3358 = vmul.f32 %v3350, 0.7978846
        %v3359 = vmul.f32 %v3351, 0.7978846
        %v3360 = vmul.f32 %v3352, 0.7978846
        %v3361 = vmul.f32 %v3353, 0.7978846
        %v3362 = vmul.f32 %v3354, 0.7978846
        %v3363 = vmul.f32 %v3355, 0.7978846
        %v3364 = vtanh.pop %v3356
        %v3365 = vtanh.pop %v3357
        %v3366 = vtanh.pop %v3358
        %v3367 = vtanh.pop %v3359
        %v3368 = vtanh.pop %v3360
        %v3369 = vtanh.pop %v3361
        %v3370 = vtanh.pop %v3362
        %v3371 = vtanh.pop %v3363
        %v3372 = vadd.f32 %v3364, 1.0
        %v3373 = vadd.f32 %v3365, 1.0
        %v3374 = vadd.f32 %v3366, 1.0
        %v3375 = vadd.f32 %v3367, 1.0
        %v3376 = vadd.f32 %v3368, 1.0
        %v3377 = vadd.f32 %v3369, 1.0
        %v3378 = vadd.f32 %v3370, 1.0
        %v3379 = vadd.f32 %v3371, 1.0
        %v3380 = vmul.f32 %v3372, 0.5
        %v3381 = vmul.f32 %v3373, 0.5
        %v3382 = vmul.f32 %v3374, 0.5
        %v3383 = vmul.f32 %v3375, 0.5
        %v3384 = vmul.f32 %v3376, 0.5
        %v3385 = vmul.f32 %v3377, 0.5
        %v3386 = vmul.f32 %v3378, 0.5
        %v3387 = vmul.f32 %v3379, 0.5
        %v3388 = vmul.f32 %v3124, %v3380
        %v3389 = vmul.f32 %v3152, %v3381
        %v3390 = vmul.f32 %v3180, %v3382
        %v3391 = vmul.f32 %v3208, %v3383
        %v3392 = vmul.f32 %v3126, %v3384
        %v3393 = vmul.f32 %v3154, %v3385
        %v3394 = vmul.f32 %v3182, %v3386
        %v3395 = vmul.f32 %v3210, %v3387
        %v3396 = vmul.f32 %v3388, %v3236
        %v3397 = vmul.f32 %v3389, %v3264
        %v3398 = vmul.f32 %v3390, %v3292
        %v3399 = vmul.f32 %v3391, %v3320
        %v3400 = vmul.f32 %v3392, %v3238
        %v3401 = vmul.f32 %v3393, %v3266
        %v3402 = vmul.f32 %v3394, %v3294
        %v3403 = vmul.f32 %v3395, %v3322
        %v3404 = vpack.c.bf16 %v3400, %v3396
        %v3405 = vpack.c.bf16 %v3401, %v3397
        %v3406 = vpack.c.bf16 %v3402, %v3398
        %v3407 = vpack.c.bf16 %v3403, %v3399
        %v3408 = vld [vmem:[%s644] sm:$0xff]
        %v3409 = vld [vmem:[%s644 + $0x8] sm:$0xff]
        %v3410 = vld [vmem:[%s644 + $0x10] sm:$0xff]
        %v3411 = vld [vmem:[%s644 + $0x18] sm:$0xff]
        %v3412 = vld [vmem:[%s644 + $0x20] sm:$0xff]
        %v3413 = vld [vmem:[%s644 + $0x28] sm:$0xff]
        %v3414 = vld [vmem:[%s644 + $0x30] sm:$0xff]
        %v3415 = vld [vmem:[%s644 + $0x38] sm:$0xff]
        %v3416 = vld [vmem:[%s644 + $0x40] sm:$0xff]
        %v3417 = vld [vmem:[%s644 + $0x48] sm:$0xff]
        %v3418 = vld [vmem:[%s644 + $0x50] sm:$0xff]
        %v3419 = vld [vmem:[%s644 + $0x58] sm:$0xff]
        %v3420 = vld [vmem:[%s644 + $0x60] sm:$0xff]
        %v3421 = vld [vmem:[%s644 + $0x68] sm:$0xff]
        %v3422 = vld [vmem:[%s644 + $0x70] sm:$0xff]
        %v3423 = vld [vmem:[%s644 + $0x78] sm:$0xff]
        %v3424 = vld [vmem:[%s644 + $0x80] sm:$0xff]
        %v3425 = vld [vmem:[%s644 + $0x88] sm:$0xff]
        %v3426 = vld [vmem:[%s644 + $0x90] sm:$0xff]
        %v3427 = vld [vmem:[%s644 + $0x98] sm:$0xff]
        %v3428 = vld [vmem:[%s644 + $0xa0] sm:$0xff]
        %v3429 = vld [vmem:[%s644 + $0xa8] sm:$0xff]
        %v3430 = vld [vmem:[%s644 + $0xb0] sm:$0xff]
        %v3431 = vld [vmem:[%s644 + $0xb8] sm:$0xff]
        %v3432 = vld [vmem:[%s644 + $0xc0] sm:$0xff]
        %v3433 = vld [vmem:[%s644 + $0xc8] sm:$0xff]
        %v3434 = vld [vmem:[%s644 + $0xd0] sm:$0xff]
        %v3435 = vld [vmem:[%s644 + $0xd8] sm:$0xff]
        %v3436 = vld [vmem:[%s644 + $0xe0] sm:$0xff]
        %v3437 = vld [vmem:[%s644 + $0xe8] sm:$0xff]
        %v3438 = vld [vmem:[%s644 + $0xf0] sm:$0xff]
        %v3439 = vld [vmem:[%s644 + $0xf8] sm:$0xff]
        %v3440 = vld [vmem:[%s644 + $0x100] sm:$0xff]
        %v3441 = vld [vmem:[%s644 + $0x108] sm:$0xff]
        %v3442 = vld [vmem:[%s644 + $0x110] sm:$0xff]
        %v3443 = vld [vmem:[%s644 + $0x118] sm:$0xff]
        %v3444 = vld [vmem:[%s644 + $0x120] sm:$0xff]
        %v3445 = vld [vmem:[%s644 + $0x128] sm:$0xff]
        %v3446 = vld [vmem:[%s644 + $0x130] sm:$0xff]
        %v3447 = vld [vmem:[%s644 + $0x138] sm:$0xff]
        %v3448 = vld [vmem:[%s644 + $0x140] sm:$0xff]
        %v3449 = vld [vmem:[%s644 + $0x148] sm:$0xff]
        %v3450 = vld [vmem:[%s644 + $0x150] sm:$0xff]
        %v3451 = vld [vmem:[%s644 + $0x158] sm:$0xff]
        %v3452 = vld [vmem:[%s644 + $0x160] sm:$0xff]
        %v3453 = vld [vmem:[%s644 + $0x168] sm:$0xff]
        %v3454 = vld [vmem:[%s644 + $0x170] sm:$0xff]
        %v3455 = vld [vmem:[%s644 + $0x178] sm:$0xff]
        %v3456 = vld [vmem:[%s644 + $0x180] sm:$0xff]
        %v3457 = vld [vmem:[%s644 + $0x188] sm:$0xff]
        %v3458 = vld [vmem:[%s644 + $0x190] sm:$0xff]
        %v3459 = vld [vmem:[%s644 + $0x198] sm:$0xff]
        %v3460 = vld [vmem:[%s644 + $0x1a0] sm:$0xff]
        %v3461 = vld [vmem:[%s644 + $0x1a8] sm:$0xff]
        %v3462 = vld [vmem:[%s644 + $0x1b0] sm:$0xff]
        %v3463 = vld [vmem:[%s644 + $0x1b8] sm:$0xff]
        %v3464 = vld [vmem:[%s644 + $0x1c0] sm:$0xff]
        %v3465 = vld [vmem:[%s644 + $0x1c8] sm:$0xff]
        %v3466 = vld [vmem:[%s644 + $0x1d0] sm:$0xff]
        %v3467 = vld [vmem:[%s644 + $0x1d8] sm:$0xff]
        %v3468 = vld [vmem:[%s644 + $0x1e0] sm:$0xff]
        %v3469 = vld [vmem:[%s644 + $0x1e8] sm:$0xff]
        %v3470 = vld [vmem:[%s644 + $0x1f0] sm:$0xff]
        %v3471 = vld [vmem:[%s644 + $0x1f8] sm:$0xff]
        %v3536 = vunpack.c.l.b16 %v3408
        %v3537 = vunpack.c.h.b16 %v3408
        %v3538 = vunpack.c.l.b16 %v3409
        %v3539 = vunpack.c.h.b16 %v3409
        %v3540 = vunpack.c.l.b16 %v3410
        %v3541 = vunpack.c.h.b16 %v3410
        %v3542 = vunpack.c.l.b16 %v3411
        %v3543 = vunpack.c.h.b16 %v3411
        %v3544 = vunpack.c.l.b16 %v3412
        %v3545 = vunpack.c.h.b16 %v3412
        %v3546 = vunpack.c.l.b16 %v3413
        %v3547 = vunpack.c.h.b16 %v3413
        %v3548 = vunpack.c.l.b16 %v3414
        %v3549 = vunpack.c.h.b16 %v3414
        %v3550 = vunpack.c.l.b16 %v3415
        %v3551 = vunpack.c.h.b16 %v3415
        %v3552 = vunpack.c.l.b16 %v3416
        %v3553 = vunpack.c.h.b16 %v3416
        %v3554 = vunpack.c.l.b16 %v3417
        %v3555 = vunpack.c.h.b16 %v3417
        %v3556 = vunpack.c.l.b16 %v3418
        %v3557 = vunpack.c.h.b16 %v3418
        %v3558 = vunpack.c.l.b16 %v3419
        %v3559 = vunpack.c.h.b16 %v3419
        %v3560 = vunpack.c.l.b16 %v3420
        %v3561 = vunpack.c.h.b16 %v3420
        %v3562 = vunpack.c.l.b16 %v3421
        %v3563 = vunpack.c.h.b16 %v3421
        %v3564 = vunpack.c.l.b16 %v3422
        %v3565 = vunpack.c.h.b16 %v3422
        %v3566 = vunpack.c.l.b16 %v3423
        %v3567 = vunpack.c.h.b16 %v3423
        %v3568 = vunpack.c.l.b16 %v3424
        %v3569 = vunpack.c.h.b16 %v3424
        %v3570 = vunpack.c.l.b16 %v3425
        %v3571 = vunpack.c.h.b16 %v3425
        %v3572 = vunpack.c.l.b16 %v3426
        %v3573 = vunpack.c.h.b16 %v3426
        %v3574 = vunpack.c.l.b16 %v3427
        %v3575 = vunpack.c.h.b16 %v3427
        %v3576 = vunpack.c.l.b16 %v3428
        %v3577 = vunpack.c.h.b16 %v3428
        %v3578 = vunpack.c.l.b16 %v3429
        %v3579 = vunpack.c.h.b16 %v3429
        %v3580 = vunpack.c.l.b16 %v3430
        %v3581 = vunpack.c.h.b16 %v3430
        %v3582 = vunpack.c.l.b16 %v3431
        %v3583 = vunpack.c.h.b16 %v3431
        %v3584 = vunpack.c.l.b16 %v3432
        %v3585 = vunpack.c.h.b16 %v3432
        %v3586 = vunpack.c.l.b16 %v3433
        %v3587 = vunpack.c.h.b16 %v3433
        %v3588 = vunpack.c.l.b16 %v3434
        %v3589 = vunpack.c.h.b16 %v3434
        %v3590 = vunpack.c.l.b16 %v3435
        %v3591 = vunpack.c.h.b16 %v3435
        %v3592 = vunpack.c.l.b16 %v3436
        %v3593 = vunpack.c.h.b16 %v3436
        %v3594 = vunpack.c.l.b16 %v3437
        %v3595 = vunpack.c.h.b16 %v3437
        %v3596 = vunpack.c.l.b16 %v3438
        %v3597 = vunpack.c.h.b16 %v3438
        %v3598 = vunpack.c.l.b16 %v3439
        %v3599 = vunpack.c.h.b16 %v3439
        %v3600 = vunpack.c.l.b16 %v3440
        %v3601 = vunpack.c.h.b16 %v3440
        %v3602 = vunpack.c.l.b16 %v3441
        %v3603 = vunpack.c.h.b16 %v3441
        %v3604 = vunpack.c.l.b16 %v3442
        %v3605 = vunpack.c.h.b16 %v3442
        %v3606 = vunpack.c.l.b16 %v3443
        %v3607 = vunpack.c.h.b16 %v3443
        %v3608 = vunpack.c.l.b16 %v3444
        %v3609 = vunpack.c.h.b16 %v3444
        %v3610 = vunpack.c.l.b16 %v3445
        %v3611 = vunpack.c.h.b16 %v3445
        %v3612 = vunpack.c.l.b16 %v3446
        %v3613 = vunpack.c.h.b16 %v3446
        %v3614 = vunpack.c.l.b16 %v3447
        %v3615 = vunpack.c.h.b16 %v3447
        %v3616 = vunpack.c.l.b16 %v3448
        %v3617 = vunpack.c.h.b16 %v3448
        %v3618 = vunpack.c.l.b16 %v3449
        %v3619 = vunpack.c.h.b16 %v3449
        %v3620 = vunpack.c.l.b16 %v3450
        %v3621 = vunpack.c.h.b16 %v3450
        %v3622 = vunpack.c.l.b16 %v3451
        %v3623 = vunpack.c.h.b16 %v3451
        %v3624 = vunpack.c.l.b16 %v3452
        %v3625 = vunpack.c.h.b16 %v3452
        %v3626 = vunpack.c.l.b16 %v3453
        %v3627 = vunpack.c.h.b16 %v3453
        %v3628 = vunpack.c.l.b16 %v3454
        %v3629 = vunpack.c.h.b16 %v3454
        %v3630 = vunpack.c.l.b16 %v3455
        %v3631 = vunpack.c.h.b16 %v3455
        %v3632 = vunpack.c.l.b16 %v3456
        %v3633 = vunpack.c.h.b16 %v3456
        %v3634 = vunpack.c.l.b16 %v3457
        %v3635 = vunpack.c.h.b16 %v3457
        %v3636 = vunpack.c.l.b16 %v3458
        %v3637 = vunpack.c.h.b16 %v3458
        %v3638 = vunpack.c.l.b16 %v3459
        %v3639 = vunpack.c.h.b16 %v3459
        %v3640 = vunpack.c.l.b16 %v3460
        %v3641 = vunpack.c.h.b16 %v3460
        %v3642 = vunpack.c.l.b16 %v3461
        %v3643 = vunpack.c.h.b16 %v3461
        %v3644 = vunpack.c.l.b16 %v3462
        %v3645 = vunpack.c.h.b16 %v3462
        %v3646 = vunpack.c.l.b16 %v3463
        %v3647 = vunpack.c.h.b16 %v3463
        %v3648 = vunpack.c.l.b16 %v3464
        %v3649 = vunpack.c.h.b16 %v3464
        %v3650 = vunpack.c.l.b16 %v3465
        %v3651 = vunpack.c.h.b16 %v3465
        %v3652 = vunpack.c.l.b16 %v3466
        %v3653 = vunpack.c.h.b16 %v3466
        %v3654 = vunpack.c.l.b16 %v3467
        %v3655 = vunpack.c.h.b16 %v3467
        %v3656 = vunpack.c.l.b16 %v3468
        %v3657 = vunpack.c.h.b16 %v3468
        %v3658 = vunpack.c.l.b16 %v3469
        %v3659 = vunpack.c.h.b16 %v3469
        %v3660 = vunpack.c.l.b16 %v3470
        %v3661 = vunpack.c.h.b16 %v3470
        %v3662 = vunpack.c.l.b16 %v3471
        %v3663 = vunpack.c.h.b16 %v3471
        %v3664 = vpack.c.b16 %v3538, %v3536
        %v3665 = vpack.c.b16 %v3539, %v3537
        %v3666 = vpack.c.b16 %v3542, %v3540
        %v3667 = vpack.c.b16 %v3543, %v3541
        %v3668 = vpack.c.b16 %v3546, %v3544
        %v3669 = vpack.c.b16 %v3547, %v3545
        %v3670 = vpack.c.b16 %v3550, %v3548
        %v3671 = vpack.c.b16 %v3551, %v3549
        %v3672 = vpack.c.b16 %v3554, %v3552
        %v3673 = vpack.c.b16 %v3555, %v3553
        %v3674 = vpack.c.b16 %v3558, %v3556
        %v3675 = vpack.c.b16 %v3559, %v3557
        %v3676 = vpack.c.b16 %v3562, %v3560
        %v3677 = vpack.c.b16 %v3563, %v3561
        %v3678 = vpack.c.b16 %v3566, %v3564
        %v3679 = vpack.c.b16 %v3567, %v3565
        %v3680 = vpack.c.b16 %v3570, %v3568
        %v3681 = vpack.c.b16 %v3571, %v3569
        %v3682 = vpack.c.b16 %v3574, %v3572
        %v3683 = vpack.c.b16 %v3575, %v3573
        %v3684 = vpack.c.b16 %v3578, %v3576
        %v3685 = vpack.c.b16 %v3579, %v3577
        %v3686 = vpack.c.b16 %v3582, %v3580
        %v3687 = vpack.c.b16 %v3583, %v3581
        %v3688 = vpack.c.b16 %v3586, %v3584
        %v3689 = vpack.c.b16 %v3587, %v3585
        %v3690 = vpack.c.b16 %v3590, %v3588
        %v3691 = vpack.c.b16 %v3591, %v3589
        %v3692 = vpack.c.b16 %v3594, %v3592
        %v3693 = vpack.c.b16 %v3595, %v3593
        %v3694 = vpack.c.b16 %v3598, %v3596
        %v3695 = vpack.c.b16 %v3599, %v3597
        %v3696 = vpack.c.b16 %v3602, %v3600
        %v3697 = vpack.c.b16 %v3603, %v3601
        %v3698 = vpack.c.b16 %v3606, %v3604
        %v3699 = vpack.c.b16 %v3607, %v3605
        %v3700 = vpack.c.b16 %v3610, %v3608
        %v3701 = vpack.c.b16 %v3611, %v3609
        %v3702 = vpack.c.b16 %v3614, %v3612
        %v3703 = vpack.c.b16 %v3615, %v3613
        %v3704 = vpack.c.b16 %v3618, %v3616
        %v3705 = vpack.c.b16 %v3619, %v3617
        %v3706 = vpack.c.b16 %v3622, %v3620
        %v3707 = vpack.c.b16 %v3623, %v3621
        %v3708 = vpack.c.b16 %v3626, %v3624
        %v3709 = vpack.c.b16 %v3627, %v3625
        %v3710 = vpack.c.b16 %v3630, %v3628
        %v3711 = vpack.c.b16 %v3631, %v3629
        %v3712 = vpack.c.b16 %v3634, %v3632
        %v3713 = vpack.c.b16 %v3635, %v3633
        %v3714 = vpack.c.b16 %v3638, %v3636
        %v3715 = vpack.c.b16 %v3639, %v3637
        %v3716 = vpack.c.b16 %v3642, %v3640
        %v3717 = vpack.c.b16 %v3643, %v3641
        %v3718 = vpack.c.b16 %v3646, %v3644
        %v3719 = vpack.c.b16 %v3647, %v3645
        %v3720 = vpack.c.b16 %v3650, %v3648
        %v3721 = vpack.c.b16 %v3651, %v3649
        %v3722 = vpack.c.b16 %v3654, %v3652
        %v3723 = vpack.c.b16 %v3655, %v3653
        %v3724 = vpack.c.b16 %v3658, %v3656
        %v3725 = vpack.c.b16 %v3659, %v3657
        %v3726 = vpack.c.b16 %v3662, %v3660
        %v3727 = vpack.c.b16 %v3663, %v3661
        %3792 = vmatpush.bf16.msra.mxu0 %v3678
        %3793 = vmatpush.bf16.msra.mxu0 %v3676
        %3794 = vmatpush.bf16.msra.mxu0 %v3674
        %3795 = vmatpush.bf16.msra.mxu0 %v3672
        %3796 = vmatpush.bf16.msra.mxu0 %v3670
        %3797 = vmatpush.bf16.msra.mxu0 %v3668
        %3798 = vmatpush.bf16.msra.mxu0 %v3666
        %3799 = vmatpush.bf16.msra.mxu0 %v3664
        %3800 = vmatmul.bf16.gmra.mxu0 %v3404
        %v3801 = vpop.f32.mrf.mxu0
        %v3802 = vadd.f32 0.0, %v3801
        %v3803 = vpop.f32.mrf.mxu0
        %v3804 = vadd.f32 0.0, %v3803
        %3805 = vdwg.mxu0
        %3806 = vmatpush.bf16.msra.mxu0 %v3694
        %3807 = vmatpush.bf16.msra.mxu0 %v3692
        %3808 = vmatpush.bf16.msra.mxu0 %v3690
        %3809 = vmatpush.bf16.msra.mxu0 %v3688
        %3810 = vmatpush.bf16.msra.mxu0 %v3686
        %3811 = vmatpush.bf16.msra.mxu0 %v3684
        %3812 = vmatpush.bf16.msra.mxu0 %v3682
        %3813 = vmatpush.bf16.msra.mxu0 %v3680
        %3814 = vmatmul.bf16.gmra.mxu0 %v3405
        %v3815 = vpop.f32.mrf.mxu0
        %v3816 = vadd.f32 %v3802, %v3815
        %v3817 = vpop.f32.mrf.mxu0
        %v3818 = vadd.f32 %v3804, %v3817
        %3819 = vdwg.mxu0
        %3820 = vmatpush.bf16.msra.mxu0 %v3710
        %3821 = vmatpush.bf16.msra.mxu0 %v3708
        %3822 = vmatpush.bf16.msra.mxu0 %v3706
        %3823 = vmatpush.bf16.msra.mxu0 %v3704
        %3824 = vmatpush.bf16.msra.mxu0 %v3702
        %3825 = vmatpush.bf16.msra.mxu0 %v3700
        %3826 = vmatpush.bf16.msra.mxu0 %v3698
        %3827 = vmatpush.bf16.msra.mxu0 %v3696
        %3828 = vmatmul.bf16.gmra.mxu0 %v3406
        %v3829 = vpop.f32.mrf.mxu0
        %v3830 = vadd.f32 %v3816, %v3829
        %v3831 = vpop.f32.mrf.mxu0
        %v3832 = vadd.f32 %v3818, %v3831
        %3833 = vdwg.mxu0
        %3834 = vmatpush.bf16.msra.mxu0 %v3726
        %3835 = vmatpush.bf16.msra.mxu0 %v3724
        %3836 = vmatpush.bf16.msra.mxu0 %v3722
        %3837 = vmatpush.bf16.msra.mxu0 %v3720
        %3838 = vmatpush.bf16.msra.mxu0 %v3718
        %3839 = vmatpush.bf16.msra.mxu0 %v3716
        %3840 = vmatpush.bf16.msra.mxu0 %v3714
        %3841 = vmatpush.bf16.msra.mxu0 %v3712
        %3842 = vmatmul.bf16.gmra.mxu0 %v3407
        %v3843 = vpop.f32.mrf.mxu0
        %v3844 = vadd.f32 %v3830, %v3843
        %v3845 = vpop.f32.mrf.mxu0
        %v3846 = vadd.f32 %v3832, %v3845
        %3847 = vdwg.mxu0
        %3848 = vmatpush.bf16.msra.mxu0 %v3679
        %3849 = vmatpush.bf16.msra.mxu0 %v3677
        %3850 = vmatpush.bf16.msra.mxu0 %v3675
        %3851 = vmatpush.bf16.msra.mxu0 %v3673
        %3852 = vmatpush.bf16.msra.mxu0 %v3671
        %3853 = vmatpush.bf16.msra.mxu0 %v3669
        %3854 = vmatpush.bf16.msra.mxu0 %v3667
        %3855 = vmatpush.bf16.msra.mxu0 %v3665
        %3856 = vmatmul.bf16.gmra.mxu0 %v3404
        %v3857 = vpop.f32.mrf.mxu0
        %v3858 = vadd.f32 0.0, %v3857
        %v3859 = vpop.f32.mrf.mxu0
        %v3860 = vadd.f32 0.0, %v3859
        %3861 = vdwg.mxu0
        %3862 = vmatpush.bf16.msra.mxu0 %v3695
        %3863 = vmatpush.bf16.msra.mxu0 %v3693
        %3864 = vmatpush.bf16.msra.mxu0 %v3691
        %3865 = vmatpush.bf16.msra.mxu0 %v3689
        %3866 = vmatpush.bf16.msra.mxu0 %v3687
        %3867 = vmatpush.bf16.msra.mxu0 %v3685
        %3868 = vmatpush.bf16.msra.mxu0 %v3683
        %3869 = vmatpush.bf16.msra.mxu0 %v3681
        %3870 = vmatmul.bf16.gmra.mxu0 %v3405
        %v3871 = vpop.f32.mrf.mxu0
        %v3872 = vadd.f32 %v3858, %v3871
        %v3873 = vpop.f32.mrf.mxu0
        %v3874 = vadd.f32 %v3860, %v3873
        %3875 = vdwg.mxu0
        %3876 = vmatpush.bf16.msra.mxu0 %v3711
        %3877 = vmatpush.bf16.msra.mxu0 %v3709
        %3878 = vmatpush.bf16.msra.mxu0 %v3707
        %3879 = vmatpush.bf16.msra.mxu0 %v3705
        %3880 = vmatpush.bf16.msra.mxu0 %v3703
        %3881 = vmatpush.bf16.msra.mxu0 %v3701
        %3882 = vmatpush.bf16.msra.mxu0 %v3699
        %3883 = vmatpush.bf16.msra.mxu0 %v3697
        %3884 = vmatmul.bf16.gmra.mxu0 %v3406
        %v3885 = vpop.f32.mrf.mxu0
        %v3886 = vadd.f32 %v3872, %v3885
        %v3887 = vpop.f32.mrf.mxu0
        %v3888 = vadd.f32 %v3874, %v3887
        %3889 = vdwg.mxu0
        %3890 = vmatpush.bf16.msra.mxu0 %v3727
        %3891 = vmatpush.bf16.msra.mxu0 %v3725
        %3892 = vmatpush.bf16.msra.mxu0 %v3723
        %3893 = vmatpush.bf16.msra.mxu0 %v3721
        %3894 = vmatpush.bf16.msra.mxu0 %v3719
        %3895 = vmatpush.bf16.msra.mxu0 %v3717
        %3896 = vmatpush.bf16.msra.mxu0 %v3715
        %3897 = vmatpush.bf16.msra.mxu0 %v3713
        %3898 = vmatmul.bf16.gmra.mxu0 %v3407
        %v3899 = vpop.f32.mrf.mxu0
        %v3900 = vadd.f32 %v3886, %v3899
        %v3901 = vpop.f32.mrf.mxu0
        %v3902 = vadd.f32 %v3888, %v3901
        %3903 = vdwg.mxu0
        %v3904 = vadd.f32 %v2278, %v3844
        %v3905 = vadd.f32 %v2279, %v3900
        %v3906 = vadd.f32 %v2280, %v3846
        %v3907 = vadd.f32 %v2281, %v3902
        %3908 = vst [vmem:[#allocation2] sm:$0xff] %v3904
        %3909 = vst [vmem:[#allocation2 + $0x8] sm:$0xff] %v3905
        %3910 = vst [vmem:[#allocation2 + $0x10] sm:$0xff] %v3906
        %3911 = vst [vmem:[#allocation2 + $0x18] sm:$0xff] %v3907
        %p3912 = scmp.eq.s32.totalorder %s37, 1
        // Predicated region
        $region105: #{llm_forward.1} parent=79 // pred_check
          %p3913 = pneg %p3912
        $region106: #{llm_forward.1} parent=79 // pred_check_branch
          %3915 = sbr.rel (%p3913) target = $region108
        $region107: #{llm_forward.1} parent=79 // pred_region
          %v3916 = vld [vmem:[%s13] sm:$0x3]
          %v3917 = vmul.f32 %v3904, %v3904
          %v3918 = vmul.f32 %v3905, %v3905
          %v3919 = vmul.f32 %v3906, %v3906
          %v3920 = vmul.f32 %v3907, %v3907
          %v3921 = vadd.f32 %v3917, %v3918
          %3922 = vadd.xlane.f32.xlu0 %v3921
          %v3923 = vpop.xlane.xlu0 %3922
          %v3924 = vadd.f32 %v3919, %v3920
          %3925 = vadd.xlane.f32.xlu0 %v3924
          %v3926 = vpop.xlane.xlu0 %3925
          %v3927 = vmul.f32 %v3923, %v789
          %v3928 = vmul.f32 %v3926, %v789
          %v3929 = vadd.f32 %v3927, 1e-06
          %v3930 = vadd.f32 %v3928, 1e-06
          %v3931 = vrsqrt.pop %v3929
          %v3932 = vmul.f32 %v3931, %v3929
          %v3933 = vmul.f32 %v3932, %v3931
          %v3934 = vmul.f32 0.5, %v3933
          %v3935 = vsub.f32 1.5, %v3934
          %v3936 = vmul.f32 %v3931, %v3935
          %vm3937 = vweird.f32 %v3929
          %vm3938 = vweird.f32 %v3931
          %vm3939 = vmor %vm3937, %vm3938
          %v3940 = vsel %vm3939, %v3931, %v3936
          %v3941 = vrsqrt.pop %v3930
          %v3942 = vmul.f32 %v3941, %v3930
          %v3943 = vmul.f32 %v3942, %v3941
          %v3944 = vmul.f32 0.5, %v3943
          %v3945 = vsub.f32 1.5, %v3944
          %v3946 = vmul.f32 %v3941, %v3945
          %vm3947 = vweird.f32 %v3930
          %vm3948 = vweird.f32 %v3941
          %vm3949 = vmor %vm3947, %vm3948
          %v3950 = vsel %vm3949, %v3941, %v3946
          %v3951 = vmul.f32 %v3904, %v3940
          %v3952 = vmul.f32 %v3905, %v3940
          %v3953 = vmul.f32 %v3906, %v3950
          %v3954 = vmul.f32 %v3907, %v3950
          %v3956 = vperm.slane %v3916, 0
          %v3957 = vperm.slane %v3916, 1
          %v3960 = vmul.f32 %v3951, %v3956
          %v3961 = vmul.f32 %v3952, %v3957
          %v3962 = vmul.f32 %v3953, %v3956
          %v3963 = vmul.f32 %v3954, %v3957
          %v3964 = vpack.c.bf16 %v3962, %v3960
          %v3965 = vpack.c.bf16 %v3963, %v3961
          %v3966 = vld [vmem:[#allocation10] sm:$0xff]
          %v3967 = vld [vmem:[#allocation10 + $0x8] sm:$0xff]
          %v3968 = vld [vmem:[#allocation10 + $0x10] sm:$0xff]
          %v3969 = vld [vmem:[#allocation10 + $0x18] sm:$0xff]
          %v3970 = vld [vmem:[#allocation10 + $0x20] sm:$0xff]
          %v3971 = vld [vmem:[#allocation10 + $0x28] sm:$0xff]
          %v3972 = vld [vmem:[#allocation10 + $0x30] sm:$0xff]
          %v3973 = vld [vmem:[#allocation10 + $0x38] sm:$0xff]
          %v3974 = vld [vmem:[#allocation10 + $0x40] sm:$0xff]
          %v3975 = vld [vmem:[#allocation10 + $0x48] sm:$0xff]
          %v3976 = vld [vmem:[#allocation10 + $0x50] sm:$0xff]
          %v3977 = vld [vmem:[#allocation10 + $0x58] sm:$0xff]
          %v3978 = vld [vmem:[#allocation10 + $0x60] sm:$0xff]
          %v3979 = vld [vmem:[#allocation10 + $0x68] sm:$0xff]
          %v3980 = vld [vmem:[#allocation10 + $0x70] sm:$0xff]
          %v3981 = vld [vmem:[#allocation10 + $0x78] sm:$0xff]
          %v3982 = vld [vmem:[#allocation10 + $0x80] sm:$0xff]
          %v3983 = vld [vmem:[#allocation10 + $0x88] sm:$0xff]
          %v3984 = vld [vmem:[#allocation10 + $0x90] sm:$0xff]
          %v3985 = vld [vmem:[#allocation10 + $0x98] sm:$0xff]
          %v3986 = vld [vmem:[#allocation10 + $0xa0] sm:$0xff]
          %v3987 = vld [vmem:[#allocation10 + $0xa8] sm:$0xff]
          %v3988 = vld [vmem:[#allocation10 + $0xb0] sm:$0xff]
          %v3989 = vld [vmem:[#allocation10 + $0xb8] sm:$0xff]
          %v3990 = vld [vmem:[#allocation10 + $0xc0] sm:$0xff]
          %v3991 = vld [vmem:[#allocation10 + $0xc8] sm:$0xff]
          %v3992 = vld [vmem:[#allocation10 + $0xd0] sm:$0xff]
          %v3993 = vld [vmem:[#allocation10 + $0xd8] sm:$0xff]
          %v3994 = vld [vmem:[#allocation10 + $0xe0] sm:$0xff]
          %v3995 = vld [vmem:[#allocation10 + $0xe8] sm:$0xff]
          %v3996 = vld [vmem:[#allocation10 + $0xf0] sm:$0xff]
          %v3997 = vld [vmem:[#allocation10 + $0xf8] sm:$0xff]
          %v3998 = vld [vmem:[#allocation10 + $0x100] sm:$0xff]
          %v3999 = vld [vmem:[#allocation10 + $0x108] sm:$0xff]
          %v4000 = vld [vmem:[#allocation10 + $0x110] sm:$0xff]
          %v4001 = vld [vmem:[#allocation10 + $0x118] sm:$0xff]
          %v4002 = vld [vmem:[#allocation10 + $0x120] sm:$0xff]
          %v4003 = vld [vmem:[#allocation10 + $0x128] sm:$0xff]
          %v4004 = vld [vmem:[#allocation10 + $0x130] sm:$0xff]
          %v4005 = vld [vmem:[#allocation10 + $0x138] sm:$0xff]
          %v4006 = vld [vmem:[#allocation10 + $0x140] sm:$0xff]
          %v4007 = vld [vmem:[#allocation10 + $0x148] sm:$0xff]
          %v4008 = vld [vmem:[#allocation10 + $0x150] sm:$0xff]
          %v4009 = vld [vmem:[#allocation10 + $0x158] sm:$0xff]
          %v4010 = vld [vmem:[#allocation10 + $0x160] sm:$0xff]
          %v4011 = vld [vmem:[#allocation10 + $0x168] sm:$0xff]
          %v4012 = vld [vmem:[#allocation10 + $0x170] sm:$0xff]
          %v4013 = vld [vmem:[#allocation10 + $0x178] sm:$0xff]
          %v4014 = vld [vmem:[#allocation10 + $0x180] sm:$0xff]
          %v4015 = vld [vmem:[#allocation10 + $0x188] sm:$0xff]
          %v4016 = vld [vmem:[#allocation10 + $0x190] sm:$0xff]
          %v4017 = vld [vmem:[#allocation10 + $0x198] sm:$0xff]
          %v4018 = vld [vmem:[#allocation10 + $0x1a0] sm:$0xff]
          %v4019 = vld [vmem:[#allocation10 + $0x1a8] sm:$0xff]
          %v4020 = vld [vmem:[#allocation10 + $0x1b0] sm:$0xff]
          %v4021 = vld [vmem:[#allocation10 + $0x1b8] sm:$0xff]
          %v4022 = vld [vmem:[#allocation10 + $0x1c0] sm:$0xff]
          %v4023 = vld [vmem:[#allocation10 + $0x1c8] sm:$0xff]
          %v4024 = vld [vmem:[#allocation10 + $0x1d0] sm:$0xff]
          %v4025 = vld [vmem:[#allocation10 + $0x1d8] sm:$0xff]
          %v4026 = vld [vmem:[#allocation10 + $0x1e0] sm:$0xff]
          %v4027 = vld [vmem:[#allocation10 + $0x1e8] sm:$0xff]
          %v4028 = vld [vmem:[#allocation10 + $0x1f0] sm:$0xff]
          %v4029 = vld [vmem:[#allocation10 + $0x1f8] sm:$0xff]
          %v4094 = vunpack.c.l.b16 %v3966
          %v4095 = vunpack.c.h.b16 %v3966
          %v4096 = vunpack.c.l.b16 %v3967
          %v4097 = vunpack.c.h.b16 %v3967
          %v4098 = vunpack.c.l.b16 %v3968
          %v4099 = vunpack.c.h.b16 %v3968
          %v4100 = vunpack.c.l.b16 %v3969
          %v4101 = vunpack.c.h.b16 %v3969
          %v4102 = vunpack.c.l.b16 %v3970
          %v4103 = vunpack.c.h.b16 %v3970
          %v4104 = vunpack.c.l.b16 %v3971
          %v4105 = vunpack.c.h.b16 %v3971
          %v4106 = vunpack.c.l.b16 %v3972
          %v4107 = vunpack.c.h.b16 %v3972
          %v4108 = vunpack.c.l.b16 %v3973
          %v4109 = vunpack.c.h.b16 %v3973
          %v4110 = vunpack.c.l.b16 %v3974
          %v4111 = vunpack.c.h.b16 %v3974
          %v4112 = vunpack.c.l.b16 %v3975
          %v4113 = vunpack.c.h.b16 %v3975
          %v4114 = vunpack.c.l.b16 %v3976
          %v4115 = vunpack.c.h.b16 %v3976
          %v4116 = vunpack.c.l.b16 %v3977
          %v4117 = vunpack.c.h.b16 %v3977
          %v4118 = vunpack.c.l.b16 %v3978
          %v4119 = vunpack.c.h.b16 %v3978
          %v4120 = vunpack.c.l.b16 %v3979
          %v4121 = vunpack.c.h.b16 %v3979
          %v4122 = vunpack.c.l.b16 %v3980
          %v4123 = vunpack.c.h.b16 %v3980
          %v4124 = vunpack.c.l.b16 %v3981
          %v4125 = vunpack.c.h.b16 %v3981
          %v4126 = vunpack.c.l.b16 %v3982
          %v4127 = vunpack.c.h.b16 %v3982
          %v4128 = vunpack.c.l.b16 %v3983
          %v4129 = vunpack.c.h.b16 %v3983
          %v4130 = vunpack.c.l.b16 %v3984
          %v4131 = vunpack.c.h.b16 %v3984
          %v4132 = vunpack.c.l.b16 %v3985
          %v4133 = vunpack.c.h.b16 %v3985
          %v4134 = vunpack.c.l.b16 %v3986
          %v4135 = vunpack.c.h.b16 %v3986
          %v4136 = vunpack.c.l.b16 %v3987
          %v4137 = vunpack.c.h.b16 %v3987
          %v4138 = vunpack.c.l.b16 %v3988
          %v4139 = vunpack.c.h.b16 %v3988
          %v4140 = vunpack.c.l.b16 %v3989
          %v4141 = vunpack.c.h.b16 %v3989
          %v4142 = vunpack.c.l.b16 %v3990
          %v4143 = vunpack.c.h.b16 %v3990
          %v4144 = vunpack.c.l.b16 %v3991
          %v4145 = vunpack.c.h.b16 %v3991
          %v4146 = vunpack.c.l.b16 %v3992
          %v4147 = vunpack.c.h.b16 %v3992
          %v4148 = vunpack.c.l.b16 %v3993
          %v4149 = vunpack.c.h.b16 %v3993
          %v4150 = vunpack.c.l.b16 %v3994
          %v4151 = vunpack.c.h.b16 %v3994
          %v4152 = vunpack.c.l.b16 %v3995
          %v4153 = vunpack.c.h.b16 %v3995
          %v4154 = vunpack.c.l.b16 %v3996
          %v4155 = vunpack.c.h.b16 %v3996
          %v4156 = vunpack.c.l.b16 %v3997
          %v4157 = vunpack.c.h.b16 %v3997
          %v4158 = vunpack.c.l.b16 %v3998
          %v4159 = vunpack.c.h.b16 %v3998
          %v4160 = vunpack.c.l.b16 %v3999
          %v4161 = vunpack.c.h.b16 %v3999
          %v4162 = vunpack.c.l.b16 %v4000
          %v4163 = vunpack.c.h.b16 %v4000
          %v4164 = vunpack.c.l.b16 %v4001
          %v4165 = vunpack.c.h.b16 %v4001
          %v4166 = vunpack.c.l.b16 %v4002
          %v4167 = vunpack.c.h.b16 %v4002
          %v4168 = vunpack.c.l.b16 %v4003
          %v4169 = vunpack.c.h.b16 %v4003
          %v4170 = vunpack.c.l.b16 %v4004
          %v4171 = vunpack.c.h.b16 %v4004
          %v4172 = vunpack.c.l.b16 %v4005
          %v4173 = vunpack.c.h.b16 %v4005
          %v4174 = vunpack.c.l.b16 %v4006
          %v4175 = vunpack.c.h.b16 %v4006
          %v4176 = vunpack.c.l.b16 %v4007
          %v4177 = vunpack.c.h.b16 %v4007
          %v4178 = vunpack.c.l.b16 %v4008
          %v4179 = vunpack.c.h.b16 %v4008
          %v4180 = vunpack.c.l.b16 %v4009
          %v4181 = vunpack.c.h.b16 %v4009
          %v4182 = vunpack.c.l.b16 %v4010
          %v4183 = vunpack.c.h.b16 %v4010
          %v4184 = vunpack.c.l.b16 %v4011
          %v4185 = vunpack.c.h.b16 %v4011
          %v4186 = vunpack.c.l.b16 %v4012
          %v4187 = vunpack.c.h.b16 %v4012
          %v4188 = vunpack.c.l.b16 %v4013
          %v4189 = vunpack.c.h.b16 %v4013
          %v4190 = vunpack.c.l.b16 %v4014
          %v4191 = vunpack.c.h.b16 %v4014
          %v4192 = vunpack.c.l.b16 %v4015
          %v4193 = vunpack.c.h.b16 %v4015
          %v4194 = vunpack.c.l.b16 %v4016
          %v4195 = vunpack.c.h.b16 %v4016
          %v4196 = vunpack.c.l.b16 %v4017
          %v4197 = vunpack.c.h.b16 %v4017
          %v4198 = vunpack.c.l.b16 %v4018
          %v4199 = vunpack.c.h.b16 %v4018
          %v4200 = vunpack.c.l.b16 %v4019
          %v4201 = vunpack.c.h.b16 %v4019
          %v4202 = vunpack.c.l.b16 %v4020
          %v4203 = vunpack.c.h.b16 %v4020
          %v4204 = vunpack.c.l.b16 %v4021
          %v4205 = vunpack.c.h.b16 %v4021
          %v4206 = vunpack.c.l.b16 %v4022
          %v4207 = vunpack.c.h.b16 %v4022
          %v4208 = vunpack.c.l.b16 %v4023
          %v4209 = vunpack.c.h.b16 %v4023
          %v4210 = vunpack.c.l.b16 %v4024
          %v4211 = vunpack.c.h.b16 %v4024
          %v4212 = vunpack.c.l.b16 %v4025
          %v4213 = vunpack.c.h.b16 %v4025
          %v4214 = vunpack.c.l.b16 %v4026
          %v4215 = vunpack.c.h.b16 %v4026
          %v4216 = vunpack.c.l.b16 %v4027
          %v4217 = vunpack.c.h.b16 %v4027
          %v4218 = vunpack.c.l.b16 %v4028
          %v4219 = vunpack.c.h.b16 %v4028
          %v4220 = vunpack.c.l.b16 %v4029
          %v4221 = vunpack.c.h.b16 %v4029
          %v4222 = vpack.c.b16 %v4098, %v4094
          %v4223 = vpack.c.b16 %v4099, %v4095
          %v4224 = vpack.c.b16 %v4100, %v4096
          %v4225 = vpack.c.b16 %v4101, %v4097
          %v4226 = vpack.c.b16 %v4106, %v4102
          %v4227 = vpack.c.b16 %v4107, %v4103
          %v4228 = vpack.c.b16 %v4108, %v4104
          %v4229 = vpack.c.b16 %v4109, %v4105
          %v4230 = vpack.c.b16 %v4114, %v4110
          %v4231 = vpack.c.b16 %v4115, %v4111
          %v4232 = vpack.c.b16 %v4116, %v4112
          %v4233 = vpack.c.b16 %v4117, %v4113
          %v4234 = vpack.c.b16 %v4122, %v4118
          %v4235 = vpack.c.b16 %v4123, %v4119
          %v4236 = vpack.c.b16 %v4124, %v4120
          %v4237 = vpack.c.b16 %v4125, %v4121
          %v4238 = vpack.c.b16 %v4130, %v4126
          %v4239 = vpack.c.b16 %v4131, %v4127
          %v4240 = vpack.c.b16 %v4132, %v4128
          %v4241 = vpack.c.b16 %v4133, %v4129
          %v4242 = vpack.c.b16 %v4138, %v4134
          %v4243 = vpack.c.b16 %v4139, %v4135
          %v4244 = vpack.c.b16 %v4140, %v4136
          %v4245 = vpack.c.b16 %v4141, %v4137
          %v4246 = vpack.c.b16 %v4146, %v4142
          %v4247 = vpack.c.b16 %v4147, %v4143
          %v4248 = vpack.c.b16 %v4148, %v4144
          %v4249 = vpack.c.b16 %v4149, %v4145
          %v4250 = vpack.c.b16 %v4154, %v4150
          %v4251 = vpack.c.b16 %v4155, %v4151
          %v4252 = vpack.c.b16 %v4156, %v4152
          %v4253 = vpack.c.b16 %v4157, %v4153
          %v4254 = vpack.c.b16 %v4162, %v4158
          %v4255 = vpack.c.b16 %v4163, %v4159
          %v4256 = vpack.c.b16 %v4164, %v4160
          %v4257 = vpack.c.b16 %v4165, %v4161
          %v4258 = vpack.c.b16 %v4170, %v4166
          %v4259 = vpack.c.b16 %v4171, %v4167
          %v4260 = vpack.c.b16 %v4172, %v4168
          %v4261 = vpack.c.b16 %v4173, %v4169
          %v4262 = vpack.c.b16 %v4178, %v4174
          %v4263 = vpack.c.b16 %v4179, %v4175
          %v4264 = vpack.c.b16 %v4180, %v4176
          %v4265 = vpack.c.b16 %v4181, %v4177
          %v4266 = vpack.c.b16 %v4186, %v4182
          %v4267 = vpack.c.b16 %v4187, %v4183
          %v4268 = vpack.c.b16 %v4188, %v4184
          %v4269 = vpack.c.b16 %v4189, %v4185
          %v4270 = vpack.c.b16 %v4194, %v4190
          %v4271 = vpack.c.b16 %v4195, %v4191
          %v4272 = vpack.c.b16 %v4196, %v4192
          %v4273 = vpack.c.b16 %v4197, %v4193
          %v4274 = vpack.c.b16 %v4202, %v4198
          %v4275 = vpack.c.b16 %v4203, %v4199
          %v4276 = vpack.c.b16 %v4204, %v4200
          %v4277 = vpack.c.b16 %v4205, %v4201
          %v4278 = vpack.c.b16 %v4210, %v4206
          %v4279 = vpack.c.b16 %v4211, %v4207
          %v4280 = vpack.c.b16 %v4212, %v4208
          %v4281 = vpack.c.b16 %v4213, %v4209
          %v4282 = vpack.c.b16 %v4218, %v4214
          %v4283 = vpack.c.b16 %v4219, %v4215
          %v4284 = vpack.c.b16 %v4220, %v4216
          %v4285 = vpack.c.b16 %v4221, %v4217
          %4350 = vmatpush.bf16.msra.mxu0 %v4250
          %4351 = vmatpush.bf16.msra.mxu0 %v4246
          %4352 = vmatpush.bf16.msra.mxu0 %v4242
          %4353 = vmatpush.bf16.msra.mxu0 %v4238
          %4354 = vmatpush.bf16.msra.mxu0 %v4234
          %4355 = vmatpush.bf16.msra.mxu0 %v4230
          %4356 = vmatpush.bf16.msra.mxu0 %v4226
          %4357 = vmatpush.bf16.msra.mxu0 %v4222
          %4358 = vmatmul.bf16.gmra.mxu0 %v3964
          %v4359 = vpop.f32.mrf.mxu0
          %v4360 = vadd.f32 0.0, %v4359
          %v4361 = vpop.f32.mrf.mxu0
          %v4362 = vadd.f32 0.0, %v4361
          %4363 = vdwg.mxu0
          %4364 = vmatpush.bf16.msra.mxu0 %v4282
          %4365 = vmatpush.bf16.msra.mxu0 %v4278
          %4366 = vmatpush.bf16.msra.mxu0 %v4274
          %4367 = vmatpush.bf16.msra.mxu0 %v4270
          %4368 = vmatpush.bf16.msra.mxu0 %v4266
          %4369 = vmatpush.bf16.msra.mxu0 %v4262
          %4370 = vmatpush.bf16.msra.mxu0 %v4258
          %4371 = vmatpush.bf16.msra.mxu0 %v4254
          %4372 = vmatmul.bf16.gmra.mxu0 %v3965
          %v4373 = vpop.f32.mrf.mxu0
          %v4374 = vadd.f32 %v4360, %v4373
          %v4375 = vpop.f32.mrf.mxu0
          %v4376 = vadd.f32 %v4362, %v4375
          %4377 = vdwg.mxu0
          %4378 = vmatpush.bf16.msra.mxu0 %v4251
          %4379 = vmatpush.bf16.msra.mxu0 %v4247
          %4380 = vmatpush.bf16.msra.mxu0 %v4243
          %4381 = vmatpush.bf16.msra.mxu0 %v4239
          %4382 = vmatpush.bf16.msra.mxu0 %v4235
          %4383 = vmatpush.bf16.msra.mxu0 %v4231
          %4384 = vmatpush.bf16.msra.mxu0 %v4227
          %4385 = vmatpush.bf16.msra.mxu0 %v4223
          %4386 = vmatmul.bf16.gmra.mxu0 %v3964
          %v4387 = vpop.f32.mrf.mxu0
          %v4388 = vadd.f32 0.0, %v4387
          %v4389 = vpop.f32.mrf.mxu0
          %v4390 = vadd.f32 0.0, %v4389
          %4391 = vdwg.mxu0
          %4392 = vmatpush.bf16.msra.mxu0 %v4283
          %4393 = vmatpush.bf16.msra.mxu0 %v4279
          %4394 = vmatpush.bf16.msra.mxu0 %v4275
          %4395 = vmatpush.bf16.msra.mxu0 %v4271
          %4396 = vmatpush.bf16.msra.mxu0 %v4267
          %4397 = vmatpush.bf16.msra.mxu0 %v4263
          %4398 = vmatpush.bf16.msra.mxu0 %v4259
          %4399 = vmatpush.bf16.msra.mxu0 %v4255
          %4400 = vmatmul.bf16.gmra.mxu0 %v3965
          %v4401 = vpop.f32.mrf.mxu0
          %v4402 = vadd.f32 %v4388, %v4401
          %v4403 = vpop.f32.mrf.mxu0
          %v4404 = vadd.f32 %v4390, %v4403
          %4405 = vdwg.mxu0
          %4406 = vmatpush.bf16.msra.mxu0 %v4252
          %4407 = vmatpush.bf16.msra.mxu0 %v4248
          %4408 = vmatpush.bf16.msra.mxu0 %v4244
          %4409 = vmatpush.bf16.msra.mxu0 %v4240
          %4410 = vmatpush.bf16.msra.mxu0 %v4236
          %4411 = vmatpush.bf16.msra.mxu0 %v4232
          %4412 = vmatpush.bf16.msra.mxu0 %v4228
          %4413 = vmatpush.bf16.msra.mxu0 %v4224
          %4414 = vmatmul.bf16.gmra.mxu0 %v3964
          %v4415 = vpop.f32.mrf.mxu0
          %v4416 = vadd.f32 0.0, %v4415
          %v4417 = vpop.f32.mrf.mxu0
          %v4418 = vadd.f32 0.0, %v4417
          %4419 = vdwg.mxu0
          %4420 = vmatpush.bf16.msra.mxu0 %v4284
          %4421 = vmatpush.bf16.msra.mxu0 %v4280
          %4422 = vmatpush.bf16.msra.mxu0 %v4276
          %4423 = vmatpush.bf16.msra.mxu0 %v4272
          %4424 = vmatpush.bf16.msra.mxu0 %v4268
          %4425 = vmatpush.bf16.msra.mxu0 %v4264
          %4426 = vmatpush.bf16.msra.mxu0 %v4260
          %4427 = vmatpush.bf16.msra.mxu0 %v4256
          %4428 = vmatmul.bf16.gmra.mxu0 %v3965
          %v4429 = vpop.f32.mrf.mxu0
          %v4430 = vadd.f32 %v4416, %v4429
          %v4431 = vpop.f32.mrf.mxu0
          %v4432 = vadd.f32 %v4418, %v4431
          %4433 = vdwg.mxu0
          %4434 = vmatpush.bf16.msra.mxu0 %v4253
          %4435 = vmatpush.bf16.msra.mxu0 %v4249
          %4436 = vmatpush.bf16.msra.mxu0 %v4245
          %4437 = vmatpush.bf16.msra.mxu0 %v4241
          %4438 = vmatpush.bf16.msra.mxu0 %v4237
          %4439 = vmatpush.bf16.msra.mxu0 %v4233
          %4440 = vmatpush.bf16.msra.mxu0 %v4229
          %4441 = vmatpush.bf16.msra.mxu0 %v4225
          %4442 = vmatmul.bf16.gmra.mxu0 %v3964
          %v4443 = vpop.f32.mrf.mxu0
          %v4444 = vadd.f32 0.0, %v4443
          %v4445 = vpop.f32.mrf.mxu0
          %v4446 = vadd.f32 0.0, %v4445
          %4447 = vdwg.mxu0
          %4448 = vmatpush.bf16.msra.mxu0 %v4285
          %4449 = vmatpush.bf16.msra.mxu0 %v4281
          %4450 = vmatpush.bf16.msra.mxu0 %v4277
          %4451 = vmatpush.bf16.msra.mxu0 %v4273
          %4452 = vmatpush.bf16.msra.mxu0 %v4269
          %4453 = vmatpush.bf16.msra.mxu0 %v4265
          %4454 = vmatpush.bf16.msra.mxu0 %v4261
          %4455 = vmatpush.bf16.msra.mxu0 %v4257
          %4456 = vmatmul.bf16.gmra.mxu0 %v3965
          %v4457 = vpop.f32.mrf.mxu0
          %v4458 = vadd.f32 %v4444, %v4457
          %v4459 = vpop.f32.mrf.mxu0
          %v4460 = vadd.f32 %v4446, %v4459
          %4461 = vdwg.mxu0
          %4462 = vst [vmem:[%s15] sm:$0xff] %v4374
          %4463 = vst [vmem:[%s15 + $0x8] sm:$0xff] %v4402
          %4464 = vst [vmem:[%s15 + $0x10] sm:$0xff] %v4430
          %4465 = vst [vmem:[%s15 + $0x18] sm:$0xff] %v4458
          %4466 = vst [vmem:[%s15 + $0x20] sm:$0xff] %v4376
          %4467 = vst [vmem:[%s15 + $0x28] sm:$0xff] %v4404
          %4468 = vst [vmem:[%s15 + $0x30] sm:$0xff] %v4432
          %4469 = vst [vmem:[%s15 + $0x38] sm:$0xff] %v4460
        $region108: #{llm_forward.1} parent=79 // pred_fallthru
          _
        %p4470 = scmp.lt.s32.totalorder %s37, 1
        %s4471 = scalar_select %p4470, %s37, 1
        %s4472 = smul.addr %s4471, 16
        %s4473 = smul.addr %s4472, 8
        %s4474 = scalar_lea.vmem %s16, %s4473
        // Predicated region
        $region109: #{llm_forward.1} parent=79 // pred_check
          %p4475 = pneg %p405
        $region110: #{llm_forward.1} parent=79 // pred_check_branch
          %4477 = sbr.rel (%p4475) target = $region112
        $region111: #{llm_forward.1} parent=79 // pred_region
          _
        $region112: #{llm_forward.1} parent=79 // pred_fallthru
          _
        // Predicated region
        $region113: #{llm_forward.1} parent=79 // pred_check
          %p4478 = pneg %p431
        $region114: #{llm_forward.1} parent=79 // pred_check_branch
          %4480 = sbr.rel (%p4478) target = $region116
        $region115: #{llm_forward.1} parent=79 // pred_region
          _
        $region116: #{llm_forward.1} parent=79 // pred_fallthru
          _
        // Predicated region
        $region117: #{llm_forward.1} parent=79 // pred_check
          %p4481 = pneg %p405
        $region118: #{llm_forward.1} parent=79 // pred_check_branch
          %4483 = sbr.rel (%p4481) target = $region120
        $region119: #{llm_forward.1} parent=79 // pred_region
          _
        $region120: #{llm_forward.1} parent=79 // pred_fallthru
          _
      $region80: #{llm_forward.1} parent=5 // pred_fallthru
        _
      %p4484 = scmp.le.s32.totalorder 2, %s32
      // Predicated region
      $region121: #{llm_forward.1} parent=5 // pred_check
        %p4485 = pneg %p4484
      $region122: #{llm_forward.1} parent=5 // pred_check_branch
        %4487 = sbr.rel (%p4485) target = $region124
      $region123: #{llm_forward.1} parent=5 // pred_region
        %s4488 = ssub.s32 %s32, 2
        // Predicated region
        $region125: #{llm_forward.1} parent=123 // pred_check
          %p4489 = pneg %p437
        $region126: #{llm_forward.1} parent=123 // pred_check_branch
          %4491 = sbr.rel (%p4489) target = $region128
        $region127: #{llm_forward.1} parent=123 // pred_region
          %p4492 = scmp.lt.s32.totalorder %s38, 1
          %s4493 = scalar_select %p4492, %s38, 1
          %s4494 = smul.addr %s4493, 16
          %s4495 = smul.addr %s4494, 8
          %s4496 = scalar_lea.vmem %s16, %s4495
        $region128: #{llm_forward.1} parent=123 // pred_fallthru
          _
      $region124: #{llm_forward.1} parent=5 // pred_fallthru
        _
    $region6: #{llm_forward.1} parent=1 // loop_footer
      %s36 = sadd.s32 1, %s32
    $region7: #{llm_forward.1} parent=1 // loop_footer_branch
      %31 = sbr.rel target = $region3
    $region8: #{llm_forward.1} parent=1 // loop_exit
      _
    %4497 = vsyncpa [#allocation4], 1
    %s4498 = scalar_lea.sflag [#allocation4], 1
    %4499 = vsyncpa %s4498, 1
    %4500 = vsyncpa [#allocation6], 1
    %s4501 = scalar_lea.sflag [#allocation6], 1
    %4502 = vsyncpa %s4501, 1
    %4503 = vsyncpa [#allocation9], 1
    %s4504 = scalar_lea.sflag [#allocation9], 1
    %4505 = vsyncpa %s4504, 1

</llo_original>
